<compile_context>
chip_gen: v5e
topology: v5e:2x2
jax: 0.10.0
libtpu: 0.0.40
codegen_flags: <defaults>
</compile_context>

<pallas_src>
import functools

import jax
import jax.numpy as jnp
import numpy as np
from jax.experimental import pallas as pl
from jax.experimental.pallas import tpu as pltpu


# ----------------------------------------------------------------------------
# small helpers
# ----------------------------------------------------------------------------
def _round_up(x, m):
    return (x + m - 1) // m * m


def _vmem_cap_bytes():
    """Generation-aware scoped-VMEM cap (v5e/v6e: 128 MiB physical, v7x: 64 MiB)."""
    cap = 32 << 20
    try:
        info = pltpu.get_tpu_info()
        for name in ("vmem_capacity_bytes", "vmem_bytes", "vmem_size_bytes"):
            v = getattr(info, name, None)
            if v:
                v = int(v)
                if v >= (128 << 20):
                    cap = 96 << 20
                elif v >= (64 << 20):
                    cap = 40 << 20
                break
    except Exception:
        pass
    return cap


# ----------------------------------------------------------------------------
# Fused Up kernel (per batch element):
#   psi  = sigmoid(Wpsi @ relu(Wx @ X + Wg @ G + b) + bpsi)     (1x1 convs, BN folded)
#   xcat = [X * psi ; G]            (torch.cat fused away -- never materialized in HBM)
#   h    = relu(conv3x3(xcat) + b1) (9 lane-shifted tap matmuls, zero-pad via halo)
#   out  = relu(conv3x3(h) + b2)
# Layout: channels on sublanes, guarded padded-flat pixels on the 128-lane axis.
# ----------------------------------------------------------------------------
def _up_fused_kernel(x_ref, g_ref, wx_ref, wg_ref, bxg_ref, wpsi_ref, bpsi_ref,
                     w1x_ref, w1g_ref, b1_ref, w2_ref, b2_ref, mask_ref, out_ref,
                     *, offsets, guard, lc):
    f32 = jnp.float32
    x = x_ref[0]                       # (F_l, Ltot)  streaming dtype (f32 or bf16)
    g = g_ref[0]                       # (F_g, Ltot)
    ltot = x.shape[1]
    pad_r = ltot - guard - lc

    # ---- attention gate (1x1 convs + folded BN); streamed tiles go straight to MXU ----
    a = jnp.dot(wx_ref[...], x, preferred_element_type=f32)
    a = a + jnp.dot(wg_ref[...], g, preferred_element_type=f32)
    a = jnp.maximum(a + bxg_ref[...], 0.0)                             # (F_int, Ltot)
    s = jnp.dot(wpsi_ref[...], a, preferred_element_type=f32) + bpsi_ref[...]
    psi = pl.reciprocal(1.0 + jnp.exp(-s), approx=True)                # sigmoid (1, Ltot)

    xg = x.astype(f32) * psi       # gated skip; zero on ring/guard because x is zero there
    g32 = g.astype(f32)

    mask = mask_ref[...]           # (1, lc): 1 on true image pixels, 0 on ring / tail

    def conv3x3(srcs, b_ref_):
        # direct 3x3 conv: 9 static lane-shifted slices, each a channel matmul (MXU)
        acc = None
        for src, w_ref_ in srcs:
            for k, off in enumerate(offsets):
                tap = src[:, guard + off: guard + off + lc]
                part = jnp.dot(w_ref_[k], tap, preferred_element_type=f32)
                acc = part if acc is None else acc + part
        return jnp.maximum(acc + b_ref_[...], 0.0) * mask              # (C, lc)

    # conv1 consumes gated-skip and g as two streams with the split [W1_x | W1_g]
    # weight == torch.cat([gated_skip, g], dim=1) without an HBM concat.
    h = conv3x3([(xg, w1x_ref), (g32, w1g_ref)], b1_ref)               # (C_mid, lc)
    h_full = jnp.concatenate(
        [jnp.zeros((h.shape[0], guard), f32), h,
         jnp.zeros((h.shape[0], pad_r), f32)], axis=1)                 # zero halo restored

    y = conv3x3([(h_full, w2_ref)], b2_ref)                            # (C_out, lc)
    # single aligned full-block store (guard / lc are 128-multiples -> unmasked vst)
    out_ref[0] = jnp.concatenate(
        [jnp.zeros((y.shape[0], guard), f32), y,
         jnp.zeros((y.shape[0], pad_r), f32)], axis=1).astype(out_ref.dtype)


# ----------------------------------------------------------------------------
# BN folding + XLA glue (upsample)
# ----------------------------------------------------------------------------
def _bn_scale_shift(bn, eps=1e-5):
    scale = bn["gamma"] / jnp.sqrt(bn["var"] + eps)
    return scale, bn["beta"] - bn["mean"] * scale


def _fold_1x1(w, b, bn):
    """w: (C_out, C_in, 1, 1) -> (C_out, C_in) folded weight and (C_out,) bias."""
    scale, shift = _bn_scale_shift(bn)
    w2 = w[:, :, 0, 0] * scale[:, None]
    return w2.astype(jnp.float32), (b * scale + shift).astype(jnp.float32)


def _fold_3x3(w, b, bn):
    """w: (C_out, C_in, 3, 3) -> folded 4-D weight and (C_out,) bias."""
    scale, shift = _bn_scale_shift(bn)
    w4 = w * scale[:, None, None, None]
    return w4.astype(jnp.float32), (b * scale + shift).astype(jnp.float32)


def _bilinear_upsample_2x(x):
    """NCHW bilinear 2x upsample, align_corners=True (exact, separable matmuls)."""
    N, C, H, W = x.shape
    H2, W2 = 2 * H, 2 * W

    def interp_matrix(n_out, n_in):
        if n_in == 1:
            return jnp.ones((n_out, 1), jnp.float32)
        pos = np.arange(n_out) * (n_in - 1) / (n_out - 1)
        lo = np.minimum(np.floor(pos).astype(np.int64), n_in - 2)
        frac = (pos - lo).astype(np.float32)
        m = np.zeros((n_out, n_in), np.float32)
        m[np.arange(n_out), lo] = 1.0 - frac
        m[np.arange(n_out), lo + 1] = frac
        return jnp.asarray(m)

    Ah = interp_matrix(H2, H)
    Aw = interp_matrix(W2, W)
    y = jnp.einsum("nchw,Hh->ncHw", x, Ah)
    y = jnp.einsum("ncHw,Ww->ncHW", y, Aw)
    return y


# ----------------------------------------------------------------------------
# Up.forward (NCHW, like PyTorch)
# ----------------------------------------------------------------------------
@functools.partial(jax.jit, static_argnames=("stream_dtype",))
def up_forward(x_dec, skip, params, *, stream_dtype=None):
    """x_dec: (N, in//2, H/2, W/2), skip: (N, in//2, H, W) -> (N, out, H, W)."""
    orig_dtype = skip.dtype
    xd = x_dec.astype(jnp.float32)
    sk = skip.astype(jnp.float32)

    # --- upsample + (optional) F.pad, XLA glue ---
    g = _bilinear_upsample_2x(xd)
    dY = sk.shape[2] - g.shape[2]
    dX = sk.shape[3] - g.shape[3]
    if dY != 0 or dX != 0:
        g = jnp.pad(g, ((0, 0), (0, 0),
                        (dY // 2, dY - dY // 2), (dX // 2, dX - dX // 2)))

    N, F_l, H, W = sk.shape
    F_g = g.shape[1]
    stream = jnp.float32 if stream_dtype is None else stream_dtype

    # --- guarded padded-flat activation layout ---
    Hp, Wp = H + 2, W + 2                 # conv zero-padding ring
    Lp = Hp * Wp
    Lc = _round_up(Lp, 128)               # lane-dense compute width
    G = _round_up(W + 3, 128)             # halo guard >= max |tap shift|, 128-aligned
    Ltot = G + Lc + G

    def to_guarded(t):
        tp = jnp.pad(t, ((0, 0), (0, 0), (1, 1), (1, 1)))            # zero conv ring
        tf = tp.reshape(N, t.shape[1], Lp)
        return jnp.pad(tf, ((0, 0), (0, 0), (G, Ltot - G - Lp)))     # zero halo guards

    x_p = to_guarded(sk).astype(stream)
    g_p = to_guarded(g).astype(stream)

    # interior mask: 1 on true image pixels, 0 on ring / round-up tail
    m2 = np.zeros((Hp, Wp), np.float32)
    m2[1:H + 1, 1:W + 1] = 1.0
    mask_np = np.zeros((1, Lc), np.float32)
    mask_np[0, :Lp] = m2.reshape(-1)
    mask = jnp.asarray(mask_np)

    # --- fold eval-mode BN into the attention 1x1 convs and the 3x3 convs ---
    att = params["att"]
    wx, bx = _fold_1x1(att["wx"], att["bx"], att["bn_x"])
    wg, bg = _fold_1x1(att["wg"], att["bg"], att["bn_g"])
    wp_, bp_ = _fold_1x1(att["wpsi"], att["bpsi"], att["bn_psi"])
    bxg = (bx + bg).reshape(-1, 1)
    bpsi = bp_.reshape(1, 1)
    # streamed x/g feed the MXU in their storage dtype (no in-kernel up-cast)
    wx = wx.astype(stream)
    wg = wg.astype(stream)
    F_int = wx.shape[0]

    w1, b1 = _fold_3x3(params["conv1"]["w"], params["conv1"]["b"], params["conv1"]["bn"])
    w2, b2 = _fold_3x3(params["conv2"]["w"], params["conv2"]["b"], params["conv2"]["bn"])
    C_mid, C_in = w1.shape[0], w1.shape[1]
    C_out = w2.shape[0]

    taps = [(dy, dx) for dy in (-1, 0, 1) for dx in (-1, 0, 1)]
    offsets = tuple(dy * Wp + dx for dy, dx in taps)
    # split conv1 weight into the [gated-skip | g] streams (concat fused away)
    w1x_taps = jnp.stack([w1[:, :F_l, dy + 1, dx + 1] for dy, dx in taps], axis=0)
    w1g_taps = jnp.stack([w1[:, F_l:, dy + 1, dx + 1] for dy, dx in taps], axis=0)
    w2_taps = jnp.stack([w2[:, :, dy + 1, dx + 1] for dy, dx in taps], axis=0)
    b1c = b1.reshape(-1, 1)
    b2c = b2.reshape(-1, 1)

    # --- VMEM accounting: double-buffered streams + resident weights + live values ---
    itemsize = jnp.dtype(stream).itemsize
    act_io = (F_l + F_g) * Ltot * itemsize + C_out * Ltot * 4
    weights_b = (wx.size + wg.size) * itemsize + 4 * (
        bxg.size + wp_.size + bpsi.size + w1x_taps.size + w1g_taps.size
        + b1c.size + w2_taps.size + b2c.size + mask.size)
    live = (F_int + 2 * (F_l + F_g) + C_in + 3 * C_mid + 3 * C_out) * Ltot * 4
    need = 2 * (act_io + weights_b) + live + (2 << 20)
    vmem_limit = int(min(max(need * 3 // 2, 16 << 20), _vmem_cap_bytes()))

    flops = (2 * N * Ltot * F_int * (F_l + F_g + 1)
             + 2 * N * Lc * 9 * (C_in * C_mid + C_mid * C_out)
             + 6 * N * Ltot * (F_int + F_l) + 4 * N * Lc * (C_mid + C_out))
    bytes_accessed = N * Ltot * ((F_l + F_g) * itemsize + C_out * 4) + weights_b

    kernel = functools.partial(_up_fused_kernel, offsets=offsets, guard=G, lc=Lc)
    out_flat = pl.pallas_call(
        kernel,
        out_shape=jax.ShapeDtypeStruct((N, C_out, Ltot), jnp.float32),
        grid_spec=pltpu.PrefetchScalarGridSpec(
            num_scalar_prefetch=0,
            grid=(N,),
            in_specs=[
                pl.BlockSpec((1, F_l, Ltot), lambda n: (n, 0, 0)),     # skip (guarded flat)
                pl.BlockSpec((1, F_g, Ltot), lambda n: (n, 0, 0)),     # upsampled g
                pl.BlockSpec((F_int, F_l), lambda n: (0, 0)),          # Wx (BN folded)
                pl.BlockSpec((F_int, F_g), lambda n: (0, 0)),          # Wg (BN folded)
                pl.BlockSpec((F_int, 1), lambda n: (0, 0)),            # bx + bg
                pl.BlockSpec((1, F_int), lambda n: (0, 0)),            # Wpsi
                pl.BlockSpec((1, 1), lambda n: (0, 0)),                # bpsi
                pl.BlockSpec((9, C_mid, F_l), lambda n: (0, 0, 0)),    # conv1 taps (skip part)
                pl.BlockSpec((9, C_mid, F_g), lambda n: (0, 0, 0)),    # conv1 taps (g part)
                pl.BlockSpec((C_mid, 1), lambda n: (0, 0)),            # b1
                pl.BlockSpec((9, C_out, C_mid), lambda n: (0, 0, 0)),  # conv2 taps
                pl.BlockSpec((C_out, 1), lambda n: (0, 0)),            # b2
                pl.BlockSpec((1, Lc), lambda n: (0, 0)),               # interior mask
            ],
            out_specs=pl.BlockSpec((1, C_out, Ltot), lambda n: (n, 0, 0)),
        ),
        compiler_params=pltpu.CompilerParams(
            dimension_semantics=("parallel",),
            vmem_limit_bytes=vmem_limit,
        ),
        cost_estimate=pl.CostEstimate(
            flops=int(flops),
            transcendentals=int(N * Ltot),
            bytes_accessed=int(bytes_accessed),
        ),
    )(x_p, g_p, wx, wg, bxg, wp_, bpsi, w1x_taps, w1g_taps, b1c, w2_taps, b2c, mask)

    # extract the true image pixels from the guarded padded-flat layout
    out = out_flat[:, :, G:G + Lp].reshape(N, C_out, Hp, Wp)[:, :, 1:H + 1, 1:W + 1]
    return out.astype(orig_dtype)


# ----------------------------------------------------------------------------
# Pure-JAX reference (same eval-mode BN semantics) for validation
# ----------------------------------------------------------------------------
def up_forward_reference(x_dec, skip, params):
    xd = x_dec.astype(jnp.float32)
    sk = skip.astype(jnp.float32)
    g = _bilinear_upsample_2x(xd)
    dY = sk.shape[2] - g.shape[2]
    dX = sk.shape[3] - g.shape[3]
    if dY != 0 or dX != 0:
        g = jnp.pad(g, ((0, 0), (0, 0),
                        (dY // 2, dY - dY // 2), (dX // 2, dX - dX // 2)))

    att = params["att"]
    wx, bx = _fold_1x1(att["wx"], att["bx"], att["bn_x"])
    wg, bg = _fold_1x1(att["wg"], att["bg"], att["bn_g"])
    wp_, bp_ = _fold_1x1(att["wpsi"], att["bpsi"], att["bn_psi"])

    x1 = jnp.einsum("kc,nchw->nkhw", wx, sk) + bx[None, :, None, None]
    g1 = jnp.einsum("kc,nchw->nkhw", wg, g) + bg[None, :, None, None]
    a = jnp.maximum(x1 + g1, 0.0)
    s = jnp.einsum("kc,nchw->nkhw", wp_, a) + bp_[None, :, None, None]
    psi = jax.nn.sigmoid(s)
    xcat = jnp.concatenate([sk * psi, g], axis=1)

    w1, b1 = _fold_3x3(params["conv1"]["w"], params["conv1"]["b"], params["conv1"]["bn"])
    w2, b2 = _fold_3x3(params["conv2"]["w"], params["conv2"]["b"], params["conv2"]["bn"])
    dn = ("NCHW", "OIHW", "NCHW")
    h = jax.lax.conv_general_dilated(xcat, w1, (1, 1), "SAME", dimension_numbers=dn)
    h = jnp.maximum(h + b1[None, :, None, None], 0.0)
    o = jax.lax.conv_general_dilated(h, w2, (1, 1), "SAME", dimension_numbers=dn)
    return jnp.maximum(o + b2[None, :, None, None], 0.0)


# ----------------------------------------------------------------------------
# Parameter construction
# ----------------------------------------------------------------------------
def make_up_params(key, in_channels, out_channels):
    F_g = F_l = in_channels // 2
    F_int = max(in_channels // 4, 1)
    keys = iter(jax.random.split(key, 32))

    def conv(co, ci, k):
        return 0.1 * jax.random.normal(next(keys), (co, ci, k, k), jnp.float32)

    def bias(c):
        return 0.1 * jax.random.normal(next(keys), (c,), jnp.float32)

    def bn(c):
        return dict(
            gamma=1.0 + 0.1 * jax.random.normal(next(keys), (c,), jnp.float32),
            beta=0.1 * jax.random.normal(next(keys), (c,), jnp.float32),
            mean=0.05 * jax.random.normal(next(keys), (c,), jnp.float32),
            var=1.0 + 0.1 * jax.random.uniform(next(keys), (c,), jnp.float32),
        )

    return {
        "att": {
            "wg": conv(F_int, F_g, 1), "bg": bias(F_int), "bn_g": bn(F_int),
            "wx": conv(F_int, F_l, 1), "bx": bias(F_int), "bn_x": bn(F_int),
            "wpsi": conv(1, F_int, 1), "bpsi": bias(1), "bn_psi": bn(1),
        },
        "conv1": {"w": conv(out_channels, in_channels, 3), "b": bias(out_channels),
                  "bn": bn(out_channels)},
        "conv2": {"w": conv(out_channels, out_channels, 3), "b": bias(out_channels),
                  "bn": bn(out_channels)},
    }


if __name__ == "__main__":
    # Up(in_channels=8, out_channels=4): decoder x (N, 4, 8, 8), skip (N, 4, 16, 16).
    N, in_ch, out_ch, H, W = 2, 8, 4, 16, 16

    key = jax.random.PRNGKey(0)
    k1, k2, k3 = jax.random.split(key, 3)
    x_dec = jax.random.normal(k1, (N, in_ch // 2, H // 2, W // 2), jnp.float32)
    skip = jax.random.normal(k2, (N, in_ch // 2, H, W), jnp.float32)
    params = make_up_params(k3, in_ch, out_ch)

    out = jax.block_until_ready(up_forward(x_dec, skip, params))
    ref = jax.block_until_ready(up_forward_reference(x_dec, skip, params))
    # Tolerance covers the EUP approx-reciprocal sigmoid and TPU matmul precision.
    np.testing.assert_allclose(np.asarray(out), np.asarray(ref), rtol=1e-2, atol=1e-2)

    # bf16 streaming path (HBM-bandwidth optimization); only HBM I/O + the attention
    # 1x1 weights are bf16, all accumulation stays f32 in VMEM.
    out_bf16 = jax.block_until_ready(
        up_forward(x_dec, skip, params, stream_dtype=jnp.bfloat16))
    np.testing.assert_allclose(np.asarray(out_bf16, dtype=np.float32),
                               np.asarray(ref), rtol=6e-2, atol=6e-2)

    print("KERNEL_OK")
</pallas_src>

<mosaic_0001>
module attributes {stable_mosaic.version = 11 : i64} {
  func.func @_up_fused_kernel(%arg0: i32, %arg1: memref<1x4x640xf32, #tpu.memory_space<vmem>>, %arg2: memref<1x4x640xf32, #tpu.memory_space<vmem>>, %arg3: memref<2x4xf32, #tpu.memory_space<vmem>>, %arg4: memref<2x4xf32, #tpu.memory_space<vmem>>, %arg5: memref<2x1xf32, #tpu.memory_space<vmem>>, %arg6: memref<1x2xf32, #tpu.memory_space<vmem>>, %arg7: memref<1x1xf32, #tpu.memory_space<vmem>>, %arg8: memref<9x4x4xf32, #tpu.memory_space<vmem>>, %arg9: memref<9x4x4xf32, #tpu.memory_space<vmem>>, %arg10: memref<4x1xf32, #tpu.memory_space<vmem>>, %arg11: memref<9x4x4xf32, #tpu.memory_space<vmem>>, %arg12: memref<4x1xf32, #tpu.memory_space<vmem>>, %arg13: memref<1x384xf32, #tpu.memory_space<vmem>>, %arg14: memref<1x4x640xf32, #tpu.memory_space<vmem>>) attributes {dimension_semantics = [#tpu.dimension_semantics<parallel>], iteration_bounds = array<i64: 2>, scalar_prefetch = 0 : i64, scratch_operands = 0 : i64, tpu.core_type = #tpu.core_type<tc>, window_params = [{transform_indices = @transform_0, window_bounds = array<i64: 1, 4, 640>}, {transform_indices = @transform_1, window_bounds = array<i64: 1, 4, 640>}, {pipeline_mode = #tpu.pipeline_mode<synchronous>, transform_indices = @transform_2, window_bounds = array<i64: 2, 4>}, {pipeline_mode = #tpu.pipeline_mode<synchronous>, transform_indices = @transform_3, window_bounds = array<i64: 2, 4>}, {pipeline_mode = #tpu.pipeline_mode<synchronous>, transform_indices = @transform_4, window_bounds = array<i64: 2, 1>}, {pipeline_mode = #tpu.pipeline_mode<synchronous>, transform_indices = @transform_5, window_bounds = array<i64: 1, 2>}, {pipeline_mode = #tpu.pipeline_mode<synchronous>, transform_indices = @transform_6, window_bounds = array<i64: 1, 1>}, {pipeline_mode = #tpu.pipeline_mode<synchronous>, transform_indices = @transform_7, window_bounds = array<i64: 9, 4, 4>}, {pipeline_mode = #tpu.pipeline_mode<synchronous>, transform_indices = @transform_8, window_bounds = array<i64: 9, 4, 4>}, {pipeline_mode = #tpu.pipeline_mode<synchronous>, transform_indices = @transform_9, window_bounds = array<i64: 4, 1>}, {pipeline_mode = #tpu.pipeline_mode<synchronous>, transform_indices = @transform_10, window_bounds = array<i64: 9, 4, 4>}, {pipeline_mode = #tpu.pipeline_mode<synchronous>, transform_indices = @transform_11, window_bounds = array<i64: 4, 1>}, {pipeline_mode = #tpu.pipeline_mode<synchronous>, transform_indices = @transform_12, window_bounds = array<i64: 1, 384>}, {transform_indices = @transform_13, window_bounds = array<i64: 1, 4, 640>}]} {
    %c0 = arith.constant 0 : index
    %c0_0 = arith.constant 0 : index
    %c0_1 = arith.constant 0 : index
    %0 = vector.load %arg1[%c0, %c0_0, %c0_1] : memref<1x4x640xf32, #tpu.memory_space<vmem>>, vector<1x4x640xf32>
    %1 = vector.shape_cast %0 : vector<1x4x640xf32> to vector<4x640xf32>
    %c0_2 = arith.constant 0 : index
    %c0_3 = arith.constant 0 : index
    %c0_4 = arith.constant 0 : index
    %2 = vector.load %arg2[%c0_2, %c0_3, %c0_4] : memref<1x4x640xf32, #tpu.memory_space<vmem>>, vector<1x4x640xf32>
    %3 = vector.shape_cast %2 : vector<1x4x640xf32> to vector<4x640xf32>
    %c0_5 = arith.constant 0 : index
    %c0_6 = arith.constant 0 : index
    %4 = vector.load %arg3[%c0_5, %c0_6] : memref<2x4xf32, #tpu.memory_space<vmem>>, vector<2x4xf32>
    %cst = arith.constant dense<0.000000e+00> : vector<2x640xf32>
    %5 = tpu.matmul %4, %1, %cst {dimension_numbers = #tpu.dot_dimension_numbers<[1], [0], [0], [1], [0, 0, 1, 1], [], []>} : vector<2x4xf32>, vector<4x640xf32>, vector<2x640xf32> -> vector<2x640xf32>
    %c0_7 = arith.constant 0 : index
    %c0_8 = arith.constant 0 : index
    %6 = vector.load %arg4[%c0_7, %c0_8] : memref<2x4xf32, #tpu.memory_space<vmem>>, vector<2x4xf32>
    %cst_9 = arith.constant dense<0.000000e+00> : vector<2x640xf32>
    %7 = tpu.matmul %6, %3, %cst_9 {dimension_numbers = #tpu.dot_dimension_numbers<[1], [0], [0], [1], [0, 0, 1, 1], [], []>} : vector<2x4xf32>, vector<4x640xf32>, vector<2x640xf32> -> vector<2x640xf32>
    %8 = arith.addf %5, %7 : vector<2x640xf32>
    %c0_10 = arith.constant 0 : index
    %c0_11 = arith.constant 0 : index
    %9 = vector.load %arg5[%c0_10, %c0_11] : memref<2x1xf32, #tpu.memory_space<vmem>>, vector<2x1xf32>
    %10 = vector.broadcast %9 : vector<2x1xf32> to vector<2x640xf32>
    %11 = arith.addf %8, %10 : vector<2x640xf32>
    %cst_12 = arith.constant 0.000000e+00 : f32
    %12 = vector.broadcast %cst_12 : f32 to vector<2x640xf32>
    %13 = arith.maximumf %11, %12 : vector<2x640xf32>
    %c0_13 = arith.constant 0 : index
    %c0_14 = arith.constant 0 : index
    %14 = vector.load %arg6[%c0_13, %c0_14] : memref<1x2xf32, #tpu.memory_space<vmem>>, vector<1x2xf32>
    %cst_15 = arith.constant dense<0.000000e+00> : vector<1x640xf32>
    %15 = tpu.matmul %14, %13, %cst_15 {dimension_numbers = #tpu.dot_dimension_numbers<[1], [0], [0], [1], [0, 0, 1, 1], [], []>} : vector<1x2xf32>, vector<2x640xf32>, vector<1x640xf32> -> vector<1x640xf32>
    %c0_16 = arith.constant 0 : index
    %c0_17 = arith.constant 0 : index
    %16 = vector.load %arg7[%c0_16, %c0_17] : memref<1x1xf32, #tpu.memory_space<vmem>>, vector<1x1xf32>
    %17 = vector.broadcast %16 : vector<1x1xf32> to vector<1x640xf32>
    %18 = arith.addf %15, %17 : vector<1x640xf32>
    %cst_18 = arith.constant 0.000000e+00 : f32
    %19 = vector.broadcast %cst_18 : f32 to vector<1x640xf32>
    %20 = arith.subf %19, %18 : vector<1x640xf32>
    %21 = math.exp %20 : vector<1x640xf32>
    %cst_19 = arith.constant 1.000000e+00 : f32
    %22 = vector.broadcast %cst_19 : f32 to vector<1x640xf32>
    %23 = arith.addf %22, %21 : vector<1x640xf32>
    %24 = tpu.reciprocal %23 {approx = true} : vector<1x640xf32> -> vector<1x640xf32>
    %25 = vector.broadcast %24 : vector<1x640xf32> to vector<4x640xf32>
    %26 = arith.mulf %1, %25 : vector<4x640xf32>
    %c0_20 = arith.constant 0 : index
    %c0_21 = arith.constant 0 : index
    %27 = vector.load %arg13[%c0_20, %c0_21] : memref<1x384xf32, #tpu.memory_space<vmem>>, vector<1x384xf32>
    %28 = vector.extract_strided_slice %26 {offsets = [0, 109], sizes = [4, 384], strides = [1, 1]} : vector<4x640xf32> to vector<4x384xf32>
    %c0_22 = arith.constant 0 : index
    %c0_23 = arith.constant 0 : index
    %c0_24 = arith.constant 0 : index
    %29 = vector.load %arg8[%c0_22, %c0_23, %c0_24] : memref<9x4x4xf32, #tpu.memory_space<vmem>>, vector<1x4x4xf32>
    %30 = vector.shape_cast %29 : vector<1x4x4xf32> to vector<4x4xf32>
    %cst_25 = arith.constant dense<0.000000e+00> : vector<4x384xf32>
    %31 = tpu.matmul %30, %28, %cst_25 {dimension_numbers = #tpu.dot_dimension_numbers<[1], [0], [0], [1], [0, 0, 1, 1], [], []>} : vector<4x4xf32>, vector<4x384xf32>, vector<4x384xf32> -> vector<4x384xf32>
    %32 = vector.extract_strided_slice %26 {offsets = [0, 110], sizes = [4, 384], strides = [1, 1]} : vector<4x640xf32> to vector<4x384xf32>
    %c1 = arith.constant 1 : index
    %c0_26 = arith.constant 0 : index
    %c0_27 = arith.constant 0 : index
    %33 = vector.load %arg8[%c1, %c0_26, %c0_27] : memref<9x4x4xf32, #tpu.memory_space<vmem>>, vector<1x4x4xf32>
    %34 = vector.shape_cast %33 : vector<1x4x4xf32> to vector<4x4xf32>
    %cst_28 = arith.constant dense<0.000000e+00> : vector<4x384xf32>
    %35 = tpu.matmul %34, %32, %cst_28 {dimension_numbers = #tpu.dot_dimension_numbers<[1], [0], [0], [1], [0, 0, 1, 1], [], []>} : vector<4x4xf32>, vector<4x384xf32>, vector<4x384xf32> -> vector<4x384xf32>
    %36 = arith.addf %31, %35 : vector<4x384xf32>
    %37 = vector.extract_strided_slice %26 {offsets = [0, 111], sizes = [4, 384], strides = [1, 1]} : vector<4x640xf32> to vector<4x384xf32>
    %c2 = arith.constant 2 : index
    %c0_29 = arith.constant 0 : index
    %c0_30 = arith.constant 0 : index
    %38 = vector.load %arg8[%c2, %c0_29, %c0_30] : memref<9x4x4xf32, #tpu.memory_space<vmem>>, vector<1x4x4xf32>
    %39 = vector.shape_cast %38 : vector<1x4x4xf32> to vector<4x4xf32>
    %cst_31 = arith.constant dense<0.000000e+00> : vector<4x384xf32>
    %40 = tpu.matmul %39, %37, %cst_31 {dimension_numbers = #tpu.dot_dimension_numbers<[1], [0], [0], [1], [0, 0, 1, 1], [], []>} : vector<4x4xf32>, vector<4x384xf32>, vector<4x384xf32> -> vector<4x384xf32>
    %41 = arith.addf %36, %40 : vector<4x384xf32>
    %42 = vector.extract_strided_slice %26 {offsets = [0, 127], sizes = [4, 384], strides = [1, 1]} : vector<4x640xf32> to vector<4x384xf32>
    %c3 = arith.constant 3 : index
    %c0_32 = arith.constant 0 : index
    %c0_33 = arith.constant 0 : index
    %43 = vector.load %arg8[%c3, %c0_32, %c0_33] : memref<9x4x4xf32, #tpu.memory_space<vmem>>, vector<1x4x4xf32>
    %44 = vector.shape_cast %43 : vector<1x4x4xf32> to vector<4x4xf32>
    %cst_34 = arith.constant dense<0.000000e+00> : vector<4x384xf32>
    %45 = tpu.matmul %44, %42, %cst_34 {dimension_numbers = #tpu.dot_dimension_numbers<[1], [0], [0], [1], [0, 0, 1, 1], [], []>} : vector<4x4xf32>, vector<4x384xf32>, vector<4x384xf32> -> vector<4x384xf32>
    %46 = arith.addf %41, %45 : vector<4x384xf32>
    %47 = vector.extract_strided_slice %26 {offsets = [0, 128], sizes = [4, 384], strides = [1, 1]} : vector<4x640xf32> to vector<4x384xf32>
    %c4 = arith.constant 4 : index
    %c0_35 = arith.constant 0 : index
    %c0_36 = arith.constant 0 : index
    %48 = vector.load %arg8[%c4, %c0_35, %c0_36] : memref<9x4x4xf32, #tpu.memory_space<vmem>>, vector<1x4x4xf32>
    %49 = vector.shape_cast %48 : vector<1x4x4xf32> to vector<4x4xf32>
    %cst_37 = arith.constant dense<0.000000e+00> : vector<4x384xf32>
    %50 = tpu.matmul %49, %47, %cst_37 {dimension_numbers = #tpu.dot_dimension_numbers<[1], [0], [0], [1], [0, 0, 1, 1], [], []>} : vector<4x4xf32>, vector<4x384xf32>, vector<4x384xf32> -> vector<4x384xf32>
    %51 = arith.addf %46, %50 : vector<4x384xf32>
    %52 = vector.extract_strided_slice %26 {offsets = [0, 129], sizes = [4, 384], strides = [1, 1]} : vector<4x640xf32> to vector<4x384xf32>
    %c5 = arith.constant 5 : index
    %c0_38 = arith.constant 0 : index
    %c0_39 = arith.constant 0 : index
    %53 = vector.load %arg8[%c5, %c0_38, %c0_39] : memref<9x4x4xf32, #tpu.memory_space<vmem>>, vector<1x4x4xf32>
    %54 = vector.shape_cast %53 : vector<1x4x4xf32> to vector<4x4xf32>
    %cst_40 = arith.constant dense<0.000000e+00> : vector<4x384xf32>
    %55 = tpu.matmul %54, %52, %cst_40 {dimension_numbers = #tpu.dot_dimension_numbers<[1], [0], [0], [1], [0, 0, 1, 1], [], []>} : vector<4x4xf32>, vector<4x384xf32>, vector<4x384xf32> -> vector<4x384xf32>
    %56 = arith.addf %51, %55 : vector<4x384xf32>
    %57 = vector.extract_strided_slice %26 {offsets = [0, 145], sizes = [4, 384], strides = [1, 1]} : vector<4x640xf32> to vector<4x384xf32>
    %c6 = arith.constant 6 : index
    %c0_41 = arith.constant 0 : index
    %c0_42 = arith.constant 0 : index
    %58 = vector.load %arg8[%c6, %c0_41, %c0_42] : memref<9x4x4xf32, #tpu.memory_space<vmem>>, vector<1x4x4xf32>
    %59 = vector.shape_cast %58 : vector<1x4x4xf32> to vector<4x4xf32>
    %cst_43 = arith.constant dense<0.000000e+00> : vector<4x384xf32>
    %60 = tpu.matmul %59, %57, %cst_43 {dimension_numbers = #tpu.dot_dimension_numbers<[1], [0], [0], [1], [0, 0, 1, 1], [], []>} : vector<4x4xf32>, vector<4x384xf32>, vector<4x384xf32> -> vector<4x384xf32>
    %61 = arith.addf %56, %60 : vector<4x384xf32>
    %62 = vector.extract_strided_slice %26 {offsets = [0, 146], sizes = [4, 384], strides = [1, 1]} : vector<4x640xf32> to vector<4x384xf32>
    %c7 = arith.constant 7 : index
    %c0_44 = arith.constant 0 : index
    %c0_45 = arith.constant 0 : index
    %63 = vector.load %arg8[%c7, %c0_44, %c0_45] : memref<9x4x4xf32, #tpu.memory_space<vmem>>, vector<1x4x4xf32>
    %64 = vector.shape_cast %63 : vector<1x4x4xf32> to vector<4x4xf32>
    %cst_46 = arith.constant dense<0.000000e+00> : vector<4x384xf32>
    %65 = tpu.matmul %64, %62, %cst_46 {dimension_numbers = #tpu.dot_dimension_numbers<[1], [0], [0], [1], [0, 0, 1, 1], [], []>} : vector<4x4xf32>, vector<4x384xf32>, vector<4x384xf32> -> vector<4x384xf32>
    %66 = arith.addf %61, %65 : vector<4x384xf32>
    %67 = vector.extract_strided_slice %26 {offsets = [0, 147], sizes = [4, 384], strides = [1, 1]} : vector<4x640xf32> to vector<4x384xf32>
    %c8 = arith.constant 8 : index
    %c0_47 = arith.constant 0 : index
    %c0_48 = arith.constant 0 : index
    %68 = vector.load %arg8[%c8, %c0_47, %c0_48] : memref<9x4x4xf32, #tpu.memory_space<vmem>>, vector<1x4x4xf32>
    %69 = vector.shape_cast %68 : vector<1x4x4xf32> to vector<4x4xf32>
    %cst_49 = arith.constant dense<0.000000e+00> : vector<4x384xf32>
    %70 = tpu.matmul %69, %67, %cst_49 {dimension_numbers = #tpu.dot_dimension_numbers<[1], [0], [0], [1], [0, 0, 1, 1], [], []>} : vector<4x4xf32>, vector<4x384xf32>, vector<4x384xf32> -> vector<4x384xf32>
    %71 = arith.addf %66, %70 : vector<4x384xf32>
    %72 = vector.extract_strided_slice %3 {offsets = [0, 109], sizes = [4, 384], strides = [1, 1]} : vector<4x640xf32> to vector<4x384xf32>
    %c0_50 = arith.constant 0 : index
    %c0_51 = arith.constant 0 : index
    %c0_52 = arith.constant 0 : index
    %73 = vector.load %arg9[%c0_50, %c0_51, %c0_52] : memref<9x4x4xf32, #tpu.memory_space<vmem>>, vector<1x4x4xf32>
    %74 = vector.shape_cast %73 : vector<1x4x4xf32> to vector<4x4xf32>
    %cst_53 = arith.constant dense<0.000000e+00> : vector<4x384xf32>
    %75 = tpu.matmul %74, %72, %cst_53 {dimension_numbers = #tpu.dot_dimension_numbers<[1], [0], [0], [1], [0, 0, 1, 1], [], []>} : vector<4x4xf32>, vector<4x384xf32>, vector<4x384xf32> -> vector<4x384xf32>
    %76 = arith.addf %71, %75 : vector<4x384xf32>
    %77 = vector.extract_strided_slice %3 {offsets = [0, 110], sizes = [4, 384], strides = [1, 1]} : vector<4x640xf32> to vector<4x384xf32>
    %c1_54 = arith.constant 1 : index
    %c0_55 = arith.constant 0 : index
    %c0_56 = arith.constant 0 : index
    %78 = vector.load %arg9[%c1_54, %c0_55, %c0_56] : memref<9x4x4xf32, #tpu.memory_space<vmem>>, vector<1x4x4xf32>
    %79 = vector.shape_cast %78 : vector<1x4x4xf32> to vector<4x4xf32>
    %cst_57 = arith.constant dense<0.000000e+00> : vector<4x384xf32>
    %80 = tpu.matmul %79, %77, %cst_57 {dimension_numbers = #tpu.dot_dimension_numbers<[1], [0], [0], [1], [0, 0, 1, 1], [], []>} : vector<4x4xf32>, vector<4x384xf32>, vector<4x384xf32> -> vector<4x384xf32>
    %81 = arith.addf %76, %80 : vector<4x384xf32>
    %82 = vector.extract_strided_slice %3 {offsets = [0, 111], sizes = [4, 384], strides = [1, 1]} : vector<4x640xf32> to vector<4x384xf32>
    %c2_58 = arith.constant 2 : index
    %c0_59 = arith.constant 0 : index
    %c0_60 = arith.constant 0 : index
    %83 = vector.load %arg9[%c2_58, %c0_59, %c0_60] : memref<9x4x4xf32, #tpu.memory_space<vmem>>, vector<1x4x4xf32>
    %84 = vector.shape_cast %83 : vector<1x4x4xf32> to vector<4x4xf32>
    %cst_61 = arith.constant dense<0.000000e+00> : vector<4x384xf32>
    %85 = tpu.matmul %84, %82, %cst_61 {dimension_numbers = #tpu.dot_dimension_numbers<[1], [0], [0], [1], [0, 0, 1, 1], [], []>} : vector<4x4xf32>, vector<4x384xf32>, vector<4x384xf32> -> vector<4x384xf32>
    %86 = arith.addf %81, %85 : vector<4x384xf32>
    %87 = vector.extract_strided_slice %3 {offsets = [0, 127], sizes = [4, 384], strides = [1, 1]} : vector<4x640xf32> to vector<4x384xf32>
    %c3_62 = arith.constant 3 : index
    %c0_63 = arith.constant 0 : index
    %c0_64 = arith.constant 0 : index
    %88 = vector.load %arg9[%c3_62, %c0_63, %c0_64] : memref<9x4x4xf32, #tpu.memory_space<vmem>>, vector<1x4x4xf32>
    %89 = vector.shape_cast %88 : vector<1x4x4xf32> to vector<4x4xf32>
    %cst_65 = arith.constant dense<0.000000e+00> : vector<4x384xf32>
    %90 = tpu.matmul %89, %87, %cst_65 {dimension_numbers = #tpu.dot_dimension_numbers<[1], [0], [0], [1], [0, 0, 1, 1], [], []>} : vector<4x4xf32>, vector<4x384xf32>, vector<4x384xf32> -> vector<4x384xf32>
    %91 = arith.addf %86, %90 : vector<4x384xf32>
    %92 = vector.extract_strided_slice %3 {offsets = [0, 128], sizes = [4, 384], strides = [1, 1]} : vector<4x640xf32> to vector<4x384xf32>
    %c4_66 = arith.constant 4 : index
    %c0_67 = arith.constant 0 : index
    %c0_68 = arith.constant 0 : index
    %93 = vector.load %arg9[%c4_66, %c0_67, %c0_68] : memref<9x4x4xf32, #tpu.memory_space<vmem>>, vector<1x4x4xf32>
    %94 = vector.shape_cast %93 : vector<1x4x4xf32> to vector<4x4xf32>
    %cst_69 = arith.constant dense<0.000000e+00> : vector<4x384xf32>
    %95 = tpu.matmul %94, %92, %cst_69 {dimension_numbers = #tpu.dot_dimension_numbers<[1], [0], [0], [1], [0, 0, 1, 1], [], []>} : vector<4x4xf32>, vector<4x384xf32>, vector<4x384xf32> -> vector<4x384xf32>
    %96 = arith.addf %91, %95 : vector<4x384xf32>
    %97 = vector.extract_strided_slice %3 {offsets = [0, 129], sizes = [4, 384], strides = [1, 1]} : vector<4x640xf32> to vector<4x384xf32>
    %c5_70 = arith.constant 5 : index
    %c0_71 = arith.constant 0 : index
    %c0_72 = arith.constant 0 : index
    %98 = vector.load %arg9[%c5_70, %c0_71, %c0_72] : memref<9x4x4xf32, #tpu.memory_space<vmem>>, vector<1x4x4xf32>
    %99 = vector.shape_cast %98 : vector<1x4x4xf32> to vector<4x4xf32>
    %cst_73 = arith.constant dense<0.000000e+00> : vector<4x384xf32>
    %100 = tpu.matmul %99, %97, %cst_73 {dimension_numbers = #tpu.dot_dimension_numbers<[1], [0], [0], [1], [0, 0, 1, 1], [], []>} : vector<4x4xf32>, vector<4x384xf32>, vector<4x384xf32> -> vector<4x384xf32>
    %101 = arith.addf %96, %100 : vector<4x384xf32>
    %102 = vector.extract_strided_slice %3 {offsets = [0, 145], sizes = [4, 384], strides = [1, 1]} : vector<4x640xf32> to vector<4x384xf32>
    %c6_74 = arith.constant 6 : index
    %c0_75 = arith.constant 0 : index
    %c0_76 = arith.constant 0 : index
    %103 = vector.load %arg9[%c6_74, %c0_75, %c0_76] : memref<9x4x4xf32, #tpu.memory_space<vmem>>, vector<1x4x4xf32>
    %104 = vector.shape_cast %103 : vector<1x4x4xf32> to vector<4x4xf32>
    %cst_77 = arith.constant dense<0.000000e+00> : vector<4x384xf32>
    %105 = tpu.matmul %104, %102, %cst_77 {dimension_numbers = #tpu.dot_dimension_numbers<[1], [0], [0], [1], [0, 0, 1, 1], [], []>} : vector<4x4xf32>, vector<4x384xf32>, vector<4x384xf32> -> vector<4x384xf32>
    %106 = arith.addf %101, %105 : vector<4x384xf32>
    %107 = vector.extract_strided_slice %3 {offsets = [0, 146], sizes = [4, 384], strides = [1, 1]} : vector<4x640xf32> to vector<4x384xf32>
    %c7_78 = arith.constant 7 : index
    %c0_79 = arith.constant 0 : index
    %c0_80 = arith.constant 0 : index
    %108 = vector.load %arg9[%c7_78, %c0_79, %c0_80] : memref<9x4x4xf32, #tpu.memory_space<vmem>>, vector<1x4x4xf32>
    %109 = vector.shape_cast %108 : vector<1x4x4xf32> to vector<4x4xf32>
    %cst_81 = arith.constant dense<0.000000e+00> : vector<4x384xf32>
    %110 = tpu.matmul %109, %107, %cst_81 {dimension_numbers = #tpu.dot_dimension_numbers<[1], [0], [0], [1], [0, 0, 1, 1], [], []>} : vector<4x4xf32>, vector<4x384xf32>, vector<4x384xf32> -> vector<4x384xf32>
    %111 = arith.addf %106, %110 : vector<4x384xf32>
    %112 = vector.extract_strided_slice %3 {offsets = [0, 147], sizes = [4, 384], strides = [1, 1]} : vector<4x640xf32> to vector<4x384xf32>
    %c8_82 = arith.constant 8 : index
    %c0_83 = arith.constant 0 : index
    %c0_84 = arith.constant 0 : index
    %113 = vector.load %arg9[%c8_82, %c0_83, %c0_84] : memref<9x4x4xf32, #tpu.memory_space<vmem>>, vector<1x4x4xf32>
    %114 = vector.shape_cast %113 : vector<1x4x4xf32> to vector<4x4xf32>
    %cst_85 = arith.constant dense<0.000000e+00> : vector<4x384xf32>
    %115 = tpu.matmul %114, %112, %cst_85 {dimension_numbers = #tpu.dot_dimension_numbers<[1], [0], [0], [1], [0, 0, 1, 1], [], []>} : vector<4x4xf32>, vector<4x384xf32>, vector<4x384xf32> -> vector<4x384xf32>
    %116 = arith.addf %111, %115 : vector<4x384xf32>
    %c0_86 = arith.constant 0 : index
    %c0_87 = arith.constant 0 : index
    %117 = vector.load %arg10[%c0_86, %c0_87] : memref<4x1xf32, #tpu.memory_space<vmem>>, vector<4x1xf32>
    %118 = vector.broadcast %117 : vector<4x1xf32> to vector<4x384xf32>
    %119 = arith.addf %116, %118 : vector<4x384xf32>
    %cst_88 = arith.constant 0.000000e+00 : f32
    %120 = vector.broadcast %cst_88 : f32 to vector<4x384xf32>
    %121 = arith.maximumf %119, %120 : vector<4x384xf32>
    %122 = vector.broadcast %27 : vector<1x384xf32> to vector<4x384xf32>
    %123 = arith.mulf %121, %122 : vector<4x384xf32>
    %cst_89 = arith.constant 0.000000e+00 : f32
    %124 = vector.broadcast %cst_89 : f32 to vector<4x128xf32>
    %cst_90 = arith.constant 0.000000e+00 : f32
    %125 = vector.broadcast %cst_90 : f32 to vector<4x128xf32>
    %126 = tpu.concatenate %124, %123, %125 in 1 : vector<4x128xf32>, vector<4x384xf32>, vector<4x128xf32> -> vector<4x640xf32>
    %127 = vector.extract_strided_slice %126 {offsets = [0, 109], sizes = [4, 384], strides = [1, 1]} : vector<4x640xf32> to vector<4x384xf32>
    %c0_91 = arith.constant 0 : index
    %c0_92 = arith.constant 0 : index
    %c0_93 = arith.constant 0 : index
    %128 = vector.load %arg11[%c0_91, %c0_92, %c0_93] : memref<9x4x4xf32, #tpu.memory_space<vmem>>, vector<1x4x4xf32>
    %129 = vector.shape_cast %128 : vector<1x4x4xf32> to vector<4x4xf32>
    %cst_94 = arith.constant dense<0.000000e+00> : vector<4x384xf32>
    %130 = tpu.matmul %129, %127, %cst_94 {dimension_numbers = #tpu.dot_dimension_numbers<[1], [0], [0], [1], [0, 0, 1, 1], [], []>} : vector<4x4xf32>, vector<4x384xf32>, vector<4x384xf32> -> vector<4x384xf32>
    %131 = vector.extract_strided_slice %126 {offsets = [0, 110], sizes = [4, 384], strides = [1, 1]} : vector<4x640xf32> to vector<4x384xf32>
    %c1_95 = arith.constant 1 : index
    %c0_96 = arith.constant 0 : index
    %c0_97 = arith.constant 0 : index
    %132 = vector.load %arg11[%c1_95, %c0_96, %c0_97] : memref<9x4x4xf32, #tpu.memory_space<vmem>>, vector<1x4x4xf32>
    %133 = vector.shape_cast %132 : vector<1x4x4xf32> to vector<4x4xf32>
    %cst_98 = arith.constant dense<0.000000e+00> : vector<4x384xf32>
    %134 = tpu.matmul %133, %131, %cst_98 {dimension_numbers = #tpu.dot_dimension_numbers<[1], [0], [0], [1], [0, 0, 1, 1], [], []>} : vector<4x4xf32>, vector<4x384xf32>, vector<4x384xf32> -> vector<4x384xf32>
    %135 = arith.addf %130, %134 : vector<4x384xf32>
    %136 = vector.extract_strided_slice %126 {offsets = [0, 111], sizes = [4, 384], strides = [1, 1]} : vector<4x640xf32> to vector<4x384xf32>
    %c2_99 = arith.constant 2 : index
    %c0_100 = arith.constant 0 : index
    %c0_101 = arith.constant 0 : index
    %137 = vector.load %arg11[%c2_99, %c0_100, %c0_101] : memref<9x4x4xf32, #tpu.memory_space<vmem>>, vector<1x4x4xf32>
    %138 = vector.shape_cast %137 : vector<1x4x4xf32> to vector<4x4xf32>
    %cst_102 = arith.constant dense<0.000000e+00> : vector<4x384xf32>
    %139 = tpu.matmul %138, %136, %cst_102 {dimension_numbers = #tpu.dot_dimension_numbers<[1], [0], [0], [1], [0, 0, 1, 1], [], []>} : vector<4x4xf32>, vector<4x384xf32>, vector<4x384xf32> -> vector<4x384xf32>
    %140 = arith.addf %135, %139 : vector<4x384xf32>
    %141 = vector.extract_strided_slice %126 {offsets = [0, 127], sizes = [4, 384], strides = [1, 1]} : vector<4x640xf32> to vector<4x384xf32>
    %c3_103 = arith.constant 3 : index
    %c0_104 = arith.constant 0 : index
    %c0_105 = arith.constant 0 : index
    %142 = vector.load %arg11[%c3_103, %c0_104, %c0_105] : memref<9x4x4xf32, #tpu.memory_space<vmem>>, vector<1x4x4xf32>
    %143 = vector.shape_cast %142 : vector<1x4x4xf32> to vector<4x4xf32>
    %cst_106 = arith.constant dense<0.000000e+00> : vector<4x384xf32>
    %144 = tpu.matmul %143, %141, %cst_106 {dimension_numbers = #tpu.dot_dimension_numbers<[1], [0], [0], [1], [0, 0, 1, 1], [], []>} : vector<4x4xf32>, vector<4x384xf32>, vector<4x384xf32> -> vector<4x384xf32>
    %145 = arith.addf %140, %144 : vector<4x384xf32>
    %146 = vector.extract_strided_slice %126 {offsets = [0, 128], sizes = [4, 384], strides = [1, 1]} : vector<4x640xf32> to vector<4x384xf32>
    %c4_107 = arith.constant 4 : index
    %c0_108 = arith.constant 0 : index
    %c0_109 = arith.constant 0 : index
    %147 = vector.load %arg11[%c4_107, %c0_108, %c0_109] : memref<9x4x4xf32, #tpu.memory_space<vmem>>, vector<1x4x4xf32>
    %148 = vector.shape_cast %147 : vector<1x4x4xf32> to vector<4x4xf32>
    %cst_110 = arith.constant dense<0.000000e+00> : vector<4x384xf32>
    %149 = tpu.matmul %148, %146, %cst_110 {dimension_numbers = #tpu.dot_dimension_numbers<[1], [0], [0], [1], [0, 0, 1, 1], [], []>} : vector<4x4xf32>, vector<4x384xf32>, vector<4x384xf32> -> vector<4x384xf32>
    %150 = arith.addf %145, %149 : vector<4x384xf32>
    %151 = vector.extract_strided_slice %126 {offsets = [0, 129], sizes = [4, 384], strides = [1, 1]} : vector<4x640xf32> to vector<4x384xf32>
    %c5_111 = arith.constant 5 : index
    %c0_112 = arith.constant 0 : index
    %c0_113 = arith.constant 0 : index
    %152 = vector.load %arg11[%c5_111, %c0_112, %c0_113] : memref<9x4x4xf32, #tpu.memory_space<vmem>>, vector<1x4x4xf32>
    %153 = vector.shape_cast %152 : vector<1x4x4xf32> to vector<4x4xf32>
    %cst_114 = arith.constant dense<0.000000e+00> : vector<4x384xf32>
    %154 = tpu.matmul %153, %151, %cst_114 {dimension_numbers = #tpu.dot_dimension_numbers<[1], [0], [0], [1], [0, 0, 1, 1], [], []>} : vector<4x4xf32>, vector<4x384xf32>, vector<4x384xf32> -> vector<4x384xf32>
    %155 = arith.addf %150, %154 : vector<4x384xf32>
    %156 = vector.extract_strided_slice %126 {offsets = [0, 145], sizes = [4, 384], strides = [1, 1]} : vector<4x640xf32> to vector<4x384xf32>
    %c6_115 = arith.constant 6 : index
    %c0_116 = arith.constant 0 : index
    %c0_117 = arith.constant 0 : index
    %157 = vector.load %arg11[%c6_115, %c0_116, %c0_117] : memref<9x4x4xf32, #tpu.memory_space<vmem>>, vector<1x4x4xf32>
    %158 = vector.shape_cast %157 : vector<1x4x4xf32> to vector<4x4xf32>
    %cst_118 = arith.constant dense<0.000000e+00> : vector<4x384xf32>
    %159 = tpu.matmul %158, %156, %cst_118 {dimension_numbers = #tpu.dot_dimension_numbers<[1], [0], [0], [1], [0, 0, 1, 1], [], []>} : vector<4x4xf32>, vector<4x384xf32>, vector<4x384xf32> -> vector<4x384xf32>
    %160 = arith.addf %155, %159 : vector<4x384xf32>
    %161 = vector.extract_strided_slice %126 {offsets = [0, 146], sizes = [4, 384], strides = [1, 1]} : vector<4x640xf32> to vector<4x384xf32>
    %c7_119 = arith.constant 7 : index
    %c0_120 = arith.constant 0 : index
    %c0_121 = arith.constant 0 : index
    %162 = vector.load %arg11[%c7_119, %c0_120, %c0_121] : memref<9x4x4xf32, #tpu.memory_space<vmem>>, vector<1x4x4xf32>
    %163 = vector.shape_cast %162 : vector<1x4x4xf32> to vector<4x4xf32>
    %cst_122 = arith.constant dense<0.000000e+00> : vector<4x384xf32>
    %164 = tpu.matmul %163, %161, %cst_122 {dimension_numbers = #tpu.dot_dimension_numbers<[1], [0], [0], [1], [0, 0, 1, 1], [], []>} : vector<4x4xf32>, vector<4x384xf32>, vector<4x384xf32> -> vector<4x384xf32>
    %165 = arith.addf %160, %164 : vector<4x384xf32>
    %166 = vector.extract_strided_slice %126 {offsets = [0, 147], sizes = [4, 384], strides = [1, 1]} : vector<4x640xf32> to vector<4x384xf32>
    %c8_123 = arith.constant 8 : index
    %c0_124 = arith.constant 0 : index
    %c0_125 = arith.constant 0 : index
    %167 = vector.load %arg11[%c8_123, %c0_124, %c0_125] : memref<9x4x4xf32, #tpu.memory_space<vmem>>, vector<1x4x4xf32>
    %168 = vector.shape_cast %167 : vector<1x4x4xf32> to vector<4x4xf32>
    %cst_126 = arith.constant dense<0.000000e+00> : vector<4x384xf32>
    %169 = tpu.matmul %168, %166, %cst_126 {dimension_numbers = #tpu.dot_dimension_numbers<[1], [0], [0], [1], [0, 0, 1, 1], [], []>} : vector<4x4xf32>, vector<4x384xf32>, vector<4x384xf32> -> vector<4x384xf32>
    %170 = arith.addf %165, %169 : vector<4x384xf32>
    %c0_127 = arith.constant 0 : index
    %c0_128 = arith.constant 0 : index
    %171 = vector.load %arg12[%c0_127, %c0_128] : memref<4x1xf32, #tpu.memory_space<vmem>>, vector<4x1xf32>
    %172 = vector.broadcast %171 : vector<4x1xf32> to vector<4x384xf32>
    %173 = arith.addf %170, %172 : vector<4x384xf32>
    %cst_129 = arith.constant 0.000000e+00 : f32
    %174 = vector.broadcast %cst_129 : f32 to vector<4x384xf32>
    %175 = arith.maximumf %173, %174 : vector<4x384xf32>
    %176 = vector.broadcast %27 : vector<1x384xf32> to vector<4x384xf32>
    %177 = arith.mulf %175, %176 : vector<4x384xf32>
    %cst_130 = arith.constant 0.000000e+00 : f32
    %178 = vector.broadcast %cst_130 : f32 to vector<4x128xf32>
    %cst_131 = arith.constant 0.000000e+00 : f32
    %179 = vector.broadcast %cst_131 : f32 to vector<4x128xf32>
    %180 = tpu.concatenate %178, %177, %179 in 1 : vector<4x128xf32>, vector<4x384xf32>, vector<4x128xf32> -> vector<4x640xf32>
    %c0_132 = arith.constant 0 : index
    %c0_133 = arith.constant 0 : index
    %c0_134 = arith.constant 0 : index
    %181 = vector.load %arg14[%c0_132, %c0_133, %c0_134] : memref<1x4x640xf32, #tpu.memory_space<vmem>>, vector<1x4x640xf32>
    %182 = vector.shape_cast %181 : vector<1x4x640xf32> to vector<4x640xf32>
    %183 = vector.shape_cast %180 : vector<4x640xf32> to vector<1x4x640xf32>
    tpu.vector_store %arg14[%c0_132, %c0_133, %c0_134], %183 {strides = array<i32>} : memref<1x4x640xf32, #tpu.memory_space<vmem>>, vector<1x4x640xf32>,
    return
  }
  func.func @transform_0(%arg0: i32) -> (i32, i32, i32) {
    %c0_i32 = arith.constant 0 : i32
    %c0_i32_0 = arith.constant 0 : i32
    %c0_i32_1 = arith.constant 0 : i32
    return %arg0, %c0_i32, %c0_i32_0 : i32, i32, i32
  }
  func.func @transform_1(%arg0: i32) -> (i32, i32, i32) {
    %c0_i32 = arith.constant 0 : i32
    %c0_i32_0 = arith.constant 0 : i32
    %c0_i32_1 = arith.constant 0 : i32
    return %arg0, %c0_i32, %c0_i32_0 : i32, i32, i32
  }
  func.func @transform_2(%arg0: i32) -> (i32, i32) {
    %c0_i32 = arith.constant 0 : i32
    %c0_i32_0 = arith.constant 0 : i32
    %c0_i32_1 = arith.constant 0 : i32
    return %c0_i32, %c0_i32_0 : i32, i32
  }
  func.func @transform_3(%arg0: i32) -> (i32, i32) {
    %c0_i32 = arith.constant 0 : i32
    %c0_i32_0 = arith.constant 0 : i32
    %c0_i32_1 = arith.constant 0 : i32
    return %c0_i32, %c0_i32_0 : i32, i32
  }
  func.func @transform_4(%arg0: i32) -> (i32, i32) {
    %c0_i32 = arith.constant 0 : i32
    %c0_i32_0 = arith.constant 0 : i32
    %c0_i32_1 = arith.constant 0 : i32
    return %c0_i32, %c0_i32_0 : i32, i32
  }
  func.func @transform_5(%arg0: i32) -> (i32, i32) {
    %c0_i32 = arith.constant 0 : i32
    %c0_i32_0 = arith.constant 0 : i32
    %c0_i32_1 = arith.constant 0 : i32
    return %c0_i32, %c0_i32_0 : i32, i32
  }
  func.func @transform_6(%arg0: i32) -> (i32, i32) {
    %c0_i32 = arith.constant 0 : i32
    %c0_i32_0 = arith.constant 0 : i32
    %c0_i32_1 = arith.constant 0 : i32
    return %c0_i32, %c0_i32_0 : i32, i32
  }
  func.func @transform_7(%arg0: i32) -> (i32, i32, i32) {
    %c0_i32 = arith.constant 0 : i32
    %c0_i32_0 = arith.constant 0 : i32
    %c0_i32_1 = arith.constant 0 : i32
    %c0_i32_2 = arith.constant 0 : i32
    return %c0_i32, %c0_i32_0, %c0_i32_1 : i32, i32, i32
  }
  func.func @transform_8(%arg0: i32) -> (i32, i32, i32) {
    %c0_i32 = arith.constant 0 : i32
    %c0_i32_0 = arith.constant 0 : i32
    %c0_i32_1 = arith.constant 0 : i32
    %c0_i32_2 = arith.constant 0 : i32
    return %c0_i32, %c0_i32_0, %c0_i32_1 : i32, i32, i32
  }
  func.func @transform_9(%arg0: i32) -> (i32, i32) {
    %c0_i32 = arith.constant 0 : i32
    %c0_i32_0 = arith.constant 0 : i32
    %c0_i32_1 = arith.constant 0 : i32
    return %c0_i32, %c0_i32_0 : i32, i32
  }
  func.func @transform_10(%arg0: i32) -> (i32, i32, i32) {
    %c0_i32 = arith.constant 0 : i32
    %c0_i32_0 = arith.constant 0 : i32
    %c0_i32_1 = arith.constant 0 : i32
    %c0_i32_2 = arith.constant 0 : i32
    return %c0_i32, %c0_i32_0, %c0_i32_1 : i32, i32, i32
  }
  func.func @transform_11(%arg0: i32) -> (i32, i32) {
    %c0_i32 = arith.constant 0 : i32
    %c0_i32_0 = arith.constant 0 : i32
    %c0_i32_1 = arith.constant 0 : i32
    return %c0_i32, %c0_i32_0 : i32, i32
  }
  func.func @transform_12(%arg0: i32) -> (i32, i32) {
    %c0_i32 = arith.constant 0 : i32
    %c0_i32_0 = arith.constant 0 : i32
    %c0_i32_1 = arith.constant 0 : i32
    return %c0_i32, %c0_i32_0 : i32, i32
  }
  func.func @transform_13(%arg0: i32) -> (i32, i32, i32) {
    %c0_i32 = arith.constant 0 : i32
    %c0_i32_0 = arith.constant 0 : i32
    %c0_i32_1 = arith.constant 0 : i32
    return %arg0, %c0_i32, %c0_i32_0 : i32, i32, i32
  }
}

</mosaic_0001>

<llo_original>
// kernel: up_forward.1
$region0: #{up_forward.1}
  #allocation0 [shape = 'u32[]', space=smem, size = 0x4, offset = 0x4, fixed_abs, tag = 'smem constant byte address 0x4 - core index']
  #allocation1 [shape = 'u32[72,128]{1,0:T(1,128)}', space=vmem, size = 0x9000, scoped, tag = 'internal scratch']
  #allocation2 [shape = 'f32[1,1]{1,0:T(1,128)S(1)}', space=vmem, size = 0x200, scoped, tag = 'scoped memory for up_forward.1']
  %s0 = inlined_call_operand.vmem [shape: f32[2,4,640], index: 0, kind: input, shape index: {}]
  %s1 = inlined_call_operand.vmem [shape: f32[2,4,640], index: 1, kind: input, shape index: {}]
  %s2 = inlined_call_operand.vmem [shape: f32[2,4], index: 2, kind: input, shape index: {}]
  %s3 = inlined_call_operand.vmem [shape: f32[2,4], index: 3, kind: input, shape index: {}]
  %s4 = inlined_call_operand.vmem [shape: f32[2,1], index: 4, kind: input, shape index: {}]
  %s5 = inlined_call_operand.vmem [shape: f32[1,2], index: 5, kind: input, shape index: {}]
  %s6 = inlined_call_operand.<no memory space> [shape: f32[1,1], index: 6, kind: input, shape index: {}]
  %s7 = inlined_call_operand.vmem [shape: f32[9,4,4], index: 7, kind: input, shape index: {}]
  %s8 = inlined_call_operand.vmem [shape: f32[9,4,4], index: 8, kind: input, shape index: {}]
  %s9 = inlined_call_operand.vmem [shape: f32[4,1], index: 9, kind: input, shape index: {}]
  %s10 = inlined_call_operand.vmem [shape: f32[9,4,4], index: 10, kind: input, shape index: {}]
  %s11 = inlined_call_operand.vmem [shape: f32[4,1], index: 11, kind: input, shape index: {}]
  %s12 = inlined_call_operand.vmem [shape: f32[1,384], index: 12, kind: input, shape index: {}]
  %s13 = inlined_call_operand.vmem [shape: f32[2,4,640], index: 13, kind: output, shape index: {}]
  %s14 = sld [smem:[#allocation0]]
  $region85: #{up_forward.1} parent=0
    _
  %s16 = ssub.s32 1, %s14
  %s17 = scalar_select 0, %s16, %s14
  %v18 = vstv %s6
  %19 = vst [vmem:[#allocation2] sm:$0x1] %v18
  loop: start=0, step=1, limit=4
  $region2: #{up_forward.1} parent=0 // loop_pre_header
    _
  $region3: #{up_forward.1} parent=0 // loop_header
    %s21 = sphi 0, %s25
    %p22 = scmp.ge.s32.totalorder %s21, 4
    %s31 = sphi 0, %s33
    %s34 = sphi 0, %s31
    %s35 = sphi 0, %s34
    %s51 = sphi 0, %s35
    %s57 = sphi 0, %s59
    %s60 = sphi 0, %s57
    %s61 = sphi 0, %s60
    %s77 = sphi 0, %s61
    %s81 = sphi 0, %s81
    %s83 = sphi 0, %s81
    %s84 = sphi 0, %s83
    %s98 = sphi 0, %s84
    %s102 = sphi 0, %s102
    %s104 = sphi 0, %s102
    %s105 = sphi 0, %s104
    %s119 = sphi 0, %s105
    %s123 = sphi 0, %s123
    %s125 = sphi 0, %s123
    %s126 = sphi 0, %s125
    %s140 = sphi 0, %s126
    %s144 = sphi 0, %s144
    %s146 = sphi 0, %s144
    %s147 = sphi 0, %s146
    %s161 = sphi 0, %s147
    %s165 = sphi 0, %s165
    %s167 = sphi 0, %s165
    %s168 = sphi 0, %s167
    %s182 = sphi 0, %s168
    %s186 = sphi 0, %s186
    %s188 = sphi 0, %s186
    %s189 = sphi 0, %s188
    %s203 = sphi 0, %s189
    %s207 = sphi 0, %s207
    %s209 = sphi 0, %s207
    %s210 = sphi 0, %s209
    %s224 = sphi 0, %s210
    %s228 = sphi 0, %s228
    %s230 = sphi 0, %s228
    %s231 = sphi 0, %s230
    %s245 = sphi 0, %s231
    %s249 = sphi 0, %s249
    %s251 = sphi 0, %s249
    %s252 = sphi 0, %s251
    %s266 = sphi 0, %s252
    %s270 = sphi 0, %s270
    %s272 = sphi 0, %s270
    %s273 = sphi 0, %s272
    %s287 = sphi 0, %s273
    %s291 = sphi 0, %s291
    %s293 = sphi 0, %s291
    %s294 = sphi 0, %s293
    %s308 = sphi 0, %s294
    %s314 = sphi 0, %s316
    %s317 = sphi 0, %s314
    %s318 = sphi 0, %s317
    %s334 = sphi 0, %s318
  $region4: #{up_forward.1} parent=0 // loop_header_branch
    %24 = sbr.rel (%p22) target = $region8
  $region5: #{up_forward.1} parent=0 // loop_body
    %s26 = ssub.s32 %s21, 1
    %s27 = ssub.s32 %s21, 2
    %s28 = sadd.s32 %s21, 1
    %s29 = ssub.s32 %s21, %s28
    %p30 = scmp.eq.s32.totalorder %s29, 0
    %s32 = sadd.s32 %s31, 1
    %s33 = scalar_select %p30, %s31, %s32
    %p36 = pneg %p30
    %p37 = scmp.eq.s32.totalorder %s21, 1
    %p38 = por %p36, %p37
    %p39 = scmp.ne.s32.totalorder %s31, %s34
    %p40 = scmp.eq.s32.totalorder %s21, 0
    %p41 = por %p39, %p40
    %p42 = scmp.ne.s32.totalorder %s31, %s34
    %p43 = scmp.eq.s32.totalorder %s26, 1
    %p44 = por %p42, %p43
    %p45 = scmp.ne.s32.totalorder %s34, %s35
    %p46 = scmp.eq.s32.totalorder %s26, 0
    %p47 = por %p45, %p46
    %p48 = scmp.ne.s32.totalorder %s34, %s35
    %p49 = scmp.eq.s32.totalorder %s27, 1
    %p50 = por %p48, %p49
    %p52 = scmp.ne.s32.totalorder %s35, %s51
    %p53 = scmp.eq.s32.totalorder %s27, 0
    %p54 = por %p52, %p53
    %s55 = ssub.s32 %s21, %s28
    %p56 = scmp.eq.s32.totalorder %s55, 0
    %s58 = sadd.s32 %s57, 1
    %s59 = scalar_select %p56, %s57, %s58
    %p62 = pneg %p56
    %p63 = scmp.eq.s32.totalorder %s21, 1
    %p64 = por %p62, %p63
    %p65 = scmp.ne.s32.totalorder %s57, %s60
    %p66 = scmp.eq.s32.totalorder %s21, 0
    %p67 = por %p65, %p66
    %p68 = scmp.ne.s32.totalorder %s57, %s60
    %p69 = scmp.eq.s32.totalorder %s26, 1
    %p70 = por %p68, %p69
    %p71 = scmp.ne.s32.totalorder %s60, %s61
    %p72 = scmp.eq.s32.totalorder %s26, 0
    %p73 = por %p71, %p72
    %p74 = scmp.ne.s32.totalorder %s60, %s61
    %p75 = scmp.eq.s32.totalorder %s27, 1
    %p76 = por %p74, %p75
    %p78 = scmp.ne.s32.totalorder %s61, %s77
    %p79 = scmp.eq.s32.totalorder %s27, 0
    %p80 = por %p78, %p79
    %s82 = sadd.s32 %s81, 1
    %p85 = scmp.eq.s32.totalorder %s21, 1
    %p86 = scmp.ne.s32.totalorder %s81, %s83
    %p87 = scmp.eq.s32.totalorder %s21, 0
    %p88 = por %p86, %p87
    %p89 = scmp.ne.s32.totalorder %s81, %s83
    %p90 = scmp.eq.s32.totalorder %s26, 1
    %p91 = por %p89, %p90
    %p92 = scmp.ne.s32.totalorder %s83, %s84
    %p93 = scmp.eq.s32.totalorder %s26, 0
    %p94 = por %p92, %p93
    %p95 = scmp.ne.s32.totalorder %s83, %s84
    %p96 = scmp.eq.s32.totalorder %s27, 1
    %p97 = por %p95, %p96
    %p99 = scmp.ne.s32.totalorder %s84, %s98
    %p100 = scmp.eq.s32.totalorder %s27, 0
    %p101 = por %p99, %p100
    %s103 = sadd.s32 %s102, 1
    %p106 = scmp.eq.s32.totalorder %s21, 1
    %p107 = scmp.ne.s32.totalorder %s102, %s104
    %p108 = scmp.eq.s32.totalorder %s21, 0
    %p109 = por %p107, %p108
    %p110 = scmp.ne.s32.totalorder %s102, %s104
    %p111 = scmp.eq.s32.totalorder %s26, 1
    %p112 = por %p110, %p111
    %p113 = scmp.ne.s32.totalorder %s104, %s105
    %p114 = scmp.eq.s32.totalorder %s26, 0
    %p115 = por %p113, %p114
    %p116 = scmp.ne.s32.totalorder %s104, %s105
    %p117 = scmp.eq.s32.totalorder %s27, 1
    %p118 = por %p116, %p117
    %p120 = scmp.ne.s32.totalorder %s105, %s119
    %p121 = scmp.eq.s32.totalorder %s27, 0
    %p122 = por %p120, %p121
    %s124 = sadd.s32 %s123, 1
    %p127 = scmp.eq.s32.totalorder %s21, 1
    %p128 = scmp.ne.s32.totalorder %s123, %s125
    %p129 = scmp.eq.s32.totalorder %s21, 0
    %p130 = por %p128, %p129
    %p131 = scmp.ne.s32.totalorder %s123, %s125
    %p132 = scmp.eq.s32.totalorder %s26, 1
    %p133 = por %p131, %p132
    %p134 = scmp.ne.s32.totalorder %s125, %s126
    %p135 = scmp.eq.s32.totalorder %s26, 0
    %p136 = por %p134, %p135
    %p137 = scmp.ne.s32.totalorder %s125, %s126
    %p138 = scmp.eq.s32.totalorder %s27, 1
    %p139 = por %p137, %p138
    %p141 = scmp.ne.s32.totalorder %s126, %s140
    %p142 = scmp.eq.s32.totalorder %s27, 0
    %p143 = por %p141, %p142
    %s145 = sadd.s32 %s144, 1
    %p148 = scmp.eq.s32.totalorder %s21, 1
    %p149 = scmp.ne.s32.totalorder %s144, %s146
    %p150 = scmp.eq.s32.totalorder %s21, 0
    %p151 = por %p149, %p150
    %p152 = scmp.ne.s32.totalorder %s144, %s146
    %p153 = scmp.eq.s32.totalorder %s26, 1
    %p154 = por %p152, %p153
    %p155 = scmp.ne.s32.totalorder %s146, %s147
    %p156 = scmp.eq.s32.totalorder %s26, 0
    %p157 = por %p155, %p156
    %p158 = scmp.ne.s32.totalorder %s146, %s147
    %p159 = scmp.eq.s32.totalorder %s27, 1
    %p160 = por %p158, %p159
    %p162 = scmp.ne.s32.totalorder %s147, %s161
    %p163 = scmp.eq.s32.totalorder %s27, 0
    %p164 = por %p162, %p163
    %s166 = sadd.s32 %s165, 1
    %p169 = scmp.eq.s32.totalorder %s21, 1
    %p170 = scmp.ne.s32.totalorder %s165, %s167
    %p171 = scmp.eq.s32.totalorder %s21, 0
    %p172 = por %p170, %p171
    %p173 = scmp.ne.s32.totalorder %s165, %s167
    %p174 = scmp.eq.s32.totalorder %s26, 1
    %p175 = por %p173, %p174
    %p176 = scmp.ne.s32.totalorder %s167, %s168
    %p177 = scmp.eq.s32.totalorder %s26, 0
    %p178 = por %p176, %p177
    %p179 = scmp.ne.s32.totalorder %s167, %s168
    %p180 = scmp.eq.s32.totalorder %s27, 1
    %p181 = por %p179, %p180
    %p183 = scmp.ne.s32.totalorder %s168, %s182
    %p184 = scmp.eq.s32.totalorder %s27, 0
    %p185 = por %p183, %p184
    %s187 = sadd.s32 %s186, 1
    %p190 = scmp.eq.s32.totalorder %s21, 1
    %p191 = scmp.ne.s32.totalorder %s186, %s188
    %p192 = scmp.eq.s32.totalorder %s21, 0
    %p193 = por %p191, %p192
    %p194 = scmp.ne.s32.totalorder %s186, %s188
    %p195 = scmp.eq.s32.totalorder %s26, 1
    %p196 = por %p194, %p195
    %p197 = scmp.ne.s32.totalorder %s188, %s189
    %p198 = scmp.eq.s32.totalorder %s26, 0
    %p199 = por %p197, %p198
    %p200 = scmp.ne.s32.totalorder %s188, %s189
    %p201 = scmp.eq.s32.totalorder %s27, 1
    %p202 = por %p200, %p201
    %p204 = scmp.ne.s32.totalorder %s189, %s203
    %p205 = scmp.eq.s32.totalorder %s27, 0
    %p206 = por %p204, %p205
    %s208 = sadd.s32 %s207, 1
    %p211 = scmp.eq.s32.totalorder %s21, 1
    %p212 = scmp.ne.s32.totalorder %s207, %s209
    %p213 = scmp.eq.s32.totalorder %s21, 0
    %p214 = por %p212, %p213
    %p215 = scmp.ne.s32.totalorder %s207, %s209
    %p216 = scmp.eq.s32.totalorder %s26, 1
    %p217 = por %p215, %p216
    %p218 = scmp.ne.s32.totalorder %s209, %s210
    %p219 = scmp.eq.s32.totalorder %s26, 0
    %p220 = por %p218, %p219
    %p221 = scmp.ne.s32.totalorder %s209, %s210
    %p222 = scmp.eq.s32.totalorder %s27, 1
    %p223 = por %p221, %p222
    %p225 = scmp.ne.s32.totalorder %s210, %s224
    %p226 = scmp.eq.s32.totalorder %s27, 0
    %p227 = por %p225, %p226
    %s229 = sadd.s32 %s228, 1
    %p232 = scmp.eq.s32.totalorder %s21, 1
    %p233 = scmp.ne.s32.totalorder %s228, %s230
    %p234 = scmp.eq.s32.totalorder %s21, 0
    %p235 = por %p233, %p234
    %p236 = scmp.ne.s32.totalorder %s228, %s230
    %p237 = scmp.eq.s32.totalorder %s26, 1
    %p238 = por %p236, %p237
    %p239 = scmp.ne.s32.totalorder %s230, %s231
    %p240 = scmp.eq.s32.totalorder %s26, 0
    %p241 = por %p239, %p240
    %p242 = scmp.ne.s32.totalorder %s230, %s231
    %p243 = scmp.eq.s32.totalorder %s27, 1
    %p244 = por %p242, %p243
    %p246 = scmp.ne.s32.totalorder %s231, %s245
    %p247 = scmp.eq.s32.totalorder %s27, 0
    %p248 = por %p246, %p247
    %s250 = sadd.s32 %s249, 1
    %p253 = scmp.eq.s32.totalorder %s21, 1
    %p254 = scmp.ne.s32.totalorder %s249, %s251
    %p255 = scmp.eq.s32.totalorder %s21, 0
    %p256 = por %p254, %p255
    %p257 = scmp.ne.s32.totalorder %s249, %s251
    %p258 = scmp.eq.s32.totalorder %s26, 1
    %p259 = por %p257, %p258
    %p260 = scmp.ne.s32.totalorder %s251, %s252
    %p261 = scmp.eq.s32.totalorder %s26, 0
    %p262 = por %p260, %p261
    %p263 = scmp.ne.s32.totalorder %s251, %s252
    %p264 = scmp.eq.s32.totalorder %s27, 1
    %p265 = por %p263, %p264
    %p267 = scmp.ne.s32.totalorder %s252, %s266
    %p268 = scmp.eq.s32.totalorder %s27, 0
    %p269 = por %p267, %p268
    %s271 = sadd.s32 %s270, 1
    %p274 = scmp.eq.s32.totalorder %s21, 1
    %p275 = scmp.ne.s32.totalorder %s270, %s272
    %p276 = scmp.eq.s32.totalorder %s21, 0
    %p277 = por %p275, %p276
    %p278 = scmp.ne.s32.totalorder %s270, %s272
    %p279 = scmp.eq.s32.totalorder %s26, 1
    %p280 = por %p278, %p279
    %p281 = scmp.ne.s32.totalorder %s272, %s273
    %p282 = scmp.eq.s32.totalorder %s26, 0
    %p283 = por %p281, %p282
    %p284 = scmp.ne.s32.totalorder %s272, %s273
    %p285 = scmp.eq.s32.totalorder %s27, 1
    %p286 = por %p284, %p285
    %p288 = scmp.ne.s32.totalorder %s273, %s287
    %p289 = scmp.eq.s32.totalorder %s27, 0
    %p290 = por %p288, %p289
    %s292 = sadd.s32 %s291, 1
    %p295 = scmp.eq.s32.totalorder %s21, 1
    %p296 = scmp.ne.s32.totalorder %s291, %s293
    %p297 = scmp.eq.s32.totalorder %s21, 0
    %p298 = por %p296, %p297
    %p299 = scmp.ne.s32.totalorder %s291, %s293
    %p300 = scmp.eq.s32.totalorder %s26, 1
    %p301 = por %p299, %p300
    %p302 = scmp.ne.s32.totalorder %s293, %s294
    %p303 = scmp.eq.s32.totalorder %s26, 0
    %p304 = por %p302, %p303
    %p305 = scmp.ne.s32.totalorder %s293, %s294
    %p306 = scmp.eq.s32.totalorder %s27, 1
    %p307 = por %p305, %p306
    %p309 = scmp.ne.s32.totalorder %s294, %s308
    %p310 = scmp.eq.s32.totalorder %s27, 0
    %p311 = por %p309, %p310
    %s312 = ssub.s32 %s21, %s28
    %p313 = scmp.eq.s32.totalorder %s312, 0
    %s315 = sadd.s32 %s314, 1
    %s316 = scalar_select %p313, %s314, %s315
    %p319 = pneg %p313
    %p320 = scmp.eq.s32.totalorder %s21, 1
    %p321 = por %p319, %p320
    %p322 = scmp.ne.s32.totalorder %s314, %s317
    %p323 = scmp.eq.s32.totalorder %s21, 0
    %p324 = por %p322, %p323
    %p325 = scmp.ne.s32.totalorder %s314, %s317
    %p326 = scmp.eq.s32.totalorder %s26, 1
    %p327 = por %p325, %p326
    %p328 = scmp.ne.s32.totalorder %s317, %s318
    %p329 = scmp.eq.s32.totalorder %s26, 0
    %p330 = por %p328, %p329
    %p331 = scmp.ne.s32.totalorder %s317, %s318
    %p332 = scmp.eq.s32.totalorder %s27, 1
    %p333 = por %p331, %p332
    %p335 = scmp.ne.s32.totalorder %s318, %s334
    %p336 = scmp.eq.s32.totalorder %s27, 0
    %p337 = por %p335, %p336
    %p338 = scmp.le.s32.totalorder 1, %s21
    %p339 = scmp.lt.s32.totalorder %s21, 3
    %p340 = pnand %p338, %p339
    %p341 = pneg %p340
    // Predicated region
    $region9: #{up_forward.1} parent=5 // pred_check
      _
    $region10: #{up_forward.1} parent=5 // pred_check_branch
      %343 = sbr.rel (%p340) target = $region12
    $region11: #{up_forward.1} parent=5 // pred_region
      %s344 = ssub.s32 %s21, 1
      // Predicated region
      $region13: #{up_forward.1} parent=11 // pred_check
        %p345 = pneg %p94
      $region14: #{up_forward.1} parent=11 // pred_check_branch
        %347 = sbr.rel (%p345) target = $region16
      $region15: #{up_forward.1} parent=11 // pred_region
        _
      $region16: #{up_forward.1} parent=11 // pred_fallthru
        _
      // Predicated region
      $region17: #{up_forward.1} parent=11 // pred_check
        %p348 = pneg %p115
      $region18: #{up_forward.1} parent=11 // pred_check_branch
        %350 = sbr.rel (%p348) target = $region20
      $region19: #{up_forward.1} parent=11 // pred_region
        _
      $region20: #{up_forward.1} parent=11 // pred_fallthru
        _
      // Predicated region
      $region21: #{up_forward.1} parent=11 // pred_check
        %p351 = pneg %p136
      $region22: #{up_forward.1} parent=11 // pred_check_branch
        %353 = sbr.rel (%p351) target = $region24
      $region23: #{up_forward.1} parent=11 // pred_region
        _
      $region24: #{up_forward.1} parent=11 // pred_fallthru
        _
      // Predicated region
      $region25: #{up_forward.1} parent=11 // pred_check
        %p354 = pneg %p157
      $region26: #{up_forward.1} parent=11 // pred_check_branch
        %356 = sbr.rel (%p354) target = $region28
      $region27: #{up_forward.1} parent=11 // pred_region
        _
      $region28: #{up_forward.1} parent=11 // pred_fallthru
        _
      // Predicated region
      $region29: #{up_forward.1} parent=11 // pred_check
        %p357 = pneg %p178
      $region30: #{up_forward.1} parent=11 // pred_check_branch
        %359 = sbr.rel (%p357) target = $region32
      $region31: #{up_forward.1} parent=11 // pred_region
        _
      $region32: #{up_forward.1} parent=11 // pred_fallthru
        _
      // Predicated region
      $region33: #{up_forward.1} parent=11 // pred_check
        %p360 = pneg %p199
      $region34: #{up_forward.1} parent=11 // pred_check_branch
        %362 = sbr.rel (%p360) target = $region36
      $region35: #{up_forward.1} parent=11 // pred_region
        _
      $region36: #{up_forward.1} parent=11 // pred_fallthru
        _
      // Predicated region
      $region37: #{up_forward.1} parent=11 // pred_check
        %p363 = pneg %p220
      $region38: #{up_forward.1} parent=11 // pred_check_branch
        %365 = sbr.rel (%p363) target = $region40
      $region39: #{up_forward.1} parent=11 // pred_region
        _
      $region40: #{up_forward.1} parent=11 // pred_fallthru
        _
      // Predicated region
      $region41: #{up_forward.1} parent=11 // pred_check
        %p366 = pneg %p241
      $region42: #{up_forward.1} parent=11 // pred_check_branch
        %368 = sbr.rel (%p366) target = $region44
      $region43: #{up_forward.1} parent=11 // pred_region
        _
      $region44: #{up_forward.1} parent=11 // pred_fallthru
        _
      // Predicated region
      $region45: #{up_forward.1} parent=11 // pred_check
        %p369 = pneg %p262
      $region46: #{up_forward.1} parent=11 // pred_check_branch
        %371 = sbr.rel (%p369) target = $region48
      $region47: #{up_forward.1} parent=11 // pred_region
        _
      $region48: #{up_forward.1} parent=11 // pred_fallthru
        _
      // Predicated region
      $region49: #{up_forward.1} parent=11 // pred_check
        %p372 = pneg %p283
      $region50: #{up_forward.1} parent=11 // pred_check_branch
        %374 = sbr.rel (%p372) target = $region52
      $region51: #{up_forward.1} parent=11 // pred_region
        _
      $region52: #{up_forward.1} parent=11 // pred_fallthru
        _
      // Predicated region
      $region53: #{up_forward.1} parent=11 // pred_check
        %p375 = pneg %p304
      $region54: #{up_forward.1} parent=11 // pred_check_branch
        %377 = sbr.rel (%p375) target = $region56
      $region55: #{up_forward.1} parent=11 // pred_region
        _
      $region56: #{up_forward.1} parent=11 // pred_fallthru
        _
    $region12: #{up_forward.1} parent=5 // pred_fallthru
      _
    %p378 = scmp.lt.s32.totalorder %s21, 2
    // Predicated region
    $region57: #{up_forward.1} parent=5 // pred_check
      %p379 = pneg %p378
    $region58: #{up_forward.1} parent=5 // pred_check_branch
      %381 = sbr.rel (%p379) target = $region60
    $region59: #{up_forward.1} parent=5 // pred_region
      // Predicated region
      $region61: #{up_forward.1} parent=59 // pred_check
        %p382 = pneg %p41
      $region62: #{up_forward.1} parent=59 // pred_check_branch
        %384 = sbr.rel (%p382) target = $region64
      $region63: #{up_forward.1} parent=59 // pred_region
        %p385 = scmp.lt.s32.totalorder %s21, 1
        %s386 = scalar_select %p385, %s21, 1
        %s387 = smul.addr %s386, 5
        %s388 = smul.addr %s387, 4
        %s389 = scalar_lea.vmem %s0, %s388
      $region64: #{up_forward.1} parent=59 // pred_fallthru
        _
      // Predicated region
      $region65: #{up_forward.1} parent=59 // pred_check
        %p390 = pneg %p67
      $region66: #{up_forward.1} parent=59 // pred_check_branch
        %392 = sbr.rel (%p390) target = $region68
      $region67: #{up_forward.1} parent=59 // pred_region
        %p393 = scmp.lt.s32.totalorder %s21, 1
        %s394 = scalar_select %p393, %s21, 1
        %s395 = smul.addr %s394, 5
        %s396 = smul.addr %s395, 4
        %s397 = scalar_lea.vmem %s1, %s396
      $region68: #{up_forward.1} parent=59 // pred_fallthru
        _
    $region60: #{up_forward.1} parent=5 // pred_fallthru
      _
    %p398 = scmp.le.s32.totalorder 1, %s21
    %p399 = scmp.lt.s32.totalorder %s21, 3
    %p400 = pnand %p398, %p399
    %p401 = pneg %p400
    // Predicated region
    $region69: #{up_forward.1} parent=5 // pred_check
      _
    $region70: #{up_forward.1} parent=5 // pred_check_branch
      %403 = sbr.rel (%p400) target = $region72
    $region71: #{up_forward.1} parent=5 // pred_region
      %s404 = ssub.s32 %s21, 1
      %p405 = scmp.lt.s32.totalorder %s26, 1
      %s406 = scalar_select %p405, %s26, 1
      %s407 = smul.addr %s406, 5
      %s408 = smul.addr %s407, 4
      %s409 = scalar_lea.vmem %s0, %s408
      %p410 = pneg %p47
      %p411 = pneg %p44
      %p412 = scmp.lt.s32.totalorder %s26, 1
      %s413 = scalar_select %p412, %s26, 1
      %s414 = smul.addr %s413, 5
      %s415 = smul.addr %s414, 4
      %s416 = scalar_lea.vmem %s1, %s415
      %p417 = pneg %p73
      %p418 = pneg %p70
      %p419 = pneg %p94
      %p420 = pneg %p91
      %p421 = pneg %p115
      %p422 = pneg %p112
      %p423 = pneg %p136
      %p424 = pneg %p133
      %p425 = pneg %p157
      %p426 = pneg %p154
      %p427 = pneg %p178
      %p428 = pneg %p175
      %p429 = pneg %p199
      %p430 = pneg %p196
      %p431 = pneg %p220
      %p432 = pneg %p217
      %p433 = pneg %p241
      %p434 = pneg %p238
      %p435 = pneg %p262
      %p436 = pneg %p259
      %p437 = pneg %p283
      %p438 = pneg %p280
      %p439 = pneg %p304
      %p440 = pneg %p301
      %p441 = pneg %p330
      %p442 = pneg %p327
      %p443 = scmp.lt.s32.totalorder %s26, 1
      %s444 = scalar_select %p443, %s26, 1
      %s445 = smul.addr %s444, 5
      %s446 = smul.addr %s445, 4
      %s447 = scalar_lea.vmem %s13, %s446
      %p448 = scmp.lt.s32.totalorder %s26, 1
      %s449 = scalar_select %p448, %s26, 1
      %s450 = smul.addr %s449, 5
      %s451 = smul.addr %s450, 4
      %s452 = scalar_lea.vmem %s0, %s451
      %p453 = scmp.lt.s32.totalorder %s26, 1
      %s454 = scalar_select %p453, %s26, 1
      %s455 = smul.addr %s454, 5
      %s456 = smul.addr %s455, 4
      %s457 = scalar_lea.vmem %s1, %s456
      %p458 = scmp.lt.s32.totalorder %s26, 1
      %s459 = scalar_select %p458, %s26, 1
      %s460 = smul.addr %s459, 5
      %s461 = smul.addr %s460, 4
      %s462 = scalar_lea.vmem %s13, %s461
      %v463 = vld [vmem:[%s452] sm:$0xff]
      %v464 = vld [vmem:[%s452 + $0x8] sm:$0xff]
      %v465 = vld [vmem:[%s452 + $0x10] sm:$0xf]
      %v466 = vld [vmem:[%s457] sm:$0xff]
      %v467 = vld [vmem:[%s457 + $0x8] sm:$0xff]
      %v468 = vld [vmem:[%s457 + $0x10] sm:$0xf]
      %v469 = vld [vmem:[%s2] sm:$0x3]
      %v470 = vld [vmem:[%s3] sm:$0x3]
      %474 = vst [vmem:[#allocation1] ss:$2 sm:$0xff] %v466
      %s475 = scalar_lea.vmem [#allocation1], 16
      %476 = vst [vmem:[%s475] ss:$2 sm:$0xff] %v467
      %s477 = scalar_lea.vmem [#allocation1], 32
      %478 = vst [vmem:[%s477] ss:$2 sm:$0xff] %v468
      %v479 = vld.sshfl [vmem:[#allocation1] sm:$0xff pattern:$0x75316420]
      %v480 = vld.sshfl [vmem:[#allocation1 + $0x8] sm:$0xff pattern:$0x75316420]
      %v481 = vld.sshfl [vmem:[#allocation1 + $0x10] sm:$0xff pattern:$0x75316420]
      %v482 = vld.sshfl [vmem:[#allocation1 + $0x18] sm:$0xff pattern:$0x75316420]
      %v483 = vld.sshfl [vmem:[#allocation1 + $0x20] sm:$0xff pattern:$0x75316420]
      %vm484 = vcmask 31744
      %v486 = vsel %vm484, %v470, 0
      %vm488 = vcmask 1043456
      %v489 = vsel %vm488, %v479, 0
      %v491 = vsel %vm488, %v480, 0
      %v493 = vsel %vm488, %v481, 0
      %v495 = vsel %vm488, %v482, 0
      %v497 = vsel %vm488, %v483, 0
      %499 = vmatpush.msra.mxu0 0.0
      %500 = vmatpush.msra.mxu0 0.0
      %501 = vmatpush.msra.mxu0 0.0
      %502 = vmatpush.msra.mxu0 0.0
      %503 = vmatpush.msra.mxu0 0.0
      %504 = vmatpush.msra.mxu0 0.0
      %505 = vmatpush.msra.mxu0 0.0
      %506 = vmatpush.msra.mxu0 0.0
      %507 = vmatpush.msra.mxu0 0.0
      %508 = vmatpush.msra.mxu0 0.0
      %509 = vmatpush.msra.mxu0 0.0
      %510 = vmatpush.msra.mxu0 0.0
      %511 = vmatpush.msra.mxu0 0.0
      %512 = vmatpush.msra.mxu0 0.0
      %513 = vmatpush.msra.mxu0 0.0
      %514 = vmatpush.msra.mxu0 %v489
      %515 = vmatmul.f32.gmra.mxu0 %v486
      %v516 = vpop.f32.mrf.mxu0
      %v517 = vadd.f32 0.0, %v516
      %518 = vdwg.mxu0
      %519 = vmatpush.msra.mxu0 0.0
      %520 = vmatpush.msra.mxu0 0.0
      %521 = vmatpush.msra.mxu0 0.0
      %522 = vmatpush.msra.mxu0 0.0
      %523 = vmatpush.msra.mxu0 0.0
      %524 = vmatpush.msra.mxu0 0.0
      %525 = vmatpush.msra.mxu0 0.0
      %526 = vmatpush.msra.mxu0 0.0
      %527 = vmatpush.msra.mxu0 0.0
      %528 = vmatpush.msra.mxu0 0.0
      %529 = vmatpush.msra.mxu0 0.0
      %530 = vmatpush.msra.mxu0 0.0
      %531 = vmatpush.msra.mxu0 0.0
      %532 = vmatpush.msra.mxu0 0.0
      %533 = vmatpush.msra.mxu0 0.0
      %534 = vmatpush.msra.mxu0 %v491
      %535 = vmatmul.f32.gmra.mxu0 %v486
      %v536 = vpop.f32.mrf.mxu0
      %v537 = vadd.f32 0.0, %v536
      %538 = vdwg.mxu0
      %539 = vmatpush.msra.mxu0 0.0
      %540 = vmatpush.msra.mxu0 0.0
      %541 = vmatpush.msra.mxu0 0.0
      %542 = vmatpush.msra.mxu0 0.0
      %543 = vmatpush.msra.mxu0 0.0
      %544 = vmatpush.msra.mxu0 0.0
      %545 = vmatpush.msra.mxu0 0.0
      %546 = vmatpush.msra.mxu0 0.0
      %547 = vmatpush.msra.mxu0 0.0
      %548 = vmatpush.msra.mxu0 0.0
      %549 = vmatpush.msra.mxu0 0.0
      %550 = vmatpush.msra.mxu0 0.0
      %551 = vmatpush.msra.mxu0 0.0
      %552 = vmatpush.msra.mxu0 0.0
      %553 = vmatpush.msra.mxu0 0.0
      %554 = vmatpush.msra.mxu0 %v493
      %555 = vmatmul.f32.gmra.mxu0 %v486
      %v556 = vpop.f32.mrf.mxu0
      %v557 = vadd.f32 0.0, %v556
      %558 = vdwg.mxu0
      %559 = vmatpush.msra.mxu0 0.0
      %560 = vmatpush.msra.mxu0 0.0
      %561 = vmatpush.msra.mxu0 0.0
      %562 = vmatpush.msra.mxu0 0.0
      %563 = vmatpush.msra.mxu0 0.0
      %564 = vmatpush.msra.mxu0 0.0
      %565 = vmatpush.msra.mxu0 0.0
      %566 = vmatpush.msra.mxu0 0.0
      %567 = vmatpush.msra.mxu0 0.0
      %568 = vmatpush.msra.mxu0 0.0
      %569 = vmatpush.msra.mxu0 0.0
      %570 = vmatpush.msra.mxu0 0.0
      %571 = vmatpush.msra.mxu0 0.0
      %572 = vmatpush.msra.mxu0 0.0
      %573 = vmatpush.msra.mxu0 0.0
      %574 = vmatpush.msra.mxu0 %v495
      %575 = vmatmul.f32.gmra.mxu0 %v486
      %v576 = vpop.f32.mrf.mxu0
      %v577 = vadd.f32 0.0, %v576
      %578 = vdwg.mxu0
      %579 = vmatpush.msra.mxu0 0.0
      %580 = vmatpush.msra.mxu0 0.0
      %581 = vmatpush.msra.mxu0 0.0
      %582 = vmatpush.msra.mxu0 0.0
      %583 = vmatpush.msra.mxu0 0.0
      %584 = vmatpush.msra.mxu0 0.0
      %585 = vmatpush.msra.mxu0 0.0
      %586 = vmatpush.msra.mxu0 0.0
      %587 = vmatpush.msra.mxu0 0.0
      %588 = vmatpush.msra.mxu0 0.0
      %589 = vmatpush.msra.mxu0 0.0
      %590 = vmatpush.msra.mxu0 0.0
      %591 = vmatpush.msra.mxu0 0.0
      %592 = vmatpush.msra.mxu0 0.0
      %593 = vmatpush.msra.mxu0 0.0
      %594 = vmatpush.msra.mxu0 %v497
      %595 = vmatmul.f32.gmra.mxu0 %v486
      %v596 = vpop.f32.mrf.mxu0
      %v597 = vadd.f32 0.0, %v596
      %598 = vdwg.mxu0
      %602 = vst [vmem:[#allocation1] ss:$2 sm:$0xff] %v463
      %s603 = scalar_lea.vmem [#allocation1], 16
      %604 = vst [vmem:[%s603] ss:$2 sm:$0xff] %v464
      %s605 = scalar_lea.vmem [#allocation1], 32
      %606 = vst [vmem:[%s605] ss:$2 sm:$0xff] %v465
      %v607 = vld.sshfl [vmem:[#allocation1] sm:$0xff pattern:$0x75316420]
      %v608 = vld.sshfl [vmem:[#allocation1 + $0x8] sm:$0xff pattern:$0x75316420]
      %v609 = vld.sshfl [vmem:[#allocation1 + $0x10] sm:$0xff pattern:$0x75316420]
      %v610 = vld.sshfl [vmem:[#allocation1 + $0x18] sm:$0xff pattern:$0x75316420]
      %v611 = vld.sshfl [vmem:[#allocation1 + $0x20] sm:$0xff pattern:$0x75316420]
      %v613 = vsel %vm484, %v469, 0
      %v615 = vsel %vm488, %v607, 0
      %v617 = vsel %vm488, %v608, 0
      %v619 = vsel %vm488, %v609, 0
      %v621 = vsel %vm488, %v610, 0
      %v623 = vsel %vm488, %v611, 0
      %625 = vmatpush.msra.mxu0 0.0
      %626 = vmatpush.msra.mxu0 0.0
      %627 = vmatpush.msra.mxu0 0.0
      %628 = vmatpush.msra.mxu0 0.0
      %629 = vmatpush.msra.mxu0 0.0
      %630 = vmatpush.msra.mxu0 0.0
      %631 = vmatpush.msra.mxu0 0.0
      %632 = vmatpush.msra.mxu0 0.0
      %633 = vmatpush.msra.mxu0 0.0
      %634 = vmatpush.msra.mxu0 0.0
      %635 = vmatpush.msra.mxu0 0.0
      %636 = vmatpush.msra.mxu0 0.0
      %637 = vmatpush.msra.mxu0 0.0
      %638 = vmatpush.msra.mxu0 0.0
      %639 = vmatpush.msra.mxu0 0.0
      %640 = vmatpush.msra.mxu0 %v615
      %641 = vmatmul.f32.gmra.mxu0 %v613
      %v642 = vpop.f32.mrf.mxu0
      %v643 = vadd.f32 %v517, %v642
      %644 = vdwg.mxu0
      %645 = vmatpush.msra.mxu0 0.0
      %646 = vmatpush.msra.mxu0 0.0
      %647 = vmatpush.msra.mxu0 0.0
      %648 = vmatpush.msra.mxu0 0.0
      %649 = vmatpush.msra.mxu0 0.0
      %650 = vmatpush.msra.mxu0 0.0
      %651 = vmatpush.msra.mxu0 0.0
      %652 = vmatpush.msra.mxu0 0.0
      %653 = vmatpush.msra.mxu0 0.0
      %654 = vmatpush.msra.mxu0 0.0
      %655 = vmatpush.msra.mxu0 0.0
      %656 = vmatpush.msra.mxu0 0.0
      %657 = vmatpush.msra.mxu0 0.0
      %658 = vmatpush.msra.mxu0 0.0
      %659 = vmatpush.msra.mxu0 0.0
      %660 = vmatpush.msra.mxu0 %v617
      %661 = vmatmul.f32.gmra.mxu0 %v613
      %v662 = vpop.f32.mrf.mxu0
      %v663 = vadd.f32 %v537, %v662
      %664 = vdwg.mxu0
      %665 = vmatpush.msra.mxu0 0.0
      %666 = vmatpush.msra.mxu0 0.0
      %667 = vmatpush.msra.mxu0 0.0
      %668 = vmatpush.msra.mxu0 0.0
      %669 = vmatpush.msra.mxu0 0.0
      %670 = vmatpush.msra.mxu0 0.0
      %671 = vmatpush.msra.mxu0 0.0
      %672 = vmatpush.msra.mxu0 0.0
      %673 = vmatpush.msra.mxu0 0.0
      %674 = vmatpush.msra.mxu0 0.0
      %675 = vmatpush.msra.mxu0 0.0
      %676 = vmatpush.msra.mxu0 0.0
      %677 = vmatpush.msra.mxu0 0.0
      %678 = vmatpush.msra.mxu0 0.0
      %679 = vmatpush.msra.mxu0 0.0
      %680 = vmatpush.msra.mxu0 %v619
      %681 = vmatmul.f32.gmra.mxu0 %v613
      %v682 = vpop.f32.mrf.mxu0
      %v683 = vadd.f32 %v557, %v682
      %684 = vdwg.mxu0
      %685 = vmatpush.msra.mxu0 0.0
      %686 = vmatpush.msra.mxu0 0.0
      %687 = vmatpush.msra.mxu0 0.0
      %688 = vmatpush.msra.mxu0 0.0
      %689 = vmatpush.msra.mxu0 0.0
      %690 = vmatpush.msra.mxu0 0.0
      %691 = vmatpush.msra.mxu0 0.0
      %692 = vmatpush.msra.mxu0 0.0
      %693 = vmatpush.msra.mxu0 0.0
      %694 = vmatpush.msra.mxu0 0.0
      %695 = vmatpush.msra.mxu0 0.0
      %696 = vmatpush.msra.mxu0 0.0
      %697 = vmatpush.msra.mxu0 0.0
      %698 = vmatpush.msra.mxu0 0.0
      %699 = vmatpush.msra.mxu0 0.0
      %700 = vmatpush.msra.mxu0 %v621
      %701 = vmatmul.f32.gmra.mxu0 %v613
      %v702 = vpop.f32.mrf.mxu0
      %v703 = vadd.f32 %v577, %v702
      %704 = vdwg.mxu0
      %705 = vmatpush.msra.mxu0 0.0
      %706 = vmatpush.msra.mxu0 0.0
      %707 = vmatpush.msra.mxu0 0.0
      %708 = vmatpush.msra.mxu0 0.0
      %709 = vmatpush.msra.mxu0 0.0
      %710 = vmatpush.msra.mxu0 0.0
      %711 = vmatpush.msra.mxu0 0.0
      %712 = vmatpush.msra.mxu0 0.0
      %713 = vmatpush.msra.mxu0 0.0
      %714 = vmatpush.msra.mxu0 0.0
      %715 = vmatpush.msra.mxu0 0.0
      %716 = vmatpush.msra.mxu0 0.0
      %717 = vmatpush.msra.mxu0 0.0
      %718 = vmatpush.msra.mxu0 0.0
      %719 = vmatpush.msra.mxu0 0.0
      %720 = vmatpush.msra.mxu0 %v623
      %721 = vmatmul.f32.gmra.mxu0 %v613
      %v722 = vpop.f32.mrf.mxu0
      %v723 = vadd.f32 %v597, %v722
      %724 = vdwg.mxu0
      %v725 = vld [vmem:[%s4] sm:$0x3]
      %727 = vset.pattern.permute.xlu0 0
      %728 = vperm.xlu0 %727, %v725
      %v729 = vpop.permute.xlu0 %728
      %v731 = vadd.f32 %v643, %v729
      %v732 = vadd.f32 %v663, %v729
      %v733 = vadd.f32 %v683, %v729
      %v734 = vadd.f32 %v703, %v729
      %v735 = vadd.f32 %v723, %v729
      %v736 = vmax.f32 %v731, 0.0
      %v737 = vmax.f32 %v732, 0.0
      %v738 = vmax.f32 %v733, 0.0
      %v739 = vmax.f32 %v734, 0.0
      %v740 = vmax.f32 %v735, 0.0
      %v741 = vld [vmem:[%s5] sm:$0x1]
      %v742 = vld [vmem:[#allocation2] sm:$0x1]
      %744 = vset.pattern.permute.xlu0 0
      %745 = vperm.xlu0 %744, %v742
      %v746 = vpop.permute.xlu0 %745
      %v748 = vperm.slane %v746, 0
      %vm749 = vcmask 15360
      %v751 = vsel %vm749, %v741, 0
      %vm753 = vcmask 1041408
      %v755 = vsel %vm753, %v736, 0
      %v758 = vsel %vm753, %v737, 0
      %v761 = vsel %vm753, %v738, 0
      %v764 = vsel %vm753, %v739, 0
      %v767 = vsel %vm753, %v740, 0
      %769 = vmatpush.msra.mxu0 0.0
      %770 = vmatpush.msra.mxu0 0.0
      %771 = vmatpush.msra.mxu0 0.0
      %772 = vmatpush.msra.mxu0 0.0
      %773 = vmatpush.msra.mxu0 0.0
      %774 = vmatpush.msra.mxu0 0.0
      %775 = vmatpush.msra.mxu0 0.0
      %776 = vmatpush.msra.mxu0 0.0
      %777 = vmatpush.msra.mxu0 0.0
      %778 = vmatpush.msra.mxu0 0.0
      %779 = vmatpush.msra.mxu0 0.0
      %780 = vmatpush.msra.mxu0 0.0
      %781 = vmatpush.msra.mxu0 0.0
      %782 = vmatpush.msra.mxu0 0.0
      %783 = vmatpush.msra.mxu0 0.0
      %784 = vmatpush.msra.mxu0 %v755
      %785 = vmatmul.f32.gmra.mxu0 %v751
      %v786 = vpop.f32.mrf.mxu0
      %v787 = vadd.f32 %v748, %v786
      %788 = vdwg.mxu0
      %789 = vmatpush.msra.mxu0 0.0
      %790 = vmatpush.msra.mxu0 0.0
      %791 = vmatpush.msra.mxu0 0.0
      %792 = vmatpush.msra.mxu0 0.0
      %793 = vmatpush.msra.mxu0 0.0
      %794 = vmatpush.msra.mxu0 0.0
      %795 = vmatpush.msra.mxu0 0.0
      %796 = vmatpush.msra.mxu0 0.0
      %797 = vmatpush.msra.mxu0 0.0
      %798 = vmatpush.msra.mxu0 0.0
      %799 = vmatpush.msra.mxu0 0.0
      %800 = vmatpush.msra.mxu0 0.0
      %801 = vmatpush.msra.mxu0 0.0
      %802 = vmatpush.msra.mxu0 0.0
      %803 = vmatpush.msra.mxu0 0.0
      %804 = vmatpush.msra.mxu0 %v758
      %805 = vmatmul.f32.gmra.mxu0 %v751
      %v806 = vpop.f32.mrf.mxu0
      %v807 = vadd.f32 %v748, %v806
      %808 = vdwg.mxu0
      %809 = vmatpush.msra.mxu0 0.0
      %810 = vmatpush.msra.mxu0 0.0
      %811 = vmatpush.msra.mxu0 0.0
      %812 = vmatpush.msra.mxu0 0.0
      %813 = vmatpush.msra.mxu0 0.0
      %814 = vmatpush.msra.mxu0 0.0
      %815 = vmatpush.msra.mxu0 0.0
      %816 = vmatpush.msra.mxu0 0.0
      %817 = vmatpush.msra.mxu0 0.0
      %818 = vmatpush.msra.mxu0 0.0
      %819 = vmatpush.msra.mxu0 0.0
      %820 = vmatpush.msra.mxu0 0.0
      %821 = vmatpush.msra.mxu0 0.0
      %822 = vmatpush.msra.mxu0 0.0
      %823 = vmatpush.msra.mxu0 0.0
      %824 = vmatpush.msra.mxu0 %v761
      %825 = vmatmul.f32.gmra.mxu0 %v751
      %v826 = vpop.f32.mrf.mxu0
      %v827 = vadd.f32 %v748, %v826
      %828 = vdwg.mxu0
      %829 = vmatpush.msra.mxu0 0.0
      %830 = vmatpush.msra.mxu0 0.0
      %831 = vmatpush.msra.mxu0 0.0
      %832 = vmatpush.msra.mxu0 0.0
      %833 = vmatpush.msra.mxu0 0.0
      %834 = vmatpush.msra.mxu0 0.0
      %835 = vmatpush.msra.mxu0 0.0
      %836 = vmatpush.msra.mxu0 0.0
      %837 = vmatpush.msra.mxu0 0.0
      %838 = vmatpush.msra.mxu0 0.0
      %839 = vmatpush.msra.mxu0 0.0
      %840 = vmatpush.msra.mxu0 0.0
      %841 = vmatpush.msra.mxu0 0.0
      %842 = vmatpush.msra.mxu0 0.0
      %843 = vmatpush.msra.mxu0 0.0
      %844 = vmatpush.msra.mxu0 %v764
      %845 = vmatmul.f32.gmra.mxu0 %v751
      %v846 = vpop.f32.mrf.mxu0
      %v847 = vadd.f32 %v748, %v846
      %848 = vdwg.mxu0
      %849 = vmatpush.msra.mxu0 0.0
      %850 = vmatpush.msra.mxu0 0.0
      %851 = vmatpush.msra.mxu0 0.0
      %852 = vmatpush.msra.mxu0 0.0
      %853 = vmatpush.msra.mxu0 0.0
      %854 = vmatpush.msra.mxu0 0.0
      %855 = vmatpush.msra.mxu0 0.0
      %856 = vmatpush.msra.mxu0 0.0
      %857 = vmatpush.msra.mxu0 0.0
      %858 = vmatpush.msra.mxu0 0.0
      %859 = vmatpush.msra.mxu0 0.0
      %860 = vmatpush.msra.mxu0 0.0
      %861 = vmatpush.msra.mxu0 0.0
      %862 = vmatpush.msra.mxu0 0.0
      %863 = vmatpush.msra.mxu0 0.0
      %864 = vmatpush.msra.mxu0 %v767
      %865 = vmatmul.f32.gmra.mxu0 %v751
      %v866 = vpop.f32.mrf.mxu0
      %v867 = vadd.f32 %v748, %v866
      %868 = vdwg.mxu0
      %v869 = vsub.f32 0.0, %v787
      %v870 = vsub.f32 0.0, %v807
      %v871 = vsub.f32 0.0, %v827
      %v872 = vsub.f32 0.0, %v847
      %v873 = vsub.f32 0.0, %v867
      %v874 = vmul.f32 %v869, 1.442695
      %v875 = vpow.pop %v874
      %v876 = vmul.f32 %v870, 1.442695
      %v877 = vpow.pop %v876
      %v878 = vmul.f32 %v871, 1.442695
      %v879 = vpow.pop %v878
      %v880 = vmul.f32 %v872, 1.442695
      %v881 = vpow.pop %v880
      %v882 = vmul.f32 %v873, 1.442695
      %v883 = vpow.pop %v882
      %v884 = vadd.f32 %v875, 1.0
      %v885 = vadd.f32 %v877, 1.0
      %v886 = vadd.f32 %v879, 1.0
      %v887 = vadd.f32 %v881, 1.0
      %v888 = vadd.f32 %v883, 1.0
      %v889 = vrcp.pop %v884
      %v890 = vrcp.pop %v885
      %v891 = vrcp.pop %v886
      %v892 = vrcp.pop %v887
      %v893 = vrcp.pop %v888
      %v894 = vperm.slane %v889, 0
      %v895 = vperm.slane %v890, 0
      %v896 = vperm.slane %v891, 0
      %v897 = vperm.slane %v892, 0
      %v898 = vperm.slane %v893, 0
      %v903 = vrot.slane %v895, 4
      %v904 = vrot.slane %v897, 4
      %v905 = vsel %vm488, %v894, %v903
      %v906 = vsel %vm488, %v896, %v904
      %v909 = vmul.f32 %v463, %v905
      %v910 = vmul.f32 %v464, %v906
      %v911 = vmul.f32 %v465, %v898
      %v912 = vld [vmem:[%s12] sm:$0x7]
      %v913 = vld [vmem:[%s7] sm:$0xf]
      %s914 = scalar_lea.vmem %s7, 4
      %v915 = vld [vmem:[%s914] sm:$0xf]
      %918 = vst [vmem:[#allocation1] ss:$2 sm:$0xff] %v909
      %s919 = scalar_lea.vmem [#allocation1], 16
      %920 = vst [vmem:[%s919] ss:$2 sm:$0xff] %v910
      %v921 = vld.sshfl [vmem:[#allocation1] sm:$0xff pattern:$0x75316420]
      %v922 = vld.sshfl [vmem:[#allocation1 + $0x8] sm:$0xff pattern:$0x75316420]
      %v923 = vld.sshfl [vmem:[#allocation1 + $0x10] sm:$0xff pattern:$0x75316420]
      %v924 = vld.sshfl [vmem:[#allocation1 + $0x18] sm:$0xff pattern:$0x75316420]
      %925 = vrot.lane.b32.xlu0 %v921, 18
      %v926 = vpop.permute.xlu0 %925
      %927 = vrot.lane.b32.xlu0 %v922, 18
      %v928 = vpop.permute.xlu0 %927
      %929 = vrot.lane.b32.xlu0 %v923, 18
      %v930 = vpop.permute.xlu0 %929
      %931 = vrot.lane.b32.xlu0 %v924, 18
      %v932 = vpop.permute.xlu0 %931
      %vm933 = vcmask 146432
      %v934 = vsel %vm933, %v926, %v928
      %v935 = vsel %vm933, %v928, %v930
      %v936 = vsel %vm933, %v930, %v932
      %v938 = vsel %vm484, %v915, 0
      %v940 = vsel %vm488, %v934, 0
      %v942 = vsel %vm488, %v935, 0
      %v944 = vsel %vm488, %v936, 0
      %946 = vmatpush.msra.mxu0 0.0
      %947 = vmatpush.msra.mxu0 0.0
      %948 = vmatpush.msra.mxu0 0.0
      %949 = vmatpush.msra.mxu0 0.0
      %950 = vmatpush.msra.mxu0 0.0
      %951 = vmatpush.msra.mxu0 0.0
      %952 = vmatpush.msra.mxu0 0.0
      %953 = vmatpush.msra.mxu0 0.0
      %954 = vmatpush.msra.mxu0 0.0
      %955 = vmatpush.msra.mxu0 0.0
      %956 = vmatpush.msra.mxu0 0.0
      %957 = vmatpush.msra.mxu0 0.0
      %958 = vmatpush.msra.mxu0 0.0
      %959 = vmatpush.msra.mxu0 0.0
      %960 = vmatpush.msra.mxu0 0.0
      %961 = vmatpush.msra.mxu0 %v940
      %962 = vmatmul.f32.gmra.mxu0 %v938
      %v963 = vpop.f32.mrf.mxu0
      %v964 = vadd.f32 0.0, %v963
      %965 = vdwg.mxu0
      %966 = vmatpush.msra.mxu0 0.0
      %967 = vmatpush.msra.mxu0 0.0
      %968 = vmatpush.msra.mxu0 0.0
      %969 = vmatpush.msra.mxu0 0.0
      %970 = vmatpush.msra.mxu0 0.0
      %971 = vmatpush.msra.mxu0 0.0
      %972 = vmatpush.msra.mxu0 0.0
      %973 = vmatpush.msra.mxu0 0.0
      %974 = vmatpush.msra.mxu0 0.0
      %975 = vmatpush.msra.mxu0 0.0
      %976 = vmatpush.msra.mxu0 0.0
      %977 = vmatpush.msra.mxu0 0.0
      %978 = vmatpush.msra.mxu0 0.0
      %979 = vmatpush.msra.mxu0 0.0
      %980 = vmatpush.msra.mxu0 0.0
      %981 = vmatpush.msra.mxu0 %v942
      %982 = vmatmul.f32.gmra.mxu0 %v938
      %v983 = vpop.f32.mrf.mxu0
      %v984 = vadd.f32 0.0, %v983
      %985 = vdwg.mxu0
      %986 = vmatpush.msra.mxu0 0.0
      %987 = vmatpush.msra.mxu0 0.0
      %988 = vmatpush.msra.mxu0 0.0
      %989 = vmatpush.msra.mxu0 0.0
      %990 = vmatpush.msra.mxu0 0.0
      %991 = vmatpush.msra.mxu0 0.0
      %992 = vmatpush.msra.mxu0 0.0
      %993 = vmatpush.msra.mxu0 0.0
      %994 = vmatpush.msra.mxu0 0.0
      %995 = vmatpush.msra.mxu0 0.0
      %996 = vmatpush.msra.mxu0 0.0
      %997 = vmatpush.msra.mxu0 0.0
      %998 = vmatpush.msra.mxu0 0.0
      %999 = vmatpush.msra.mxu0 0.0
      %1000 = vmatpush.msra.mxu0 0.0
      %1001 = vmatpush.msra.mxu0 %v944
      %1002 = vmatmul.f32.gmra.mxu0 %v938
      %v1003 = vpop.f32.mrf.mxu0
      %v1004 = vadd.f32 0.0, %v1003
      %1005 = vdwg.mxu0
      %1006 = vst [vmem:[#allocation1] ss:$2 sm:$0xff] %v909
      %s1007 = scalar_lea.vmem [#allocation1], 16
      %1008 = vst [vmem:[%s1007] ss:$2 sm:$0xff] %v910
      %v1009 = vld.sshfl [vmem:[#allocation1] sm:$0xff pattern:$0x75316420]
      %v1010 = vld.sshfl [vmem:[#allocation1 + $0x8] sm:$0xff pattern:$0x75316420]
      %v1011 = vld.sshfl [vmem:[#allocation1 + $0x10] sm:$0xff pattern:$0x75316420]
      %v1012 = vld.sshfl [vmem:[#allocation1 + $0x18] sm:$0xff pattern:$0x75316420]
      %1013 = vrot.lane.b32.xlu0 %v1009, 19
      %v1014 = vpop.permute.xlu0 %1013
      %1015 = vrot.lane.b32.xlu0 %v1010, 19
      %v1016 = vpop.permute.xlu0 %1015
      %1017 = vrot.lane.b32.xlu0 %v1011, 19
      %v1018 = vpop.permute.xlu0 %1017
      %1019 = vrot.lane.b32.xlu0 %v1012, 19
      %v1020 = vpop.permute.xlu0 %1019
      %vm1021 = vcmask 154624
      %v1022 = vsel %vm1021, %v1014, %v1016
      %v1023 = vsel %vm1021, %v1016, %v1018
      %v1024 = vsel %vm1021, %v1018, %v1020
      %v1026 = vsel %vm484, %v913, 0
      %v1028 = vsel %vm488, %v1022, 0
      %v1030 = vsel %vm488, %v1023, 0
      %v1032 = vsel %vm488, %v1024, 0
      %1034 = vmatpush.msra.mxu0 0.0
      %1035 = vmatpush.msra.mxu0 0.0
      %1036 = vmatpush.msra.mxu0 0.0
      %1037 = vmatpush.msra.mxu0 0.0
      %1038 = vmatpush.msra.mxu0 0.0
      %1039 = vmatpush.msra.mxu0 0.0
      %1040 = vmatpush.msra.mxu0 0.0
      %1041 = vmatpush.msra.mxu0 0.0
      %1042 = vmatpush.msra.mxu0 0.0
      %1043 = vmatpush.msra.mxu0 0.0
      %1044 = vmatpush.msra.mxu0 0.0
      %1045 = vmatpush.msra.mxu0 0.0
      %1046 = vmatpush.msra.mxu0 0.0
      %1047 = vmatpush.msra.mxu0 0.0
      %1048 = vmatpush.msra.mxu0 0.0
      %1049 = vmatpush.msra.mxu0 %v1028
      %1050 = vmatmul.f32.gmra.mxu0 %v1026
      %v1051 = vpop.f32.mrf.mxu0
      %v1052 = vadd.f32 %v964, %v1051
      %1053 = vdwg.mxu0
      %1054 = vmatpush.msra.mxu0 0.0
      %1055 = vmatpush.msra.mxu0 0.0
      %1056 = vmatpush.msra.mxu0 0.0
      %1057 = vmatpush.msra.mxu0 0.0
      %1058 = vmatpush.msra.mxu0 0.0
      %1059 = vmatpush.msra.mxu0 0.0
      %1060 = vmatpush.msra.mxu0 0.0
      %1061 = vmatpush.msra.mxu0 0.0
      %1062 = vmatpush.msra.mxu0 0.0
      %1063 = vmatpush.msra.mxu0 0.0
      %1064 = vmatpush.msra.mxu0 0.0
      %1065 = vmatpush.msra.mxu0 0.0
      %1066 = vmatpush.msra.mxu0 0.0
      %1067 = vmatpush.msra.mxu0 0.0
      %1068 = vmatpush.msra.mxu0 0.0
      %1069 = vmatpush.msra.mxu0 %v1030
      %1070 = vmatmul.f32.gmra.mxu0 %v1026
      %v1071 = vpop.f32.mrf.mxu0
      %v1072 = vadd.f32 %v984, %v1071
      %1073 = vdwg.mxu0
      %1074 = vmatpush.msra.mxu0 0.0
      %1075 = vmatpush.msra.mxu0 0.0
      %1076 = vmatpush.msra.mxu0 0.0
      %1077 = vmatpush.msra.mxu0 0.0
      %1078 = vmatpush.msra.mxu0 0.0
      %1079 = vmatpush.msra.mxu0 0.0
      %1080 = vmatpush.msra.mxu0 0.0
      %1081 = vmatpush.msra.mxu0 0.0
      %1082 = vmatpush.msra.mxu0 0.0
      %1083 = vmatpush.msra.mxu0 0.0
      %1084 = vmatpush.msra.mxu0 0.0
      %1085 = vmatpush.msra.mxu0 0.0
      %1086 = vmatpush.msra.mxu0 0.0
      %1087 = vmatpush.msra.mxu0 0.0
      %1088 = vmatpush.msra.mxu0 0.0
      %1089 = vmatpush.msra.mxu0 %v1032
      %1090 = vmatmul.f32.gmra.mxu0 %v1026
      %v1091 = vpop.f32.mrf.mxu0
      %v1092 = vadd.f32 %v1004, %v1091
      %1093 = vdwg.mxu0
      %s1094 = scalar_lea.vmem %s7, 8
      %v1095 = vld [vmem:[%s1094] sm:$0xf]
      %1096 = vst [vmem:[#allocation1] ss:$2 sm:$0xff] %v909
      %s1097 = scalar_lea.vmem [#allocation1], 16
      %1098 = vst [vmem:[%s1097] ss:$2 sm:$0xff] %v910
      %v1099 = vld.sshfl [vmem:[#allocation1] sm:$0xff pattern:$0x75316420]
      %v1100 = vld.sshfl [vmem:[#allocation1 + $0x8] sm:$0xff pattern:$0x75316420]
      %v1101 = vld.sshfl [vmem:[#allocation1 + $0x10] sm:$0xff pattern:$0x75316420]
      %v1102 = vld.sshfl [vmem:[#allocation1 + $0x18] sm:$0xff pattern:$0x75316420]
      %1103 = vrot.lane.b32.xlu0 %v1099, 17
      %v1104 = vpop.permute.xlu0 %1103
      %1105 = vrot.lane.b32.xlu0 %v1100, 17
      %v1106 = vpop.permute.xlu0 %1105
      %1107 = vrot.lane.b32.xlu0 %v1101, 17
      %v1108 = vpop.permute.xlu0 %1107
      %1109 = vrot.lane.b32.xlu0 %v1102, 17
      %v1110 = vpop.permute.xlu0 %1109
      %vm1111 = vcmask 138240
      %v1112 = vsel %vm1111, %v1104, %v1106
      %v1113 = vsel %vm1111, %v1106, %v1108
      %v1114 = vsel %vm1111, %v1108, %v1110
      %v1116 = vsel %vm484, %v1095, 0
      %v1118 = vsel %vm488, %v1112, 0
      %v1120 = vsel %vm488, %v1113, 0
      %v1122 = vsel %vm488, %v1114, 0
      %1124 = vmatpush.msra.mxu0 0.0
      %1125 = vmatpush.msra.mxu0 0.0
      %1126 = vmatpush.msra.mxu0 0.0
      %1127 = vmatpush.msra.mxu0 0.0
      %1128 = vmatpush.msra.mxu0 0.0
      %1129 = vmatpush.msra.mxu0 0.0
      %1130 = vmatpush.msra.mxu0 0.0
      %1131 = vmatpush.msra.mxu0 0.0
      %1132 = vmatpush.msra.mxu0 0.0
      %1133 = vmatpush.msra.mxu0 0.0
      %1134 = vmatpush.msra.mxu0 0.0
      %1135 = vmatpush.msra.mxu0 0.0
      %1136 = vmatpush.msra.mxu0 0.0
      %1137 = vmatpush.msra.mxu0 0.0
      %1138 = vmatpush.msra.mxu0 0.0
      %1139 = vmatpush.msra.mxu0 %v1118
      %1140 = vmatmul.f32.gmra.mxu0 %v1116
      %v1141 = vpop.f32.mrf.mxu0
      %v1142 = vadd.f32 0.0, %v1141
      %1143 = vdwg.mxu0
      %1144 = vmatpush.msra.mxu0 0.0
      %1145 = vmatpush.msra.mxu0 0.0
      %1146 = vmatpush.msra.mxu0 0.0
      %1147 = vmatpush.msra.mxu0 0.0
      %1148 = vmatpush.msra.mxu0 0.0
      %1149 = vmatpush.msra.mxu0 0.0
      %1150 = vmatpush.msra.mxu0 0.0
      %1151 = vmatpush.msra.mxu0 0.0
      %1152 = vmatpush.msra.mxu0 0.0
      %1153 = vmatpush.msra.mxu0 0.0
      %1154 = vmatpush.msra.mxu0 0.0
      %1155 = vmatpush.msra.mxu0 0.0
      %1156 = vmatpush.msra.mxu0 0.0
      %1157 = vmatpush.msra.mxu0 0.0
      %1158 = vmatpush.msra.mxu0 0.0
      %1159 = vmatpush.msra.mxu0 %v1120
      %1160 = vmatmul.f32.gmra.mxu0 %v1116
      %v1161 = vpop.f32.mrf.mxu0
      %v1162 = vadd.f32 0.0, %v1161
      %1163 = vdwg.mxu0
      %1164 = vmatpush.msra.mxu0 0.0
      %1165 = vmatpush.msra.mxu0 0.0
      %1166 = vmatpush.msra.mxu0 0.0
      %1167 = vmatpush.msra.mxu0 0.0
      %1168 = vmatpush.msra.mxu0 0.0
      %1169 = vmatpush.msra.mxu0 0.0
      %1170 = vmatpush.msra.mxu0 0.0
      %1171 = vmatpush.msra.mxu0 0.0
      %1172 = vmatpush.msra.mxu0 0.0
      %1173 = vmatpush.msra.mxu0 0.0
      %1174 = vmatpush.msra.mxu0 0.0
      %1175 = vmatpush.msra.mxu0 0.0
      %1176 = vmatpush.msra.mxu0 0.0
      %1177 = vmatpush.msra.mxu0 0.0
      %1178 = vmatpush.msra.mxu0 0.0
      %1179 = vmatpush.msra.mxu0 %v1122
      %1180 = vmatmul.f32.gmra.mxu0 %v1116
      %v1181 = vpop.f32.mrf.mxu0
      %v1182 = vadd.f32 0.0, %v1181
      %1183 = vdwg.mxu0
      %v1184 = vadd.f32 %v1052, %v1142
      %v1185 = vadd.f32 %v1072, %v1162
      %v1186 = vadd.f32 %v1092, %v1182
      %s1187 = scalar_lea.vmem %s7, 12
      %v1188 = vld [vmem:[%s1187] sm:$0xf]
      %1189 = vst [vmem:[#allocation1] ss:$2 sm:$0xff] %v909
      %s1190 = scalar_lea.vmem [#allocation1], 16
      %1191 = vst [vmem:[%s1190] ss:$2 sm:$0xff] %v910
      %v1192 = vld.sshfl [vmem:[#allocation1] sm:$0xff pattern:$0x75316420]
      %v1193 = vld.sshfl [vmem:[#allocation1 + $0x8] sm:$0xff pattern:$0x75316420]
      %v1194 = vld.sshfl [vmem:[#allocation1 + $0x10] sm:$0xff pattern:$0x75316420]
      %v1195 = vld.sshfl [vmem:[#allocation1 + $0x18] sm:$0xff pattern:$0x75316420]
      %1196 = vrot.lane.b32.xlu0 %v1192, 1
      %v1197 = vpop.permute.xlu0 %1196
      %1198 = vrot.lane.b32.xlu0 %v1193, 1
      %v1199 = vpop.permute.xlu0 %1198
      %1200 = vrot.lane.b32.xlu0 %v1194, 1
      %v1201 = vpop.permute.xlu0 %1200
      %1202 = vrot.lane.b32.xlu0 %v1195, 1
      %v1203 = vpop.permute.xlu0 %1202
      %vm1204 = vcmask 7168
      %v1205 = vsel %vm1204, %v1197, %v1199
      %v1206 = vsel %vm1204, %v1199, %v1201
      %v1207 = vsel %vm1204, %v1201, %v1203
      %v1209 = vsel %vm484, %v1188, 0
      %v1211 = vsel %vm488, %v1205, 0
      %v1213 = vsel %vm488, %v1206, 0
      %v1215 = vsel %vm488, %v1207, 0
      %1217 = vmatpush.msra.mxu0 0.0
      %1218 = vmatpush.msra.mxu0 0.0
      %1219 = vmatpush.msra.mxu0 0.0
      %1220 = vmatpush.msra.mxu0 0.0
      %1221 = vmatpush.msra.mxu0 0.0
      %1222 = vmatpush.msra.mxu0 0.0
      %1223 = vmatpush.msra.mxu0 0.0
      %1224 = vmatpush.msra.mxu0 0.0
      %1225 = vmatpush.msra.mxu0 0.0
      %1226 = vmatpush.msra.mxu0 0.0
      %1227 = vmatpush.msra.mxu0 0.0
      %1228 = vmatpush.msra.mxu0 0.0
      %1229 = vmatpush.msra.mxu0 0.0
      %1230 = vmatpush.msra.mxu0 0.0
      %1231 = vmatpush.msra.mxu0 0.0
      %1232 = vmatpush.msra.mxu0 %v1211
      %1233 = vmatmul.f32.gmra.mxu0 %v1209
      %v1234 = vpop.f32.mrf.mxu0
      %v1235 = vadd.f32 0.0, %v1234
      %1236 = vdwg.mxu0
      %1237 = vmatpush.msra.mxu0 0.0
      %1238 = vmatpush.msra.mxu0 0.0
      %1239 = vmatpush.msra.mxu0 0.0
      %1240 = vmatpush.msra.mxu0 0.0
      %1241 = vmatpush.msra.mxu0 0.0
      %1242 = vmatpush.msra.mxu0 0.0
      %1243 = vmatpush.msra.mxu0 0.0
      %1244 = vmatpush.msra.mxu0 0.0
      %1245 = vmatpush.msra.mxu0 0.0
      %1246 = vmatpush.msra.mxu0 0.0
      %1247 = vmatpush.msra.mxu0 0.0
      %1248 = vmatpush.msra.mxu0 0.0
      %1249 = vmatpush.msra.mxu0 0.0
      %1250 = vmatpush.msra.mxu0 0.0
      %1251 = vmatpush.msra.mxu0 0.0
      %1252 = vmatpush.msra.mxu0 %v1213
      %1253 = vmatmul.f32.gmra.mxu0 %v1209
      %v1254 = vpop.f32.mrf.mxu0
      %v1255 = vadd.f32 0.0, %v1254
      %1256 = vdwg.mxu0
      %1257 = vmatpush.msra.mxu0 0.0
      %1258 = vmatpush.msra.mxu0 0.0
      %1259 = vmatpush.msra.mxu0 0.0
      %1260 = vmatpush.msra.mxu0 0.0
      %1261 = vmatpush.msra.mxu0 0.0
      %1262 = vmatpush.msra.mxu0 0.0
      %1263 = vmatpush.msra.mxu0 0.0
      %1264 = vmatpush.msra.mxu0 0.0
      %1265 = vmatpush.msra.mxu0 0.0
      %1266 = vmatpush.msra.mxu0 0.0
      %1267 = vmatpush.msra.mxu0 0.0
      %1268 = vmatpush.msra.mxu0 0.0
      %1269 = vmatpush.msra.mxu0 0.0
      %1270 = vmatpush.msra.mxu0 0.0
      %1271 = vmatpush.msra.mxu0 0.0
      %1272 = vmatpush.msra.mxu0 %v1215
      %1273 = vmatmul.f32.gmra.mxu0 %v1209
      %v1274 = vpop.f32.mrf.mxu0
      %v1275 = vadd.f32 0.0, %v1274
      %1276 = vdwg.mxu0
      %v1277 = vadd.f32 %v1184, %v1235
      %v1278 = vadd.f32 %v1185, %v1255
      %v1279 = vadd.f32 %v1186, %v1275
      %s1280 = scalar_lea.vmem %s7, 16
      %v1281 = vld [vmem:[%s1280] sm:$0xf]
      %1282 = vst [vmem:[#allocation1] ss:$2 sm:$0xff] %v909
      %s1283 = scalar_lea.vmem [#allocation1], 16
      %1284 = vst [vmem:[%s1283] ss:$2 sm:$0xff] %v910
      %v1285 = vld.sshfl [vmem:[#allocation1 + $0x8] sm:$0xff pattern:$0x75316420]
      %v1286 = vld.sshfl [vmem:[#allocation1 + $0x10] sm:$0xff pattern:$0x75316420]
      %v1287 = vld.sshfl [vmem:[#allocation1 + $0x18] sm:$0xff pattern:$0x75316420]
      %v1289 = vsel %vm484, %v1281, 0
      %v1291 = vsel %vm488, %v1285, 0
      %v1293 = vsel %vm488, %v1286, 0
      %v1295 = vsel %vm488, %v1287, 0
      %1297 = vmatpush.msra.mxu0 0.0
      %1298 = vmatpush.msra.mxu0 0.0
      %1299 = vmatpush.msra.mxu0 0.0
      %1300 = vmatpush.msra.mxu0 0.0
      %1301 = vmatpush.msra.mxu0 0.0
      %1302 = vmatpush.msra.mxu0 0.0
      %1303 = vmatpush.msra.mxu0 0.0
      %1304 = vmatpush.msra.mxu0 0.0
      %1305 = vmatpush.msra.mxu0 0.0
      %1306 = vmatpush.msra.mxu0 0.0
      %1307 = vmatpush.msra.mxu0 0.0
      %1308 = vmatpush.msra.mxu0 0.0
      %1309 = vmatpush.msra.mxu0 0.0
      %1310 = vmatpush.msra.mxu0 0.0
      %1311 = vmatpush.msra.mxu0 0.0
      %1312 = vmatpush.msra.mxu0 %v1291
      %1313 = vmatmul.f32.gmra.mxu0 %v1289
      %v1314 = vpop.f32.mrf.mxu0
      %v1315 = vadd.f32 0.0, %v1314
      %1316 = vdwg.mxu0
      %1317 = vmatpush.msra.mxu0 0.0
      %1318 = vmatpush.msra.mxu0 0.0
      %1319 = vmatpush.msra.mxu0 0.0
      %1320 = vmatpush.msra.mxu0 0.0
      %1321 = vmatpush.msra.mxu0 0.0
      %1322 = vmatpush.msra.mxu0 0.0
      %1323 = vmatpush.msra.mxu0 0.0
      %1324 = vmatpush.msra.mxu0 0.0
      %1325 = vmatpush.msra.mxu0 0.0
      %1326 = vmatpush.msra.mxu0 0.0
      %1327 = vmatpush.msra.mxu0 0.0
      %1328 = vmatpush.msra.mxu0 0.0
      %1329 = vmatpush.msra.mxu0 0.0
      %1330 = vmatpush.msra.mxu0 0.0
      %1331 = vmatpush.msra.mxu0 0.0
      %1332 = vmatpush.msra.mxu0 %v1293
      %1333 = vmatmul.f32.gmra.mxu0 %v1289
      %v1334 = vpop.f32.mrf.mxu0
      %v1335 = vadd.f32 0.0, %v1334
      %1336 = vdwg.mxu0
      %1337 = vmatpush.msra.mxu0 0.0
      %1338 = vmatpush.msra.mxu0 0.0
      %1339 = vmatpush.msra.mxu0 0.0
      %1340 = vmatpush.msra.mxu0 0.0
      %1341 = vmatpush.msra.mxu0 0.0
      %1342 = vmatpush.msra.mxu0 0.0
      %1343 = vmatpush.msra.mxu0 0.0
      %1344 = vmatpush.msra.mxu0 0.0
      %1345 = vmatpush.msra.mxu0 0.0
      %1346 = vmatpush.msra.mxu0 0.0
      %1347 = vmatpush.msra.mxu0 0.0
      %1348 = vmatpush.msra.mxu0 0.0
      %1349 = vmatpush.msra.mxu0 0.0
      %1350 = vmatpush.msra.mxu0 0.0
      %1351 = vmatpush.msra.mxu0 0.0
      %1352 = vmatpush.msra.mxu0 %v1295
      %1353 = vmatmul.f32.gmra.mxu0 %v1289
      %v1354 = vpop.f32.mrf.mxu0
      %v1355 = vadd.f32 0.0, %v1354
      %1356 = vdwg.mxu0
      %v1357 = vadd.f32 %v1277, %v1315
      %v1358 = vadd.f32 %v1278, %v1335
      %v1359 = vadd.f32 %v1279, %v1355
      %s1360 = scalar_lea.vmem %s7, 20
      %v1361 = vld [vmem:[%s1360] sm:$0xf]
      %1363 = vst [vmem:[#allocation1] ss:$2 sm:$0xff] %v909
      %s1364 = scalar_lea.vmem [#allocation1], 16
      %1365 = vst [vmem:[%s1364] ss:$2 sm:$0xff] %v910
      %s1366 = scalar_lea.vmem [#allocation1], 32
      %1367 = vst [vmem:[%s1366] ss:$2 sm:$0xff] %v911
      %v1368 = vld.sshfl [vmem:[#allocation1 + $0x8] sm:$0xff pattern:$0x75316420]
      %v1369 = vld.sshfl [vmem:[#allocation1 + $0x10] sm:$0xff pattern:$0x75316420]
      %v1370 = vld.sshfl [vmem:[#allocation1 + $0x18] sm:$0xff pattern:$0x75316420]
      %v1371 = vld.sshfl [vmem:[#allocation1 + $0x20] sm:$0xff pattern:$0x75316420]
      %1372 = vrot.lane.b32.xlu0 %v1368, 127
      %v1373 = vpop.permute.xlu0 %1372
      %1374 = vrot.lane.b32.xlu0 %v1369, 127
      %v1375 = vpop.permute.xlu0 %1374
      %1376 = vrot.lane.b32.xlu0 %v1370, 127
      %v1377 = vpop.permute.xlu0 %1376
      %1378 = vrot.lane.b32.xlu0 %v1371, 127
      %v1379 = vpop.permute.xlu0 %1378
      %vm1380 = vcmask 1039360
      %v1381 = vsel %vm1380, %v1373, %v1375
      %v1382 = vsel %vm1380, %v1375, %v1377
      %v1383 = vsel %vm1380, %v1377, %v1379
      %v1385 = vsel %vm484, %v1361, 0
      %v1387 = vsel %vm488, %v1381, 0
      %v1389 = vsel %vm488, %v1382, 0
      %v1391 = vsel %vm488, %v1383, 0
      %1393 = vmatpush.msra.mxu0 0.0
      %1394 = vmatpush.msra.mxu0 0.0
      %1395 = vmatpush.msra.mxu0 0.0
      %1396 = vmatpush.msra.mxu0 0.0
      %1397 = vmatpush.msra.mxu0 0.0
      %1398 = vmatpush.msra.mxu0 0.0
      %1399 = vmatpush.msra.mxu0 0.0
      %1400 = vmatpush.msra.mxu0 0.0
      %1401 = vmatpush.msra.mxu0 0.0
      %1402 = vmatpush.msra.mxu0 0.0
      %1403 = vmatpush.msra.mxu0 0.0
      %1404 = vmatpush.msra.mxu0 0.0
      %1405 = vmatpush.msra.mxu0 0.0
      %1406 = vmatpush.msra.mxu0 0.0
      %1407 = vmatpush.msra.mxu0 0.0
      %1408 = vmatpush.msra.mxu0 %v1387
      %1409 = vmatmul.f32.gmra.mxu0 %v1385
      %v1410 = vpop.f32.mrf.mxu0
      %v1411 = vadd.f32 0.0, %v1410
      %1412 = vdwg.mxu0
      %1413 = vmatpush.msra.mxu0 0.0
      %1414 = vmatpush.msra.mxu0 0.0
      %1415 = vmatpush.msra.mxu0 0.0
      %1416 = vmatpush.msra.mxu0 0.0
      %1417 = vmatpush.msra.mxu0 0.0
      %1418 = vmatpush.msra.mxu0 0.0
      %1419 = vmatpush.msra.mxu0 0.0
      %1420 = vmatpush.msra.mxu0 0.0
      %1421 = vmatpush.msra.mxu0 0.0
      %1422 = vmatpush.msra.mxu0 0.0
      %1423 = vmatpush.msra.mxu0 0.0
      %1424 = vmatpush.msra.mxu0 0.0
      %1425 = vmatpush.msra.mxu0 0.0
      %1426 = vmatpush.msra.mxu0 0.0
      %1427 = vmatpush.msra.mxu0 0.0
      %1428 = vmatpush.msra.mxu0 %v1389
      %1429 = vmatmul.f32.gmra.mxu0 %v1385
      %v1430 = vpop.f32.mrf.mxu0
      %v1431 = vadd.f32 0.0, %v1430
      %1432 = vdwg.mxu0
      %1433 = vmatpush.msra.mxu0 0.0
      %1434 = vmatpush.msra.mxu0 0.0
      %1435 = vmatpush.msra.mxu0 0.0
      %1436 = vmatpush.msra.mxu0 0.0
      %1437 = vmatpush.msra.mxu0 0.0
      %1438 = vmatpush.msra.mxu0 0.0
      %1439 = vmatpush.msra.mxu0 0.0
      %1440 = vmatpush.msra.mxu0 0.0
      %1441 = vmatpush.msra.mxu0 0.0
      %1442 = vmatpush.msra.mxu0 0.0
      %1443 = vmatpush.msra.mxu0 0.0
      %1444 = vmatpush.msra.mxu0 0.0
      %1445 = vmatpush.msra.mxu0 0.0
      %1446 = vmatpush.msra.mxu0 0.0
      %1447 = vmatpush.msra.mxu0 0.0
      %1448 = vmatpush.msra.mxu0 %v1391
      %1449 = vmatmul.f32.gmra.mxu0 %v1385
      %v1450 = vpop.f32.mrf.mxu0
      %v1451 = vadd.f32 0.0, %v1450
      %1452 = vdwg.mxu0
      %v1453 = vadd.f32 %v1357, %v1411
      %v1454 = vadd.f32 %v1358, %v1431
      %v1455 = vadd.f32 %v1359, %v1451
      %s1456 = scalar_lea.vmem %s7, 24
      %v1457 = vld [vmem:[%s1456] sm:$0xf]
      %1458 = vst [vmem:[#allocation1] ss:$2 sm:$0xff] %v909
      %s1459 = scalar_lea.vmem [#allocation1], 16
      %1460 = vst [vmem:[%s1459] ss:$2 sm:$0xff] %v910
      %s1461 = scalar_lea.vmem [#allocation1], 32
      %1462 = vst [vmem:[%s1461] ss:$2 sm:$0xff] %v911
      %v1463 = vld.sshfl [vmem:[#allocation1 + $0x8] sm:$0xff pattern:$0x75316420]
      %v1464 = vld.sshfl [vmem:[#allocation1 + $0x10] sm:$0xff pattern:$0x75316420]
      %v1465 = vld.sshfl [vmem:[#allocation1 + $0x18] sm:$0xff pattern:$0x75316420]
      %v1466 = vld.sshfl [vmem:[#allocation1 + $0x20] sm:$0xff pattern:$0x75316420]
      %1467 = vrot.lane.b32.xlu0 %v1463, 111
      %v1468 = vpop.permute.xlu0 %1467
      %1469 = vrot.lane.b32.xlu0 %v1464, 111
      %v1470 = vpop.permute.xlu0 %1469
      %1471 = vrot.lane.b32.xlu0 %v1465, 111
      %v1472 = vpop.permute.xlu0 %1471
      %1473 = vrot.lane.b32.xlu0 %v1466, 111
      %v1474 = vpop.permute.xlu0 %1473
      %vm1475 = vcmask 908288
      %v1476 = vsel %vm1475, %v1468, %v1470
      %v1477 = vsel %vm1475, %v1470, %v1472
      %v1478 = vsel %vm1475, %v1472, %v1474
      %v1480 = vsel %vm484, %v1457, 0
      %v1482 = vsel %vm488, %v1476, 0
      %v1484 = vsel %vm488, %v1477, 0
      %v1486 = vsel %vm488, %v1478, 0
      %1488 = vmatpush.msra.mxu0 0.0
      %1489 = vmatpush.msra.mxu0 0.0
      %1490 = vmatpush.msra.mxu0 0.0
      %1491 = vmatpush.msra.mxu0 0.0
      %1492 = vmatpush.msra.mxu0 0.0
      %1493 = vmatpush.msra.mxu0 0.0
      %1494 = vmatpush.msra.mxu0 0.0
      %1495 = vmatpush.msra.mxu0 0.0
      %1496 = vmatpush.msra.mxu0 0.0
      %1497 = vmatpush.msra.mxu0 0.0
      %1498 = vmatpush.msra.mxu0 0.0
      %1499 = vmatpush.msra.mxu0 0.0
      %1500 = vmatpush.msra.mxu0 0.0
      %1501 = vmatpush.msra.mxu0 0.0
      %1502 = vmatpush.msra.mxu0 0.0
      %1503 = vmatpush.msra.mxu0 %v1482
      %1504 = vmatmul.f32.gmra.mxu0 %v1480
      %v1505 = vpop.f32.mrf.mxu0
      %v1506 = vadd.f32 0.0, %v1505
      %1507 = vdwg.mxu0
      %1508 = vmatpush.msra.mxu0 0.0
      %1509 = vmatpush.msra.mxu0 0.0
      %1510 = vmatpush.msra.mxu0 0.0
      %1511 = vmatpush.msra.mxu0 0.0
      %1512 = vmatpush.msra.mxu0 0.0
      %1513 = vmatpush.msra.mxu0 0.0
      %1514 = vmatpush.msra.mxu0 0.0
      %1515 = vmatpush.msra.mxu0 0.0
      %1516 = vmatpush.msra.mxu0 0.0
      %1517 = vmatpush.msra.mxu0 0.0
      %1518 = vmatpush.msra.mxu0 0.0
      %1519 = vmatpush.msra.mxu0 0.0
      %1520 = vmatpush.msra.mxu0 0.0
      %1521 = vmatpush.msra.mxu0 0.0
      %1522 = vmatpush.msra.mxu0 0.0
      %1523 = vmatpush.msra.mxu0 %v1484
      %1524 = vmatmul.f32.gmra.mxu0 %v1480
      %v1525 = vpop.f32.mrf.mxu0
      %v1526 = vadd.f32 0.0, %v1525
      %1527 = vdwg.mxu0
      %1528 = vmatpush.msra.mxu0 0.0
      %1529 = vmatpush.msra.mxu0 0.0
      %1530 = vmatpush.msra.mxu0 0.0
      %1531 = vmatpush.msra.mxu0 0.0
      %1532 = vmatpush.msra.mxu0 0.0
      %1533 = vmatpush.msra.mxu0 0.0
      %1534 = vmatpush.msra.mxu0 0.0
      %1535 = vmatpush.msra.mxu0 0.0
      %1536 = vmatpush.msra.mxu0 0.0
      %1537 = vmatpush.msra.mxu0 0.0
      %1538 = vmatpush.msra.mxu0 0.0
      %1539 = vmatpush.msra.mxu0 0.0
      %1540 = vmatpush.msra.mxu0 0.0
      %1541 = vmatpush.msra.mxu0 0.0
      %1542 = vmatpush.msra.mxu0 0.0
      %1543 = vmatpush.msra.mxu0 %v1486
      %1544 = vmatmul.f32.gmra.mxu0 %v1480
      %v1545 = vpop.f32.mrf.mxu0
      %v1546 = vadd.f32 0.0, %v1545
      %1547 = vdwg.mxu0
      %v1548 = vadd.f32 %v1453, %v1506
      %v1549 = vadd.f32 %v1454, %v1526
      %v1550 = vadd.f32 %v1455, %v1546
      %s1551 = scalar_lea.vmem %s7, 28
      %v1552 = vld [vmem:[%s1551] sm:$0xf]
      %1553 = vst [vmem:[#allocation1] ss:$2 sm:$0xff] %v909
      %s1554 = scalar_lea.vmem [#allocation1], 16
      %1555 = vst [vmem:[%s1554] ss:$2 sm:$0xff] %v910
      %s1556 = scalar_lea.vmem [#allocation1], 32
      %1557 = vst [vmem:[%s1556] ss:$2 sm:$0xff] %v911
      %v1558 = vld.sshfl [vmem:[#allocation1 + $0x8] sm:$0xff pattern:$0x75316420]
      %v1559 = vld.sshfl [vmem:[#allocation1 + $0x10] sm:$0xff pattern:$0x75316420]
      %v1560 = vld.sshfl [vmem:[#allocation1 + $0x18] sm:$0xff pattern:$0x75316420]
      %v1561 = vld.sshfl [vmem:[#allocation1 + $0x20] sm:$0xff pattern:$0x75316420]
      %1562 = vrot.lane.b32.xlu0 %v1558, 110
      %v1563 = vpop.permute.xlu0 %1562
      %1564 = vrot.lane.b32.xlu0 %v1559, 110
      %v1565 = vpop.permute.xlu0 %1564
      %1566 = vrot.lane.b32.xlu0 %v1560, 110
      %v1567 = vpop.permute.xlu0 %1566
      %1568 = vrot.lane.b32.xlu0 %v1561, 110
      %v1569 = vpop.permute.xlu0 %1568
      %vm1570 = vcmask 900096
      %v1571 = vsel %vm1570, %v1563, %v1565
      %v1572 = vsel %vm1570, %v1565, %v1567
      %v1573 = vsel %vm1570, %v1567, %v1569
      %v1575 = vsel %vm484, %v1552, 0
      %v1577 = vsel %vm488, %v1571, 0
      %v1579 = vsel %vm488, %v1572, 0
      %v1581 = vsel %vm488, %v1573, 0
      %1583 = vmatpush.msra.mxu0 0.0
      %1584 = vmatpush.msra.mxu0 0.0
      %1585 = vmatpush.msra.mxu0 0.0
      %1586 = vmatpush.msra.mxu0 0.0
      %1587 = vmatpush.msra.mxu0 0.0
      %1588 = vmatpush.msra.mxu0 0.0
      %1589 = vmatpush.msra.mxu0 0.0
      %1590 = vmatpush.msra.mxu0 0.0
      %1591 = vmatpush.msra.mxu0 0.0
      %1592 = vmatpush.msra.mxu0 0.0
      %1593 = vmatpush.msra.mxu0 0.0
      %1594 = vmatpush.msra.mxu0 0.0
      %1595 = vmatpush.msra.mxu0 0.0
      %1596 = vmatpush.msra.mxu0 0.0
      %1597 = vmatpush.msra.mxu0 0.0
      %1598 = vmatpush.msra.mxu0 %v1577
      %1599 = vmatmul.f32.gmra.mxu0 %v1575
      %v1600 = vpop.f32.mrf.mxu0
      %v1601 = vadd.f32 0.0, %v1600
      %1602 = vdwg.mxu0
      %1603 = vmatpush.msra.mxu0 0.0
      %1604 = vmatpush.msra.mxu0 0.0
      %1605 = vmatpush.msra.mxu0 0.0
      %1606 = vmatpush.msra.mxu0 0.0
      %1607 = vmatpush.msra.mxu0 0.0
      %1608 = vmatpush.msra.mxu0 0.0
      %1609 = vmatpush.msra.mxu0 0.0
      %1610 = vmatpush.msra.mxu0 0.0
      %1611 = vmatpush.msra.mxu0 0.0
      %1612 = vmatpush.msra.mxu0 0.0
      %1613 = vmatpush.msra.mxu0 0.0
      %1614 = vmatpush.msra.mxu0 0.0
      %1615 = vmatpush.msra.mxu0 0.0
      %1616 = vmatpush.msra.mxu0 0.0
      %1617 = vmatpush.msra.mxu0 0.0
      %1618 = vmatpush.msra.mxu0 %v1579
      %1619 = vmatmul.f32.gmra.mxu0 %v1575
      %v1620 = vpop.f32.mrf.mxu0
      %v1621 = vadd.f32 0.0, %v1620
      %1622 = vdwg.mxu0
      %1623 = vmatpush.msra.mxu0 0.0
      %1624 = vmatpush.msra.mxu0 0.0
      %1625 = vmatpush.msra.mxu0 0.0
      %1626 = vmatpush.msra.mxu0 0.0
      %1627 = vmatpush.msra.mxu0 0.0
      %1628 = vmatpush.msra.mxu0 0.0
      %1629 = vmatpush.msra.mxu0 0.0
      %1630 = vmatpush.msra.mxu0 0.0
      %1631 = vmatpush.msra.mxu0 0.0
      %1632 = vmatpush.msra.mxu0 0.0
      %1633 = vmatpush.msra.mxu0 0.0
      %1634 = vmatpush.msra.mxu0 0.0
      %1635 = vmatpush.msra.mxu0 0.0
      %1636 = vmatpush.msra.mxu0 0.0
      %1637 = vmatpush.msra.mxu0 0.0
      %1638 = vmatpush.msra.mxu0 %v1581
      %1639 = vmatmul.f32.gmra.mxu0 %v1575
      %v1640 = vpop.f32.mrf.mxu0
      %v1641 = vadd.f32 0.0, %v1640
      %1642 = vdwg.mxu0
      %v1643 = vadd.f32 %v1548, %v1601
      %v1644 = vadd.f32 %v1549, %v1621
      %v1645 = vadd.f32 %v1550, %v1641
      %s1646 = scalar_lea.vmem %s7, 32
      %v1647 = vld [vmem:[%s1646] sm:$0xf]
      %1648 = vst [vmem:[#allocation1] ss:$2 sm:$0xff] %v909
      %s1649 = scalar_lea.vmem [#allocation1], 16
      %1650 = vst [vmem:[%s1649] ss:$2 sm:$0xff] %v910
      %s1651 = scalar_lea.vmem [#allocation1], 32
      %1652 = vst [vmem:[%s1651] ss:$2 sm:$0xff] %v911
      %v1653 = vld.sshfl [vmem:[#allocation1 + $0x8] sm:$0xff pattern:$0x75316420]
      %v1654 = vld.sshfl [vmem:[#allocation1 + $0x10] sm:$0xff pattern:$0x75316420]
      %v1655 = vld.sshfl [vmem:[#allocation1 + $0x18] sm:$0xff pattern:$0x75316420]
      %v1656 = vld.sshfl [vmem:[#allocation1 + $0x20] sm:$0xff pattern:$0x75316420]
      %1657 = vrot.lane.b32.xlu0 %v1653, 109
      %v1658 = vpop.permute.xlu0 %1657
      %1659 = vrot.lane.b32.xlu0 %v1654, 109
      %v1660 = vpop.permute.xlu0 %1659
      %1661 = vrot.lane.b32.xlu0 %v1655, 109
      %v1662 = vpop.permute.xlu0 %1661
      %1663 = vrot.lane.b32.xlu0 %v1656, 109
      %v1664 = vpop.permute.xlu0 %1663
      %vm1665 = vcmask 891904
      %v1666 = vsel %vm1665, %v1658, %v1660
      %v1667 = vsel %vm1665, %v1660, %v1662
      %v1668 = vsel %vm1665, %v1662, %v1664
      %v1670 = vsel %vm484, %v1647, 0
      %v1672 = vsel %vm488, %v1666, 0
      %v1674 = vsel %vm488, %v1667, 0
      %v1676 = vsel %vm488, %v1668, 0
      %1678 = vmatpush.msra.mxu0 0.0
      %1679 = vmatpush.msra.mxu0 0.0
      %1680 = vmatpush.msra.mxu0 0.0
      %1681 = vmatpush.msra.mxu0 0.0
      %1682 = vmatpush.msra.mxu0 0.0
      %1683 = vmatpush.msra.mxu0 0.0
      %1684 = vmatpush.msra.mxu0 0.0
      %1685 = vmatpush.msra.mxu0 0.0
      %1686 = vmatpush.msra.mxu0 0.0
      %1687 = vmatpush.msra.mxu0 0.0
      %1688 = vmatpush.msra.mxu0 0.0
      %1689 = vmatpush.msra.mxu0 0.0
      %1690 = vmatpush.msra.mxu0 0.0
      %1691 = vmatpush.msra.mxu0 0.0
      %1692 = vmatpush.msra.mxu0 0.0
      %1693 = vmatpush.msra.mxu0 %v1672
      %1694 = vmatmul.f32.gmra.mxu0 %v1670
      %v1695 = vpop.f32.mrf.mxu0
      %v1696 = vadd.f32 0.0, %v1695
      %1697 = vdwg.mxu0
      %1698 = vmatpush.msra.mxu0 0.0
      %1699 = vmatpush.msra.mxu0 0.0
      %1700 = vmatpush.msra.mxu0 0.0
      %1701 = vmatpush.msra.mxu0 0.0
      %1702 = vmatpush.msra.mxu0 0.0
      %1703 = vmatpush.msra.mxu0 0.0
      %1704 = vmatpush.msra.mxu0 0.0
      %1705 = vmatpush.msra.mxu0 0.0
      %1706 = vmatpush.msra.mxu0 0.0
      %1707 = vmatpush.msra.mxu0 0.0
      %1708 = vmatpush.msra.mxu0 0.0
      %1709 = vmatpush.msra.mxu0 0.0
      %1710 = vmatpush.msra.mxu0 0.0
      %1711 = vmatpush.msra.mxu0 0.0
      %1712 = vmatpush.msra.mxu0 0.0
      %1713 = vmatpush.msra.mxu0 %v1674
      %1714 = vmatmul.f32.gmra.mxu0 %v1670
      %v1715 = vpop.f32.mrf.mxu0
      %v1716 = vadd.f32 0.0, %v1715
      %1717 = vdwg.mxu0
      %1718 = vmatpush.msra.mxu0 0.0
      %1719 = vmatpush.msra.mxu0 0.0
      %1720 = vmatpush.msra.mxu0 0.0
      %1721 = vmatpush.msra.mxu0 0.0
      %1722 = vmatpush.msra.mxu0 0.0
      %1723 = vmatpush.msra.mxu0 0.0
      %1724 = vmatpush.msra.mxu0 0.0
      %1725 = vmatpush.msra.mxu0 0.0
      %1726 = vmatpush.msra.mxu0 0.0
      %1727 = vmatpush.msra.mxu0 0.0
      %1728 = vmatpush.msra.mxu0 0.0
      %1729 = vmatpush.msra.mxu0 0.0
      %1730 = vmatpush.msra.mxu0 0.0
      %1731 = vmatpush.msra.mxu0 0.0
      %1732 = vmatpush.msra.mxu0 0.0
      %1733 = vmatpush.msra.mxu0 %v1676
      %1734 = vmatmul.f32.gmra.mxu0 %v1670
      %v1735 = vpop.f32.mrf.mxu0
      %v1736 = vadd.f32 0.0, %v1735
      %1737 = vdwg.mxu0
      %v1738 = vadd.f32 %v1643, %v1696
      %v1739 = vadd.f32 %v1644, %v1716
      %v1740 = vadd.f32 %v1645, %v1736
      %v1741 = vld [vmem:[%s8] sm:$0xf]
      %1742 = vst [vmem:[#allocation1] ss:$2 sm:$0xff] %v466
      %s1743 = scalar_lea.vmem [#allocation1], 16
      %1744 = vst [vmem:[%s1743] ss:$2 sm:$0xff] %v467
      %v1745 = vld.sshfl [vmem:[#allocation1] sm:$0xff pattern:$0x75316420]
      %v1746 = vld.sshfl [vmem:[#allocation1 + $0x8] sm:$0xff pattern:$0x75316420]
      %v1747 = vld.sshfl [vmem:[#allocation1 + $0x10] sm:$0xff pattern:$0x75316420]
      %v1748 = vld.sshfl [vmem:[#allocation1 + $0x18] sm:$0xff pattern:$0x75316420]
      %1749 = vrot.lane.b32.xlu0 %v1745, 19
      %v1750 = vpop.permute.xlu0 %1749
      %1751 = vrot.lane.b32.xlu0 %v1746, 19
      %v1752 = vpop.permute.xlu0 %1751
      %1753 = vrot.lane.b32.xlu0 %v1747, 19
      %v1754 = vpop.permute.xlu0 %1753
      %1755 = vrot.lane.b32.xlu0 %v1748, 19
      %v1756 = vpop.permute.xlu0 %1755
      %v1757 = vsel %vm1021, %v1750, %v1752
      %v1758 = vsel %vm1021, %v1752, %v1754
      %v1759 = vsel %vm1021, %v1754, %v1756
      %v1761 = vsel %vm484, %v1741, 0
      %v1763 = vsel %vm488, %v1757, 0
      %v1765 = vsel %vm488, %v1758, 0
      %v1767 = vsel %vm488, %v1759, 0
      %1769 = vmatpush.msra.mxu0 0.0
      %1770 = vmatpush.msra.mxu0 0.0
      %1771 = vmatpush.msra.mxu0 0.0
      %1772 = vmatpush.msra.mxu0 0.0
      %1773 = vmatpush.msra.mxu0 0.0
      %1774 = vmatpush.msra.mxu0 0.0
      %1775 = vmatpush.msra.mxu0 0.0
      %1776 = vmatpush.msra.mxu0 0.0
      %1777 = vmatpush.msra.mxu0 0.0
      %1778 = vmatpush.msra.mxu0 0.0
      %1779 = vmatpush.msra.mxu0 0.0
      %1780 = vmatpush.msra.mxu0 0.0
      %1781 = vmatpush.msra.mxu0 0.0
      %1782 = vmatpush.msra.mxu0 0.0
      %1783 = vmatpush.msra.mxu0 0.0
      %1784 = vmatpush.msra.mxu0 %v1763
      %1785 = vmatmul.f32.gmra.mxu0 %v1761
      %v1786 = vpop.f32.mrf.mxu0
      %v1787 = vadd.f32 0.0, %v1786
      %1788 = vdwg.mxu0
      %1789 = vmatpush.msra.mxu0 0.0
      %1790 = vmatpush.msra.mxu0 0.0
      %1791 = vmatpush.msra.mxu0 0.0
      %1792 = vmatpush.msra.mxu0 0.0
      %1793 = vmatpush.msra.mxu0 0.0
      %1794 = vmatpush.msra.mxu0 0.0
      %1795 = vmatpush.msra.mxu0 0.0
      %1796 = vmatpush.msra.mxu0 0.0
      %1797 = vmatpush.msra.mxu0 0.0
      %1798 = vmatpush.msra.mxu0 0.0
      %1799 = vmatpush.msra.mxu0 0.0
      %1800 = vmatpush.msra.mxu0 0.0
      %1801 = vmatpush.msra.mxu0 0.0
      %1802 = vmatpush.msra.mxu0 0.0
      %1803 = vmatpush.msra.mxu0 0.0
      %1804 = vmatpush.msra.mxu0 %v1765
      %1805 = vmatmul.f32.gmra.mxu0 %v1761
      %v1806 = vpop.f32.mrf.mxu0
      %v1807 = vadd.f32 0.0, %v1806
      %1808 = vdwg.mxu0
      %1809 = vmatpush.msra.mxu0 0.0
      %1810 = vmatpush.msra.mxu0 0.0
      %1811 = vmatpush.msra.mxu0 0.0
      %1812 = vmatpush.msra.mxu0 0.0
      %1813 = vmatpush.msra.mxu0 0.0
      %1814 = vmatpush.msra.mxu0 0.0
      %1815 = vmatpush.msra.mxu0 0.0
      %1816 = vmatpush.msra.mxu0 0.0
      %1817 = vmatpush.msra.mxu0 0.0
      %1818 = vmatpush.msra.mxu0 0.0
      %1819 = vmatpush.msra.mxu0 0.0
      %1820 = vmatpush.msra.mxu0 0.0
      %1821 = vmatpush.msra.mxu0 0.0
      %1822 = vmatpush.msra.mxu0 0.0
      %1823 = vmatpush.msra.mxu0 0.0
      %1824 = vmatpush.msra.mxu0 %v1767
      %1825 = vmatmul.f32.gmra.mxu0 %v1761
      %v1826 = vpop.f32.mrf.mxu0
      %v1827 = vadd.f32 0.0, %v1826
      %1828 = vdwg.mxu0
      %v1829 = vadd.f32 %v1738, %v1787
      %v1830 = vadd.f32 %v1739, %v1807
      %v1831 = vadd.f32 %v1740, %v1827
      %s1832 = scalar_lea.vmem %s8, 4
      %v1833 = vld [vmem:[%s1832] sm:$0xf]
      %1834 = vst [vmem:[#allocation1] ss:$2 sm:$0xff] %v466
      %s1835 = scalar_lea.vmem [#allocation1], 16
      %1836 = vst [vmem:[%s1835] ss:$2 sm:$0xff] %v467
      %v1837 = vld.sshfl [vmem:[#allocation1] sm:$0xff pattern:$0x75316420]
      %v1838 = vld.sshfl [vmem:[#allocation1 + $0x8] sm:$0xff pattern:$0x75316420]
      %v1839 = vld.sshfl [vmem:[#allocation1 + $0x10] sm:$0xff pattern:$0x75316420]
      %v1840 = vld.sshfl [vmem:[#allocation1 + $0x18] sm:$0xff pattern:$0x75316420]
      %1841 = vrot.lane.b32.xlu0 %v1837, 18
      %v1842 = vpop.permute.xlu0 %1841
      %1843 = vrot.lane.b32.xlu0 %v1838, 18
      %v1844 = vpop.permute.xlu0 %1843
      %1845 = vrot.lane.b32.xlu0 %v1839, 18
      %v1846 = vpop.permute.xlu0 %1845
      %1847 = vrot.lane.b32.xlu0 %v1840, 18
      %v1848 = vpop.permute.xlu0 %1847
      %v1849 = vsel %vm933, %v1842, %v1844
      %v1850 = vsel %vm933, %v1844, %v1846
      %v1851 = vsel %vm933, %v1846, %v1848
      %v1853 = vsel %vm484, %v1833, 0
      %v1855 = vsel %vm488, %v1849, 0
      %v1857 = vsel %vm488, %v1850, 0
      %v1859 = vsel %vm488, %v1851, 0
      %1861 = vmatpush.msra.mxu0 0.0
      %1862 = vmatpush.msra.mxu0 0.0
      %1863 = vmatpush.msra.mxu0 0.0
      %1864 = vmatpush.msra.mxu0 0.0
      %1865 = vmatpush.msra.mxu0 0.0
      %1866 = vmatpush.msra.mxu0 0.0
      %1867 = vmatpush.msra.mxu0 0.0
      %1868 = vmatpush.msra.mxu0 0.0
      %1869 = vmatpush.msra.mxu0 0.0
      %1870 = vmatpush.msra.mxu0 0.0
      %1871 = vmatpush.msra.mxu0 0.0
      %1872 = vmatpush.msra.mxu0 0.0
      %1873 = vmatpush.msra.mxu0 0.0
      %1874 = vmatpush.msra.mxu0 0.0
      %1875 = vmatpush.msra.mxu0 0.0
      %1876 = vmatpush.msra.mxu0 %v1855
      %1877 = vmatmul.f32.gmra.mxu0 %v1853
      %v1878 = vpop.f32.mrf.mxu0
      %v1879 = vadd.f32 0.0, %v1878
      %1880 = vdwg.mxu0
      %1881 = vmatpush.msra.mxu0 0.0
      %1882 = vmatpush.msra.mxu0 0.0
      %1883 = vmatpush.msra.mxu0 0.0
      %1884 = vmatpush.msra.mxu0 0.0
      %1885 = vmatpush.msra.mxu0 0.0
      %1886 = vmatpush.msra.mxu0 0.0
      %1887 = vmatpush.msra.mxu0 0.0
      %1888 = vmatpush.msra.mxu0 0.0
      %1889 = vmatpush.msra.mxu0 0.0
      %1890 = vmatpush.msra.mxu0 0.0
      %1891 = vmatpush.msra.mxu0 0.0
      %1892 = vmatpush.msra.mxu0 0.0
      %1893 = vmatpush.msra.mxu0 0.0
      %1894 = vmatpush.msra.mxu0 0.0
      %1895 = vmatpush.msra.mxu0 0.0
      %1896 = vmatpush.msra.mxu0 %v1857
      %1897 = vmatmul.f32.gmra.mxu0 %v1853
      %v1898 = vpop.f32.mrf.mxu0
      %v1899 = vadd.f32 0.0, %v1898
      %1900 = vdwg.mxu0
      %1901 = vmatpush.msra.mxu0 0.0
      %1902 = vmatpush.msra.mxu0 0.0
      %1903 = vmatpush.msra.mxu0 0.0
      %1904 = vmatpush.msra.mxu0 0.0
      %1905 = vmatpush.msra.mxu0 0.0
      %1906 = vmatpush.msra.mxu0 0.0
      %1907 = vmatpush.msra.mxu0 0.0
      %1908 = vmatpush.msra.mxu0 0.0
      %1909 = vmatpush.msra.mxu0 0.0
      %1910 = vmatpush.msra.mxu0 0.0
      %1911 = vmatpush.msra.mxu0 0.0
      %1912 = vmatpush.msra.mxu0 0.0
      %1913 = vmatpush.msra.mxu0 0.0
      %1914 = vmatpush.msra.mxu0 0.0
      %1915 = vmatpush.msra.mxu0 0.0
      %1916 = vmatpush.msra.mxu0 %v1859
      %1917 = vmatmul.f32.gmra.mxu0 %v1853
      %v1918 = vpop.f32.mrf.mxu0
      %v1919 = vadd.f32 0.0, %v1918
      %1920 = vdwg.mxu0
      %v1921 = vadd.f32 %v1829, %v1879
      %v1922 = vadd.f32 %v1830, %v1899
      %v1923 = vadd.f32 %v1831, %v1919
      %s1924 = scalar_lea.vmem %s8, 8
      %v1925 = vld [vmem:[%s1924] sm:$0xf]
      %1926 = vst [vmem:[#allocation1] ss:$2 sm:$0xff] %v466
      %s1927 = scalar_lea.vmem [#allocation1], 16
      %1928 = vst [vmem:[%s1927] ss:$2 sm:$0xff] %v467
      %v1929 = vld.sshfl [vmem:[#allocation1] sm:$0xff pattern:$0x75316420]
      %v1930 = vld.sshfl [vmem:[#allocation1 + $0x8] sm:$0xff pattern:$0x75316420]
      %v1931 = vld.sshfl [vmem:[#allocation1 + $0x10] sm:$0xff pattern:$0x75316420]
      %v1932 = vld.sshfl [vmem:[#allocation1 + $0x18] sm:$0xff pattern:$0x75316420]
      %1933 = vrot.lane.b32.xlu0 %v1929, 17
      %v1934 = vpop.permute.xlu0 %1933
      %1935 = vrot.lane.b32.xlu0 %v1930, 17
      %v1936 = vpop.permute.xlu0 %1935
      %1937 = vrot.lane.b32.xlu0 %v1931, 17
      %v1938 = vpop.permute.xlu0 %1937
      %1939 = vrot.lane.b32.xlu0 %v1932, 17
      %v1940 = vpop.permute.xlu0 %1939
      %v1941 = vsel %vm1111, %v1934, %v1936
      %v1942 = vsel %vm1111, %v1936, %v1938
      %v1943 = vsel %vm1111, %v1938, %v1940
      %v1945 = vsel %vm484, %v1925, 0
      %v1947 = vsel %vm488, %v1941, 0
      %v1949 = vsel %vm488, %v1942, 0
      %v1951 = vsel %vm488, %v1943, 0
      %1953 = vmatpush.msra.mxu0 0.0
      %1954 = vmatpush.msra.mxu0 0.0
      %1955 = vmatpush.msra.mxu0 0.0
      %1956 = vmatpush.msra.mxu0 0.0
      %1957 = vmatpush.msra.mxu0 0.0
      %1958 = vmatpush.msra.mxu0 0.0
      %1959 = vmatpush.msra.mxu0 0.0
      %1960 = vmatpush.msra.mxu0 0.0
      %1961 = vmatpush.msra.mxu0 0.0
      %1962 = vmatpush.msra.mxu0 0.0
      %1963 = vmatpush.msra.mxu0 0.0
      %1964 = vmatpush.msra.mxu0 0.0
      %1965 = vmatpush.msra.mxu0 0.0
      %1966 = vmatpush.msra.mxu0 0.0
      %1967 = vmatpush.msra.mxu0 0.0
      %1968 = vmatpush.msra.mxu0 %v1947
      %1969 = vmatmul.f32.gmra.mxu0 %v1945
      %v1970 = vpop.f32.mrf.mxu0
      %v1971 = vadd.f32 0.0, %v1970
      %1972 = vdwg.mxu0
      %1973 = vmatpush.msra.mxu0 0.0
      %1974 = vmatpush.msra.mxu0 0.0
      %1975 = vmatpush.msra.mxu0 0.0
      %1976 = vmatpush.msra.mxu0 0.0
      %1977 = vmatpush.msra.mxu0 0.0
      %1978 = vmatpush.msra.mxu0 0.0
      %1979 = vmatpush.msra.mxu0 0.0
      %1980 = vmatpush.msra.mxu0 0.0
      %1981 = vmatpush.msra.mxu0 0.0
      %1982 = vmatpush.msra.mxu0 0.0
      %1983 = vmatpush.msra.mxu0 0.0
      %1984 = vmatpush.msra.mxu0 0.0
      %1985 = vmatpush.msra.mxu0 0.0
      %1986 = vmatpush.msra.mxu0 0.0
      %1987 = vmatpush.msra.mxu0 0.0
      %1988 = vmatpush.msra.mxu0 %v1949
      %1989 = vmatmul.f32.gmra.mxu0 %v1945
      %v1990 = vpop.f32.mrf.mxu0
      %v1991 = vadd.f32 0.0, %v1990
      %1992 = vdwg.mxu0
      %1993 = vmatpush.msra.mxu0 0.0
      %1994 = vmatpush.msra.mxu0 0.0
      %1995 = vmatpush.msra.mxu0 0.0
      %1996 = vmatpush.msra.mxu0 0.0
      %1997 = vmatpush.msra.mxu0 0.0
      %1998 = vmatpush.msra.mxu0 0.0
      %1999 = vmatpush.msra.mxu0 0.0
      %2000 = vmatpush.msra.mxu0 0.0
      %2001 = vmatpush.msra.mxu0 0.0
      %2002 = vmatpush.msra.mxu0 0.0
      %2003 = vmatpush.msra.mxu0 0.0
      %2004 = vmatpush.msra.mxu0 0.0
      %2005 = vmatpush.msra.mxu0 0.0
      %2006 = vmatpush.msra.mxu0 0.0
      %2007 = vmatpush.msra.mxu0 0.0
      %2008 = vmatpush.msra.mxu0 %v1951
      %2009 = vmatmul.f32.gmra.mxu0 %v1945
      %v2010 = vpop.f32.mrf.mxu0
      %v2011 = vadd.f32 0.0, %v2010
      %2012 = vdwg.mxu0
      %v2013 = vadd.f32 %v1921, %v1971
      %v2014 = vadd.f32 %v1922, %v1991
      %v2015 = vadd.f32 %v1923, %v2011
      %s2016 = scalar_lea.vmem %s8, 12
      %v2017 = vld [vmem:[%s2016] sm:$0xf]
      %2018 = vst [vmem:[#allocation1] ss:$2 sm:$0xff] %v466
      %s2019 = scalar_lea.vmem [#allocation1], 16
      %2020 = vst [vmem:[%s2019] ss:$2 sm:$0xff] %v467
      %v2021 = vld.sshfl [vmem:[#allocation1] sm:$0xff pattern:$0x75316420]
      %v2022 = vld.sshfl [vmem:[#allocation1 + $0x8] sm:$0xff pattern:$0x75316420]
      %v2023 = vld.sshfl [vmem:[#allocation1 + $0x10] sm:$0xff pattern:$0x75316420]
      %v2024 = vld.sshfl [vmem:[#allocation1 + $0x18] sm:$0xff pattern:$0x75316420]
      %2025 = vrot.lane.b32.xlu0 %v2021, 1
      %v2026 = vpop.permute.xlu0 %2025
      %2027 = vrot.lane.b32.xlu0 %v2022, 1
      %v2028 = vpop.permute.xlu0 %2027
      %2029 = vrot.lane.b32.xlu0 %v2023, 1
      %v2030 = vpop.permute.xlu0 %2029
      %2031 = vrot.lane.b32.xlu0 %v2024, 1
      %v2032 = vpop.permute.xlu0 %2031
      %v2033 = vsel %vm1204, %v2026, %v2028
      %v2034 = vsel %vm1204, %v2028, %v2030
      %v2035 = vsel %vm1204, %v2030, %v2032
      %v2037 = vsel %vm484, %v2017, 0
      %v2039 = vsel %vm488, %v2033, 0
      %v2041 = vsel %vm488, %v2034, 0
      %v2043 = vsel %vm488, %v2035, 0
      %2045 = vmatpush.msra.mxu0 0.0
      %2046 = vmatpush.msra.mxu0 0.0
      %2047 = vmatpush.msra.mxu0 0.0
      %2048 = vmatpush.msra.mxu0 0.0
      %2049 = vmatpush.msra.mxu0 0.0
      %2050 = vmatpush.msra.mxu0 0.0
      %2051 = vmatpush.msra.mxu0 0.0
      %2052 = vmatpush.msra.mxu0 0.0
      %2053 = vmatpush.msra.mxu0 0.0
      %2054 = vmatpush.msra.mxu0 0.0
      %2055 = vmatpush.msra.mxu0 0.0
      %2056 = vmatpush.msra.mxu0 0.0
      %2057 = vmatpush.msra.mxu0 0.0
      %2058 = vmatpush.msra.mxu0 0.0
      %2059 = vmatpush.msra.mxu0 0.0
      %2060 = vmatpush.msra.mxu0 %v2039
      %2061 = vmatmul.f32.gmra.mxu0 %v2037
      %v2062 = vpop.f32.mrf.mxu0
      %v2063 = vadd.f32 0.0, %v2062
      %2064 = vdwg.mxu0
      %2065 = vmatpush.msra.mxu0 0.0
      %2066 = vmatpush.msra.mxu0 0.0
      %2067 = vmatpush.msra.mxu0 0.0
      %2068 = vmatpush.msra.mxu0 0.0
      %2069 = vmatpush.msra.mxu0 0.0
      %2070 = vmatpush.msra.mxu0 0.0
      %2071 = vmatpush.msra.mxu0 0.0
      %2072 = vmatpush.msra.mxu0 0.0
      %2073 = vmatpush.msra.mxu0 0.0
      %2074 = vmatpush.msra.mxu0 0.0
      %2075 = vmatpush.msra.mxu0 0.0
      %2076 = vmatpush.msra.mxu0 0.0
      %2077 = vmatpush.msra.mxu0 0.0
      %2078 = vmatpush.msra.mxu0 0.0
      %2079 = vmatpush.msra.mxu0 0.0
      %2080 = vmatpush.msra.mxu0 %v2041
      %2081 = vmatmul.f32.gmra.mxu0 %v2037
      %v2082 = vpop.f32.mrf.mxu0
      %v2083 = vadd.f32 0.0, %v2082
      %2084 = vdwg.mxu0
      %2085 = vmatpush.msra.mxu0 0.0
      %2086 = vmatpush.msra.mxu0 0.0
      %2087 = vmatpush.msra.mxu0 0.0
      %2088 = vmatpush.msra.mxu0 0.0
      %2089 = vmatpush.msra.mxu0 0.0
      %2090 = vmatpush.msra.mxu0 0.0
      %2091 = vmatpush.msra.mxu0 0.0
      %2092 = vmatpush.msra.mxu0 0.0
      %2093 = vmatpush.msra.mxu0 0.0
      %2094 = vmatpush.msra.mxu0 0.0
      %2095 = vmatpush.msra.mxu0 0.0
      %2096 = vmatpush.msra.mxu0 0.0
      %2097 = vmatpush.msra.mxu0 0.0
      %2098 = vmatpush.msra.mxu0 0.0
      %2099 = vmatpush.msra.mxu0 0.0
      %2100 = vmatpush.msra.mxu0 %v2043
      %2101 = vmatmul.f32.gmra.mxu0 %v2037
      %v2102 = vpop.f32.mrf.mxu0
      %v2103 = vadd.f32 0.0, %v2102
      %2104 = vdwg.mxu0
      %v2105 = vadd.f32 %v2013, %v2063
      %v2106 = vadd.f32 %v2014, %v2083
      %v2107 = vadd.f32 %v2015, %v2103
      %s2108 = scalar_lea.vmem %s8, 16
      %v2109 = vld [vmem:[%s2108] sm:$0xf]
      %2110 = vst [vmem:[#allocation1] ss:$2 sm:$0xff] %v466
      %s2111 = scalar_lea.vmem [#allocation1], 16
      %2112 = vst [vmem:[%s2111] ss:$2 sm:$0xff] %v467
      %v2113 = vld.sshfl [vmem:[#allocation1 + $0x8] sm:$0xff pattern:$0x75316420]
      %v2114 = vld.sshfl [vmem:[#allocation1 + $0x10] sm:$0xff pattern:$0x75316420]
      %v2115 = vld.sshfl [vmem:[#allocation1 + $0x18] sm:$0xff pattern:$0x75316420]
      %v2117 = vsel %vm484, %v2109, 0
      %v2119 = vsel %vm488, %v2113, 0
      %v2121 = vsel %vm488, %v2114, 0
      %v2123 = vsel %vm488, %v2115, 0
      %2125 = vmatpush.msra.mxu0 0.0
      %2126 = vmatpush.msra.mxu0 0.0
      %2127 = vmatpush.msra.mxu0 0.0
      %2128 = vmatpush.msra.mxu0 0.0
      %2129 = vmatpush.msra.mxu0 0.0
      %2130 = vmatpush.msra.mxu0 0.0
      %2131 = vmatpush.msra.mxu0 0.0
      %2132 = vmatpush.msra.mxu0 0.0
      %2133 = vmatpush.msra.mxu0 0.0
      %2134 = vmatpush.msra.mxu0 0.0
      %2135 = vmatpush.msra.mxu0 0.0
      %2136 = vmatpush.msra.mxu0 0.0
      %2137 = vmatpush.msra.mxu0 0.0
      %2138 = vmatpush.msra.mxu0 0.0
      %2139 = vmatpush.msra.mxu0 0.0
      %2140 = vmatpush.msra.mxu0 %v2119
      %2141 = vmatmul.f32.gmra.mxu0 %v2117
      %v2142 = vpop.f32.mrf.mxu0
      %v2143 = vadd.f32 0.0, %v2142
      %2144 = vdwg.mxu0
      %2145 = vmatpush.msra.mxu0 0.0
      %2146 = vmatpush.msra.mxu0 0.0
      %2147 = vmatpush.msra.mxu0 0.0
      %2148 = vmatpush.msra.mxu0 0.0
      %2149 = vmatpush.msra.mxu0 0.0
      %2150 = vmatpush.msra.mxu0 0.0
      %2151 = vmatpush.msra.mxu0 0.0
      %2152 = vmatpush.msra.mxu0 0.0
      %2153 = vmatpush.msra.mxu0 0.0
      %2154 = vmatpush.msra.mxu0 0.0
      %2155 = vmatpush.msra.mxu0 0.0
      %2156 = vmatpush.msra.mxu0 0.0
      %2157 = vmatpush.msra.mxu0 0.0
      %2158 = vmatpush.msra.mxu0 0.0
      %2159 = vmatpush.msra.mxu0 0.0
      %2160 = vmatpush.msra.mxu0 %v2121
      %2161 = vmatmul.f32.gmra.mxu0 %v2117
      %v2162 = vpop.f32.mrf.mxu0
      %v2163 = vadd.f32 0.0, %v2162
      %2164 = vdwg.mxu0
      %2165 = vmatpush.msra.mxu0 0.0
      %2166 = vmatpush.msra.mxu0 0.0
      %2167 = vmatpush.msra.mxu0 0.0
      %2168 = vmatpush.msra.mxu0 0.0
      %2169 = vmatpush.msra.mxu0 0.0
      %2170 = vmatpush.msra.mxu0 0.0
      %2171 = vmatpush.msra.mxu0 0.0
      %2172 = vmatpush.msra.mxu0 0.0
      %2173 = vmatpush.msra.mxu0 0.0
      %2174 = vmatpush.msra.mxu0 0.0
      %2175 = vmatpush.msra.mxu0 0.0
      %2176 = vmatpush.msra.mxu0 0.0
      %2177 = vmatpush.msra.mxu0 0.0
      %2178 = vmatpush.msra.mxu0 0.0
      %2179 = vmatpush.msra.mxu0 0.0
      %2180 = vmatpush.msra.mxu0 %v2123
      %2181 = vmatmul.f32.gmra.mxu0 %v2117
      %v2182 = vpop.f32.mrf.mxu0
      %v2183 = vadd.f32 0.0, %v2182
      %2184 = vdwg.mxu0
      %v2185 = vadd.f32 %v2105, %v2143
      %v2186 = vadd.f32 %v2106, %v2163
      %v2187 = vadd.f32 %v2107, %v2183
      %s2188 = scalar_lea.vmem %s8, 20
      %v2189 = vld [vmem:[%s2188] sm:$0xf]
      %2190 = vst [vmem:[#allocation1] ss:$2 sm:$0xff] %v466
      %s2191 = scalar_lea.vmem [#allocation1], 16
      %2192 = vst [vmem:[%s2191] ss:$2 sm:$0xff] %v467
      %s2193 = scalar_lea.vmem [#allocation1], 32
      %2194 = vst [vmem:[%s2193] ss:$2 sm:$0xff] %v468
      %v2195 = vld.sshfl [vmem:[#allocation1 + $0x8] sm:$0xff pattern:$0x75316420]
      %v2196 = vld.sshfl [vmem:[#allocation1 + $0x10] sm:$0xff pattern:$0x75316420]
      %v2197 = vld.sshfl [vmem:[#allocation1 + $0x18] sm:$0xff pattern:$0x75316420]
      %v2198 = vld.sshfl [vmem:[#allocation1 + $0x20] sm:$0xff pattern:$0x75316420]
      %2199 = vrot.lane.b32.xlu0 %v2195, 127
      %v2200 = vpop.permute.xlu0 %2199
      %2201 = vrot.lane.b32.xlu0 %v2196, 127
      %v2202 = vpop.permute.xlu0 %2201
      %2203 = vrot.lane.b32.xlu0 %v2197, 127
      %v2204 = vpop.permute.xlu0 %2203
      %2205 = vrot.lane.b32.xlu0 %v2198, 127
      %v2206 = vpop.permute.xlu0 %2205
      %v2207 = vsel %vm1380, %v2200, %v2202
      %v2208 = vsel %vm1380, %v2202, %v2204
      %v2209 = vsel %vm1380, %v2204, %v2206
      %v2211 = vsel %vm484, %v2189, 0
      %v2213 = vsel %vm488, %v2207, 0
      %v2215 = vsel %vm488, %v2208, 0
      %v2217 = vsel %vm488, %v2209, 0
      %2219 = vmatpush.msra.mxu0 0.0
      %2220 = vmatpush.msra.mxu0 0.0
      %2221 = vmatpush.msra.mxu0 0.0
      %2222 = vmatpush.msra.mxu0 0.0
      %2223 = vmatpush.msra.mxu0 0.0
      %2224 = vmatpush.msra.mxu0 0.0
      %2225 = vmatpush.msra.mxu0 0.0
      %2226 = vmatpush.msra.mxu0 0.0
      %2227 = vmatpush.msra.mxu0 0.0
      %2228 = vmatpush.msra.mxu0 0.0
      %2229 = vmatpush.msra.mxu0 0.0
      %2230 = vmatpush.msra.mxu0 0.0
      %2231 = vmatpush.msra.mxu0 0.0
      %2232 = vmatpush.msra.mxu0 0.0
      %2233 = vmatpush.msra.mxu0 0.0
      %2234 = vmatpush.msra.mxu0 %v2213
      %2235 = vmatmul.f32.gmra.mxu0 %v2211
      %v2236 = vpop.f32.mrf.mxu0
      %v2237 = vadd.f32 0.0, %v2236
      %2238 = vdwg.mxu0
      %2239 = vmatpush.msra.mxu0 0.0
      %2240 = vmatpush.msra.mxu0 0.0
      %2241 = vmatpush.msra.mxu0 0.0
      %2242 = vmatpush.msra.mxu0 0.0
      %2243 = vmatpush.msra.mxu0 0.0
      %2244 = vmatpush.msra.mxu0 0.0
      %2245 = vmatpush.msra.mxu0 0.0
      %2246 = vmatpush.msra.mxu0 0.0
      %2247 = vmatpush.msra.mxu0 0.0
      %2248 = vmatpush.msra.mxu0 0.0
      %2249 = vmatpush.msra.mxu0 0.0
      %2250 = vmatpush.msra.mxu0 0.0
      %2251 = vmatpush.msra.mxu0 0.0
      %2252 = vmatpush.msra.mxu0 0.0
      %2253 = vmatpush.msra.mxu0 0.0
      %2254 = vmatpush.msra.mxu0 %v2215
      %2255 = vmatmul.f32.gmra.mxu0 %v2211
      %v2256 = vpop.f32.mrf.mxu0
      %v2257 = vadd.f32 0.0, %v2256
      %2258 = vdwg.mxu0
      %2259 = vmatpush.msra.mxu0 0.0
      %2260 = vmatpush.msra.mxu0 0.0
      %2261 = vmatpush.msra.mxu0 0.0
      %2262 = vmatpush.msra.mxu0 0.0
      %2263 = vmatpush.msra.mxu0 0.0
      %2264 = vmatpush.msra.mxu0 0.0
      %2265 = vmatpush.msra.mxu0 0.0
      %2266 = vmatpush.msra.mxu0 0.0
      %2267 = vmatpush.msra.mxu0 0.0
      %2268 = vmatpush.msra.mxu0 0.0
      %2269 = vmatpush.msra.mxu0 0.0
      %2270 = vmatpush.msra.mxu0 0.0
      %2271 = vmatpush.msra.mxu0 0.0
      %2272 = vmatpush.msra.mxu0 0.0
      %2273 = vmatpush.msra.mxu0 0.0
      %2274 = vmatpush.msra.mxu0 %v2217
      %2275 = vmatmul.f32.gmra.mxu0 %v2211
      %v2276 = vpop.f32.mrf.mxu0
      %v2277 = vadd.f32 0.0, %v2276
      %2278 = vdwg.mxu0
      %v2279 = vadd.f32 %v2185, %v2237
      %v2280 = vadd.f32 %v2186, %v2257
      %v2281 = vadd.f32 %v2187, %v2277
      %s2282 = scalar_lea.vmem %s8, 24
      %v2283 = vld [vmem:[%s2282] sm:$0xf]
      %2284 = vst [vmem:[#allocation1] ss:$2 sm:$0xff] %v466
      %s2285 = scalar_lea.vmem [#allocation1], 16
      %2286 = vst [vmem:[%s2285] ss:$2 sm:$0xff] %v467
      %s2287 = scalar_lea.vmem [#allocation1], 32
      %2288 = vst [vmem:[%s2287] ss:$2 sm:$0xff] %v468
      %v2289 = vld.sshfl [vmem:[#allocation1 + $0x8] sm:$0xff pattern:$0x75316420]
      %v2290 = vld.sshfl [vmem:[#allocation1 + $0x10] sm:$0xff pattern:$0x75316420]
      %v2291 = vld.sshfl [vmem:[#allocation1 + $0x18] sm:$0xff pattern:$0x75316420]
      %v2292 = vld.sshfl [vmem:[#allocation1 + $0x20] sm:$0xff pattern:$0x75316420]
      %2293 = vrot.lane.b32.xlu0 %v2289, 111
      %v2294 = vpop.permute.xlu0 %2293
      %2295 = vrot.lane.b32.xlu0 %v2290, 111
      %v2296 = vpop.permute.xlu0 %2295
      %2297 = vrot.lane.b32.xlu0 %v2291, 111
      %v2298 = vpop.permute.xlu0 %2297
      %2299 = vrot.lane.b32.xlu0 %v2292, 111
      %v2300 = vpop.permute.xlu0 %2299
      %v2301 = vsel %vm1475, %v2294, %v2296
      %v2302 = vsel %vm1475, %v2296, %v2298
      %v2303 = vsel %vm1475, %v2298, %v2300
      %v2305 = vsel %vm484, %v2283, 0
      %v2307 = vsel %vm488, %v2301, 0
      %v2309 = vsel %vm488, %v2302, 0
      %v2311 = vsel %vm488, %v2303, 0
      %2313 = vmatpush.msra.mxu0 0.0
      %2314 = vmatpush.msra.mxu0 0.0
      %2315 = vmatpush.msra.mxu0 0.0
      %2316 = vmatpush.msra.mxu0 0.0
      %2317 = vmatpush.msra.mxu0 0.0
      %2318 = vmatpush.msra.mxu0 0.0
      %2319 = vmatpush.msra.mxu0 0.0
      %2320 = vmatpush.msra.mxu0 0.0
      %2321 = vmatpush.msra.mxu0 0.0
      %2322 = vmatpush.msra.mxu0 0.0
      %2323 = vmatpush.msra.mxu0 0.0
      %2324 = vmatpush.msra.mxu0 0.0
      %2325 = vmatpush.msra.mxu0 0.0
      %2326 = vmatpush.msra.mxu0 0.0
      %2327 = vmatpush.msra.mxu0 0.0
      %2328 = vmatpush.msra.mxu0 %v2307
      %2329 = vmatmul.f32.gmra.mxu0 %v2305
      %v2330 = vpop.f32.mrf.mxu0
      %v2331 = vadd.f32 0.0, %v2330
      %2332 = vdwg.mxu0
      %2333 = vmatpush.msra.mxu0 0.0
      %2334 = vmatpush.msra.mxu0 0.0
      %2335 = vmatpush.msra.mxu0 0.0
      %2336 = vmatpush.msra.mxu0 0.0
      %2337 = vmatpush.msra.mxu0 0.0
      %2338 = vmatpush.msra.mxu0 0.0
      %2339 = vmatpush.msra.mxu0 0.0
      %2340 = vmatpush.msra.mxu0 0.0
      %2341 = vmatpush.msra.mxu0 0.0
      %2342 = vmatpush.msra.mxu0 0.0
      %2343 = vmatpush.msra.mxu0 0.0
      %2344 = vmatpush.msra.mxu0 0.0
      %2345 = vmatpush.msra.mxu0 0.0
      %2346 = vmatpush.msra.mxu0 0.0
      %2347 = vmatpush.msra.mxu0 0.0
      %2348 = vmatpush.msra.mxu0 %v2309
      %2349 = vmatmul.f32.gmra.mxu0 %v2305
      %v2350 = vpop.f32.mrf.mxu0
      %v2351 = vadd.f32 0.0, %v2350
      %2352 = vdwg.mxu0
      %2353 = vmatpush.msra.mxu0 0.0
      %2354 = vmatpush.msra.mxu0 0.0
      %2355 = vmatpush.msra.mxu0 0.0
      %2356 = vmatpush.msra.mxu0 0.0
      %2357 = vmatpush.msra.mxu0 0.0
      %2358 = vmatpush.msra.mxu0 0.0
      %2359 = vmatpush.msra.mxu0 0.0
      %2360 = vmatpush.msra.mxu0 0.0
      %2361 = vmatpush.msra.mxu0 0.0
      %2362 = vmatpush.msra.mxu0 0.0
      %2363 = vmatpush.msra.mxu0 0.0
      %2364 = vmatpush.msra.mxu0 0.0
      %2365 = vmatpush.msra.mxu0 0.0
      %2366 = vmatpush.msra.mxu0 0.0
      %2367 = vmatpush.msra.mxu0 0.0
      %2368 = vmatpush.msra.mxu0 %v2311
      %2369 = vmatmul.f32.gmra.mxu0 %v2305
      %v2370 = vpop.f32.mrf.mxu0
      %v2371 = vadd.f32 0.0, %v2370
      %2372 = vdwg.mxu0
      %v2373 = vadd.f32 %v2279, %v2331
      %v2374 = vadd.f32 %v2280, %v2351
      %v2375 = vadd.f32 %v2281, %v2371
      %s2376 = scalar_lea.vmem %s8, 28
      %v2377 = vld [vmem:[%s2376] sm:$0xf]
      %2378 = vst [vmem:[#allocation1] ss:$2 sm:$0xff] %v466
      %s2379 = scalar_lea.vmem [#allocation1], 16
      %2380 = vst [vmem:[%s2379] ss:$2 sm:$0xff] %v467
      %s2381 = scalar_lea.vmem [#allocation1], 32
      %2382 = vst [vmem:[%s2381] ss:$2 sm:$0xff] %v468
      %v2383 = vld.sshfl [vmem:[#allocation1 + $0x8] sm:$0xff pattern:$0x75316420]
      %v2384 = vld.sshfl [vmem:[#allocation1 + $0x10] sm:$0xff pattern:$0x75316420]
      %v2385 = vld.sshfl [vmem:[#allocation1 + $0x18] sm:$0xff pattern:$0x75316420]
      %v2386 = vld.sshfl [vmem:[#allocation1 + $0x20] sm:$0xff pattern:$0x75316420]
      %2387 = vrot.lane.b32.xlu0 %v2383, 110
      %v2388 = vpop.permute.xlu0 %2387
      %2389 = vrot.lane.b32.xlu0 %v2384, 110
      %v2390 = vpop.permute.xlu0 %2389
      %2391 = vrot.lane.b32.xlu0 %v2385, 110
      %v2392 = vpop.permute.xlu0 %2391
      %2393 = vrot.lane.b32.xlu0 %v2386, 110
      %v2394 = vpop.permute.xlu0 %2393
      %v2395 = vsel %vm1570, %v2388, %v2390
      %v2396 = vsel %vm1570, %v2390, %v2392
      %v2397 = vsel %vm1570, %v2392, %v2394
      %v2399 = vsel %vm484, %v2377, 0
      %v2401 = vsel %vm488, %v2395, 0
      %v2403 = vsel %vm488, %v2396, 0
      %v2405 = vsel %vm488, %v2397, 0
      %2407 = vmatpush.msra.mxu0 0.0
      %2408 = vmatpush.msra.mxu0 0.0
      %2409 = vmatpush.msra.mxu0 0.0
      %2410 = vmatpush.msra.mxu0 0.0
      %2411 = vmatpush.msra.mxu0 0.0
      %2412 = vmatpush.msra.mxu0 0.0
      %2413 = vmatpush.msra.mxu0 0.0
      %2414 = vmatpush.msra.mxu0 0.0
      %2415 = vmatpush.msra.mxu0 0.0
      %2416 = vmatpush.msra.mxu0 0.0
      %2417 = vmatpush.msra.mxu0 0.0
      %2418 = vmatpush.msra.mxu0 0.0
      %2419 = vmatpush.msra.mxu0 0.0
      %2420 = vmatpush.msra.mxu0 0.0
      %2421 = vmatpush.msra.mxu0 0.0
      %2422 = vmatpush.msra.mxu0 %v2401
      %2423 = vmatmul.f32.gmra.mxu0 %v2399
      %v2424 = vpop.f32.mrf.mxu0
      %v2425 = vadd.f32 0.0, %v2424
      %2426 = vdwg.mxu0
      %2427 = vmatpush.msra.mxu0 0.0
      %2428 = vmatpush.msra.mxu0 0.0
      %2429 = vmatpush.msra.mxu0 0.0
      %2430 = vmatpush.msra.mxu0 0.0
      %2431 = vmatpush.msra.mxu0 0.0
      %2432 = vmatpush.msra.mxu0 0.0
      %2433 = vmatpush.msra.mxu0 0.0
      %2434 = vmatpush.msra.mxu0 0.0
      %2435 = vmatpush.msra.mxu0 0.0
      %2436 = vmatpush.msra.mxu0 0.0
      %2437 = vmatpush.msra.mxu0 0.0
      %2438 = vmatpush.msra.mxu0 0.0
      %2439 = vmatpush.msra.mxu0 0.0
      %2440 = vmatpush.msra.mxu0 0.0
      %2441 = vmatpush.msra.mxu0 0.0
      %2442 = vmatpush.msra.mxu0 %v2403
      %2443 = vmatmul.f32.gmra.mxu0 %v2399
      %v2444 = vpop.f32.mrf.mxu0
      %v2445 = vadd.f32 0.0, %v2444
      %2446 = vdwg.mxu0
      %2447 = vmatpush.msra.mxu0 0.0
      %2448 = vmatpush.msra.mxu0 0.0
      %2449 = vmatpush.msra.mxu0 0.0
      %2450 = vmatpush.msra.mxu0 0.0
      %2451 = vmatpush.msra.mxu0 0.0
      %2452 = vmatpush.msra.mxu0 0.0
      %2453 = vmatpush.msra.mxu0 0.0
      %2454 = vmatpush.msra.mxu0 0.0
      %2455 = vmatpush.msra.mxu0 0.0
      %2456 = vmatpush.msra.mxu0 0.0
      %2457 = vmatpush.msra.mxu0 0.0
      %2458 = vmatpush.msra.mxu0 0.0
      %2459 = vmatpush.msra.mxu0 0.0
      %2460 = vmatpush.msra.mxu0 0.0
      %2461 = vmatpush.msra.mxu0 0.0
      %2462 = vmatpush.msra.mxu0 %v2405
      %2463 = vmatmul.f32.gmra.mxu0 %v2399
      %v2464 = vpop.f32.mrf.mxu0
      %v2465 = vadd.f32 0.0, %v2464
      %2466 = vdwg.mxu0
      %v2467 = vadd.f32 %v2373, %v2425
      %v2468 = vadd.f32 %v2374, %v2445
      %v2469 = vadd.f32 %v2375, %v2465
      %s2470 = scalar_lea.vmem %s8, 32
      %v2471 = vld [vmem:[%s2470] sm:$0xf]
      %2472 = vst [vmem:[#allocation1] ss:$2 sm:$0xff] %v466
      %s2473 = scalar_lea.vmem [#allocation1], 16
      %2474 = vst [vmem:[%s2473] ss:$2 sm:$0xff] %v467
      %s2475 = scalar_lea.vmem [#allocation1], 32
      %2476 = vst [vmem:[%s2475] ss:$2 sm:$0xff] %v468
      %v2477 = vld.sshfl [vmem:[#allocation1 + $0x8] sm:$0xff pattern:$0x75316420]
      %v2478 = vld.sshfl [vmem:[#allocation1 + $0x10] sm:$0xff pattern:$0x75316420]
      %v2479 = vld.sshfl [vmem:[#allocation1 + $0x18] sm:$0xff pattern:$0x75316420]
      %v2480 = vld.sshfl [vmem:[#allocation1 + $0x20] sm:$0xff pattern:$0x75316420]
      %2481 = vrot.lane.b32.xlu0 %v2477, 109
      %v2482 = vpop.permute.xlu0 %2481
      %2483 = vrot.lane.b32.xlu0 %v2478, 109
      %v2484 = vpop.permute.xlu0 %2483
      %2485 = vrot.lane.b32.xlu0 %v2479, 109
      %v2486 = vpop.permute.xlu0 %2485
      %2487 = vrot.lane.b32.xlu0 %v2480, 109
      %v2488 = vpop.permute.xlu0 %2487
      %v2489 = vsel %vm1665, %v2482, %v2484
      %v2490 = vsel %vm1665, %v2484, %v2486
      %v2491 = vsel %vm1665, %v2486, %v2488
      %v2493 = vsel %vm484, %v2471, 0
      %v2495 = vsel %vm488, %v2489, 0
      %v2497 = vsel %vm488, %v2490, 0
      %v2499 = vsel %vm488, %v2491, 0
      %2501 = vmatpush.msra.mxu0 0.0
      %2502 = vmatpush.msra.mxu0 0.0
      %2503 = vmatpush.msra.mxu0 0.0
      %2504 = vmatpush.msra.mxu0 0.0
      %2505 = vmatpush.msra.mxu0 0.0
      %2506 = vmatpush.msra.mxu0 0.0
      %2507 = vmatpush.msra.mxu0 0.0
      %2508 = vmatpush.msra.mxu0 0.0
      %2509 = vmatpush.msra.mxu0 0.0
      %2510 = vmatpush.msra.mxu0 0.0
      %2511 = vmatpush.msra.mxu0 0.0
      %2512 = vmatpush.msra.mxu0 0.0
      %2513 = vmatpush.msra.mxu0 0.0
      %2514 = vmatpush.msra.mxu0 0.0
      %2515 = vmatpush.msra.mxu0 0.0
      %2516 = vmatpush.msra.mxu0 %v2495
      %2517 = vmatmul.f32.gmra.mxu0 %v2493
      %v2518 = vpop.f32.mrf.mxu0
      %v2519 = vadd.f32 0.0, %v2518
      %2520 = vdwg.mxu0
      %2521 = vmatpush.msra.mxu0 0.0
      %2522 = vmatpush.msra.mxu0 0.0
      %2523 = vmatpush.msra.mxu0 0.0
      %2524 = vmatpush.msra.mxu0 0.0
      %2525 = vmatpush.msra.mxu0 0.0
      %2526 = vmatpush.msra.mxu0 0.0
      %2527 = vmatpush.msra.mxu0 0.0
      %2528 = vmatpush.msra.mxu0 0.0
      %2529 = vmatpush.msra.mxu0 0.0
      %2530 = vmatpush.msra.mxu0 0.0
      %2531 = vmatpush.msra.mxu0 0.0
      %2532 = vmatpush.msra.mxu0 0.0
      %2533 = vmatpush.msra.mxu0 0.0
      %2534 = vmatpush.msra.mxu0 0.0
      %2535 = vmatpush.msra.mxu0 0.0
      %2536 = vmatpush.msra.mxu0 %v2497
      %2537 = vmatmul.f32.gmra.mxu0 %v2493
      %v2538 = vpop.f32.mrf.mxu0
      %v2539 = vadd.f32 0.0, %v2538
      %2540 = vdwg.mxu0
      %2541 = vmatpush.msra.mxu0 0.0
      %2542 = vmatpush.msra.mxu0 0.0
      %2543 = vmatpush.msra.mxu0 0.0
      %2544 = vmatpush.msra.mxu0 0.0
      %2545 = vmatpush.msra.mxu0 0.0
      %2546 = vmatpush.msra.mxu0 0.0
      %2547 = vmatpush.msra.mxu0 0.0
      %2548 = vmatpush.msra.mxu0 0.0
      %2549 = vmatpush.msra.mxu0 0.0
      %2550 = vmatpush.msra.mxu0 0.0
      %2551 = vmatpush.msra.mxu0 0.0
      %2552 = vmatpush.msra.mxu0 0.0
      %2553 = vmatpush.msra.mxu0 0.0
      %2554 = vmatpush.msra.mxu0 0.0
      %2555 = vmatpush.msra.mxu0 0.0
      %2556 = vmatpush.msra.mxu0 %v2499
      %2557 = vmatmul.f32.gmra.mxu0 %v2493
      %v2558 = vpop.f32.mrf.mxu0
      %v2559 = vadd.f32 0.0, %v2558
      %2560 = vdwg.mxu0
      %v2561 = vadd.f32 %v2467, %v2519
      %v2562 = vadd.f32 %v2468, %v2539
      %v2563 = vadd.f32 %v2469, %v2559
      %v2564 = vld [vmem:[%s9] sm:$0xf]
      %2566 = vset.pattern.permute.xlu0 0
      %2567 = vperm.xlu0 %2566, %v2564
      %v2568 = vpop.permute.xlu0 %2567
      %v2570 = vadd.f32 %v2561, %v2568
      %v2571 = vadd.f32 %v2562, %v2568
      %v2572 = vadd.f32 %v2563, %v2568
      %v2573 = vmax.f32 %v2570, 0.0
      %v2574 = vmax.f32 %v2571, 0.0
      %v2575 = vmax.f32 %v2572, 0.0
      %v2577 = vperm.slane %v912, 0
      %v2578 = vperm.slane %v912, 1
      %v2579 = vperm.slane %v912, 2
      %v2583 = vmul.f32 %v2573, %v2577
      %v2584 = vmul.f32 %v2574, %v2578
      %v2585 = vmul.f32 %v2575, %v2579
      %v2586 = vld [vmem:[%s10] sm:$0xf]
      %s2587 = scalar_lea.vmem %s10, 4
      %v2588 = vld [vmem:[%s2587] sm:$0xf]
      %2593 = vrot.lane.b32.xlu0 0.0, 18
      %v2594 = vpop.permute.xlu0 %2593
      %2595 = vrot.lane.b32.xlu0 %v2583, 18
      %v2596 = vpop.permute.xlu0 %2595
      %2597 = vrot.lane.b32.xlu0 %v2584, 18
      %v2598 = vpop.permute.xlu0 %2597
      %2599 = vrot.lane.b32.xlu0 %v2585, 18
      %v2600 = vpop.permute.xlu0 %2599
      %v2601 = vsel %vm933, %v2594, %v2596
      %v2602 = vsel %vm933, %v2596, %v2598
      %v2603 = vsel %vm933, %v2598, %v2600
      %v2605 = vsel %vm484, %v2588, 0
      %v2607 = vsel %vm488, %v2601, 0
      %v2609 = vsel %vm488, %v2602, 0
      %v2611 = vsel %vm488, %v2603, 0
      %2613 = vmatpush.msra.mxu0 0.0
      %2614 = vmatpush.msra.mxu0 0.0
      %2615 = vmatpush.msra.mxu0 0.0
      %2616 = vmatpush.msra.mxu0 0.0
      %2617 = vmatpush.msra.mxu0 0.0
      %2618 = vmatpush.msra.mxu0 0.0
      %2619 = vmatpush.msra.mxu0 0.0
      %2620 = vmatpush.msra.mxu0 0.0
      %2621 = vmatpush.msra.mxu0 0.0
      %2622 = vmatpush.msra.mxu0 0.0
      %2623 = vmatpush.msra.mxu0 0.0
      %2624 = vmatpush.msra.mxu0 0.0
      %2625 = vmatpush.msra.mxu0 0.0
      %2626 = vmatpush.msra.mxu0 0.0
      %2627 = vmatpush.msra.mxu0 0.0
      %2628 = vmatpush.msra.mxu0 %v2607
      %2629 = vmatmul.f32.gmra.mxu0 %v2605
      %v2630 = vpop.f32.mrf.mxu0
      %v2631 = vadd.f32 0.0, %v2630
      %2632 = vdwg.mxu0
      %2633 = vmatpush.msra.mxu0 0.0
      %2634 = vmatpush.msra.mxu0 0.0
      %2635 = vmatpush.msra.mxu0 0.0
      %2636 = vmatpush.msra.mxu0 0.0
      %2637 = vmatpush.msra.mxu0 0.0
      %2638 = vmatpush.msra.mxu0 0.0
      %2639 = vmatpush.msra.mxu0 0.0
      %2640 = vmatpush.msra.mxu0 0.0
      %2641 = vmatpush.msra.mxu0 0.0
      %2642 = vmatpush.msra.mxu0 0.0
      %2643 = vmatpush.msra.mxu0 0.0
      %2644 = vmatpush.msra.mxu0 0.0
      %2645 = vmatpush.msra.mxu0 0.0
      %2646 = vmatpush.msra.mxu0 0.0
      %2647 = vmatpush.msra.mxu0 0.0
      %2648 = vmatpush.msra.mxu0 %v2609
      %2649 = vmatmul.f32.gmra.mxu0 %v2605
      %v2650 = vpop.f32.mrf.mxu0
      %v2651 = vadd.f32 0.0, %v2650
      %2652 = vdwg.mxu0
      %2653 = vmatpush.msra.mxu0 0.0
      %2654 = vmatpush.msra.mxu0 0.0
      %2655 = vmatpush.msra.mxu0 0.0
      %2656 = vmatpush.msra.mxu0 0.0
      %2657 = vmatpush.msra.mxu0 0.0
      %2658 = vmatpush.msra.mxu0 0.0
      %2659 = vmatpush.msra.mxu0 0.0
      %2660 = vmatpush.msra.mxu0 0.0
      %2661 = vmatpush.msra.mxu0 0.0
      %2662 = vmatpush.msra.mxu0 0.0
      %2663 = vmatpush.msra.mxu0 0.0
      %2664 = vmatpush.msra.mxu0 0.0
      %2665 = vmatpush.msra.mxu0 0.0
      %2666 = vmatpush.msra.mxu0 0.0
      %2667 = vmatpush.msra.mxu0 0.0
      %2668 = vmatpush.msra.mxu0 %v2611
      %2669 = vmatmul.f32.gmra.mxu0 %v2605
      %v2670 = vpop.f32.mrf.mxu0
      %v2671 = vadd.f32 0.0, %v2670
      %2672 = vdwg.mxu0
      %2673 = vrot.lane.b32.xlu0 0.0, 19
      %v2674 = vpop.permute.xlu0 %2673
      %2675 = vrot.lane.b32.xlu0 %v2583, 19
      %v2676 = vpop.permute.xlu0 %2675
      %2677 = vrot.lane.b32.xlu0 %v2584, 19
      %v2678 = vpop.permute.xlu0 %2677
      %2679 = vrot.lane.b32.xlu0 %v2585, 19
      %v2680 = vpop.permute.xlu0 %2679
      %v2681 = vsel %vm1021, %v2674, %v2676
      %v2682 = vsel %vm1021, %v2676, %v2678
      %v2683 = vsel %vm1021, %v2678, %v2680
      %v2685 = vsel %vm484, %v2586, 0
      %v2687 = vsel %vm488, %v2681, 0
      %v2689 = vsel %vm488, %v2682, 0
      %v2691 = vsel %vm488, %v2683, 0
      %2693 = vmatpush.msra.mxu0 0.0
      %2694 = vmatpush.msra.mxu0 0.0
      %2695 = vmatpush.msra.mxu0 0.0
      %2696 = vmatpush.msra.mxu0 0.0
      %2697 = vmatpush.msra.mxu0 0.0
      %2698 = vmatpush.msra.mxu0 0.0
      %2699 = vmatpush.msra.mxu0 0.0
      %2700 = vmatpush.msra.mxu0 0.0
      %2701 = vmatpush.msra.mxu0 0.0
      %2702 = vmatpush.msra.mxu0 0.0
      %2703 = vmatpush.msra.mxu0 0.0
      %2704 = vmatpush.msra.mxu0 0.0
      %2705 = vmatpush.msra.mxu0 0.0
      %2706 = vmatpush.msra.mxu0 0.0
      %2707 = vmatpush.msra.mxu0 0.0
      %2708 = vmatpush.msra.mxu0 %v2687
      %2709 = vmatmul.f32.gmra.mxu0 %v2685
      %v2710 = vpop.f32.mrf.mxu0
      %v2711 = vadd.f32 %v2631, %v2710
      %2712 = vdwg.mxu0
      %2713 = vmatpush.msra.mxu0 0.0
      %2714 = vmatpush.msra.mxu0 0.0
      %2715 = vmatpush.msra.mxu0 0.0
      %2716 = vmatpush.msra.mxu0 0.0
      %2717 = vmatpush.msra.mxu0 0.0
      %2718 = vmatpush.msra.mxu0 0.0
      %2719 = vmatpush.msra.mxu0 0.0
      %2720 = vmatpush.msra.mxu0 0.0
      %2721 = vmatpush.msra.mxu0 0.0
      %2722 = vmatpush.msra.mxu0 0.0
      %2723 = vmatpush.msra.mxu0 0.0
      %2724 = vmatpush.msra.mxu0 0.0
      %2725 = vmatpush.msra.mxu0 0.0
      %2726 = vmatpush.msra.mxu0 0.0
      %2727 = vmatpush.msra.mxu0 0.0
      %2728 = vmatpush.msra.mxu0 %v2689
      %2729 = vmatmul.f32.gmra.mxu0 %v2685
      %v2730 = vpop.f32.mrf.mxu0
      %v2731 = vadd.f32 %v2651, %v2730
      %2732 = vdwg.mxu0
      %2733 = vmatpush.msra.mxu0 0.0
      %2734 = vmatpush.msra.mxu0 0.0
      %2735 = vmatpush.msra.mxu0 0.0
      %2736 = vmatpush.msra.mxu0 0.0
      %2737 = vmatpush.msra.mxu0 0.0
      %2738 = vmatpush.msra.mxu0 0.0
      %2739 = vmatpush.msra.mxu0 0.0
      %2740 = vmatpush.msra.mxu0 0.0
      %2741 = vmatpush.msra.mxu0 0.0
      %2742 = vmatpush.msra.mxu0 0.0
      %2743 = vmatpush.msra.mxu0 0.0
      %2744 = vmatpush.msra.mxu0 0.0
      %2745 = vmatpush.msra.mxu0 0.0
      %2746 = vmatpush.msra.mxu0 0.0
      %2747 = vmatpush.msra.mxu0 0.0
      %2748 = vmatpush.msra.mxu0 %v2691
      %2749 = vmatmul.f32.gmra.mxu0 %v2685
      %v2750 = vpop.f32.mrf.mxu0
      %v2751 = vadd.f32 %v2671, %v2750
      %2752 = vdwg.mxu0
      %s2753 = scalar_lea.vmem %s10, 8
      %v2754 = vld [vmem:[%s2753] sm:$0xf]
      %2755 = vrot.lane.b32.xlu0 0.0, 17
      %v2756 = vpop.permute.xlu0 %2755
      %2757 = vrot.lane.b32.xlu0 %v2583, 17
      %v2758 = vpop.permute.xlu0 %2757
      %2759 = vrot.lane.b32.xlu0 %v2584, 17
      %v2760 = vpop.permute.xlu0 %2759
      %2761 = vrot.lane.b32.xlu0 %v2585, 17
      %v2762 = vpop.permute.xlu0 %2761
      %v2763 = vsel %vm1111, %v2756, %v2758
      %v2764 = vsel %vm1111, %v2758, %v2760
      %v2765 = vsel %vm1111, %v2760, %v2762
      %v2767 = vsel %vm484, %v2754, 0
      %v2769 = vsel %vm488, %v2763, 0
      %v2771 = vsel %vm488, %v2764, 0
      %v2773 = vsel %vm488, %v2765, 0
      %2775 = vmatpush.msra.mxu0 0.0
      %2776 = vmatpush.msra.mxu0 0.0
      %2777 = vmatpush.msra.mxu0 0.0
      %2778 = vmatpush.msra.mxu0 0.0
      %2779 = vmatpush.msra.mxu0 0.0
      %2780 = vmatpush.msra.mxu0 0.0
      %2781 = vmatpush.msra.mxu0 0.0
      %2782 = vmatpush.msra.mxu0 0.0
      %2783 = vmatpush.msra.mxu0 0.0
      %2784 = vmatpush.msra.mxu0 0.0
      %2785 = vmatpush.msra.mxu0 0.0
      %2786 = vmatpush.msra.mxu0 0.0
      %2787 = vmatpush.msra.mxu0 0.0
      %2788 = vmatpush.msra.mxu0 0.0
      %2789 = vmatpush.msra.mxu0 0.0
      %2790 = vmatpush.msra.mxu0 %v2769
      %2791 = vmatmul.f32.gmra.mxu0 %v2767
      %v2792 = vpop.f32.mrf.mxu0
      %v2793 = vadd.f32 0.0, %v2792
      %2794 = vdwg.mxu0
      %2795 = vmatpush.msra.mxu0 0.0
      %2796 = vmatpush.msra.mxu0 0.0
      %2797 = vmatpush.msra.mxu0 0.0
      %2798 = vmatpush.msra.mxu0 0.0
      %2799 = vmatpush.msra.mxu0 0.0
      %2800 = vmatpush.msra.mxu0 0.0
      %2801 = vmatpush.msra.mxu0 0.0
      %2802 = vmatpush.msra.mxu0 0.0
      %2803 = vmatpush.msra.mxu0 0.0
      %2804 = vmatpush.msra.mxu0 0.0
      %2805 = vmatpush.msra.mxu0 0.0
      %2806 = vmatpush.msra.mxu0 0.0
      %2807 = vmatpush.msra.mxu0 0.0
      %2808 = vmatpush.msra.mxu0 0.0
      %2809 = vmatpush.msra.mxu0 0.0
      %2810 = vmatpush.msra.mxu0 %v2771
      %2811 = vmatmul.f32.gmra.mxu0 %v2767
      %v2812 = vpop.f32.mrf.mxu0
      %v2813 = vadd.f32 0.0, %v2812
      %2814 = vdwg.mxu0
      %2815 = vmatpush.msra.mxu0 0.0
      %2816 = vmatpush.msra.mxu0 0.0
      %2817 = vmatpush.msra.mxu0 0.0
      %2818 = vmatpush.msra.mxu0 0.0
      %2819 = vmatpush.msra.mxu0 0.0
      %2820 = vmatpush.msra.mxu0 0.0
      %2821 = vmatpush.msra.mxu0 0.0
      %2822 = vmatpush.msra.mxu0 0.0
      %2823 = vmatpush.msra.mxu0 0.0
      %2824 = vmatpush.msra.mxu0 0.0
      %2825 = vmatpush.msra.mxu0 0.0
      %2826 = vmatpush.msra.mxu0 0.0
      %2827 = vmatpush.msra.mxu0 0.0
      %2828 = vmatpush.msra.mxu0 0.0
      %2829 = vmatpush.msra.mxu0 0.0
      %2830 = vmatpush.msra.mxu0 %v2773
      %2831 = vmatmul.f32.gmra.mxu0 %v2767
      %v2832 = vpop.f32.mrf.mxu0
      %v2833 = vadd.f32 0.0, %v2832
      %2834 = vdwg.mxu0
      %v2835 = vadd.f32 %v2711, %v2793
      %v2836 = vadd.f32 %v2731, %v2813
      %v2837 = vadd.f32 %v2751, %v2833
      %s2838 = scalar_lea.vmem %s10, 12
      %v2839 = vld [vmem:[%s2838] sm:$0xf]
      %2840 = vrot.lane.b32.xlu0 0.0, 1
      %v2841 = vpop.permute.xlu0 %2840
      %2842 = vrot.lane.b32.xlu0 %v2583, 1
      %v2843 = vpop.permute.xlu0 %2842
      %2844 = vrot.lane.b32.xlu0 %v2584, 1
      %v2845 = vpop.permute.xlu0 %2844
      %2846 = vrot.lane.b32.xlu0 %v2585, 1
      %v2847 = vpop.permute.xlu0 %2846
      %v2848 = vsel %vm1204, %v2841, %v2843
      %v2849 = vsel %vm1204, %v2843, %v2845
      %v2850 = vsel %vm1204, %v2845, %v2847
      %v2852 = vsel %vm484, %v2839, 0
      %v2854 = vsel %vm488, %v2848, 0
      %v2856 = vsel %vm488, %v2849, 0
      %v2858 = vsel %vm488, %v2850, 0
      %2860 = vmatpush.msra.mxu0 0.0
      %2861 = vmatpush.msra.mxu0 0.0
      %2862 = vmatpush.msra.mxu0 0.0
      %2863 = vmatpush.msra.mxu0 0.0
      %2864 = vmatpush.msra.mxu0 0.0
      %2865 = vmatpush.msra.mxu0 0.0
      %2866 = vmatpush.msra.mxu0 0.0
      %2867 = vmatpush.msra.mxu0 0.0
      %2868 = vmatpush.msra.mxu0 0.0
      %2869 = vmatpush.msra.mxu0 0.0
      %2870 = vmatpush.msra.mxu0 0.0
      %2871 = vmatpush.msra.mxu0 0.0
      %2872 = vmatpush.msra.mxu0 0.0
      %2873 = vmatpush.msra.mxu0 0.0
      %2874 = vmatpush.msra.mxu0 0.0
      %2875 = vmatpush.msra.mxu0 %v2854
      %2876 = vmatmul.f32.gmra.mxu0 %v2852
      %v2877 = vpop.f32.mrf.mxu0
      %v2878 = vadd.f32 0.0, %v2877
      %2879 = vdwg.mxu0
      %2880 = vmatpush.msra.mxu0 0.0
      %2881 = vmatpush.msra.mxu0 0.0
      %2882 = vmatpush.msra.mxu0 0.0
      %2883 = vmatpush.msra.mxu0 0.0
      %2884 = vmatpush.msra.mxu0 0.0
      %2885 = vmatpush.msra.mxu0 0.0
      %2886 = vmatpush.msra.mxu0 0.0
      %2887 = vmatpush.msra.mxu0 0.0
      %2888 = vmatpush.msra.mxu0 0.0
      %2889 = vmatpush.msra.mxu0 0.0
      %2890 = vmatpush.msra.mxu0 0.0
      %2891 = vmatpush.msra.mxu0 0.0
      %2892 = vmatpush.msra.mxu0 0.0
      %2893 = vmatpush.msra.mxu0 0.0
      %2894 = vmatpush.msra.mxu0 0.0
      %2895 = vmatpush.msra.mxu0 %v2856
      %2896 = vmatmul.f32.gmra.mxu0 %v2852
      %v2897 = vpop.f32.mrf.mxu0
      %v2898 = vadd.f32 0.0, %v2897
      %2899 = vdwg.mxu0
      %2900 = vmatpush.msra.mxu0 0.0
      %2901 = vmatpush.msra.mxu0 0.0
      %2902 = vmatpush.msra.mxu0 0.0
      %2903 = vmatpush.msra.mxu0 0.0
      %2904 = vmatpush.msra.mxu0 0.0
      %2905 = vmatpush.msra.mxu0 0.0
      %2906 = vmatpush.msra.mxu0 0.0
      %2907 = vmatpush.msra.mxu0 0.0
      %2908 = vmatpush.msra.mxu0 0.0
      %2909 = vmatpush.msra.mxu0 0.0
      %2910 = vmatpush.msra.mxu0 0.0
      %2911 = vmatpush.msra.mxu0 0.0
      %2912 = vmatpush.msra.mxu0 0.0
      %2913 = vmatpush.msra.mxu0 0.0
      %2914 = vmatpush.msra.mxu0 0.0
      %2915 = vmatpush.msra.mxu0 %v2858
      %2916 = vmatmul.f32.gmra.mxu0 %v2852
      %v2917 = vpop.f32.mrf.mxu0
      %v2918 = vadd.f32 0.0, %v2917
      %2919 = vdwg.mxu0
      %v2920 = vadd.f32 %v2835, %v2878
      %v2921 = vadd.f32 %v2836, %v2898
      %v2922 = vadd.f32 %v2837, %v2918
      %s2923 = scalar_lea.vmem %s10, 16
      %v2924 = vld [vmem:[%s2923] sm:$0xf]
      %v2926 = vsel %vm484, %v2924, 0
      %v2928 = vsel %vm488, %v2583, 0
      %v2930 = vsel %vm488, %v2584, 0
      %v2932 = vsel %vm488, %v2585, 0
      %2934 = vmatpush.msra.mxu0 0.0
      %2935 = vmatpush.msra.mxu0 0.0
      %2936 = vmatpush.msra.mxu0 0.0
      %2937 = vmatpush.msra.mxu0 0.0
      %2938 = vmatpush.msra.mxu0 0.0
      %2939 = vmatpush.msra.mxu0 0.0
      %2940 = vmatpush.msra.mxu0 0.0
      %2941 = vmatpush.msra.mxu0 0.0
      %2942 = vmatpush.msra.mxu0 0.0
      %2943 = vmatpush.msra.mxu0 0.0
      %2944 = vmatpush.msra.mxu0 0.0
      %2945 = vmatpush.msra.mxu0 0.0
      %2946 = vmatpush.msra.mxu0 0.0
      %2947 = vmatpush.msra.mxu0 0.0
      %2948 = vmatpush.msra.mxu0 0.0
      %2949 = vmatpush.msra.mxu0 %v2928
      %2950 = vmatmul.f32.gmra.mxu0 %v2926
      %v2951 = vpop.f32.mrf.mxu0
      %v2952 = vadd.f32 0.0, %v2951
      %2953 = vdwg.mxu0
      %2954 = vmatpush.msra.mxu0 0.0
      %2955 = vmatpush.msra.mxu0 0.0
      %2956 = vmatpush.msra.mxu0 0.0
      %2957 = vmatpush.msra.mxu0 0.0
      %2958 = vmatpush.msra.mxu0 0.0
      %2959 = vmatpush.msra.mxu0 0.0
      %2960 = vmatpush.msra.mxu0 0.0
      %2961 = vmatpush.msra.mxu0 0.0
      %2962 = vmatpush.msra.mxu0 0.0
      %2963 = vmatpush.msra.mxu0 0.0
      %2964 = vmatpush.msra.mxu0 0.0
      %2965 = vmatpush.msra.mxu0 0.0
      %2966 = vmatpush.msra.mxu0 0.0
      %2967 = vmatpush.msra.mxu0 0.0
      %2968 = vmatpush.msra.mxu0 0.0
      %2969 = vmatpush.msra.mxu0 %v2930
      %2970 = vmatmul.f32.gmra.mxu0 %v2926
      %v2971 = vpop.f32.mrf.mxu0
      %v2972 = vadd.f32 0.0, %v2971
      %2973 = vdwg.mxu0
      %2974 = vmatpush.msra.mxu0 0.0
      %2975 = vmatpush.msra.mxu0 0.0
      %2976 = vmatpush.msra.mxu0 0.0
      %2977 = vmatpush.msra.mxu0 0.0
      %2978 = vmatpush.msra.mxu0 0.0
      %2979 = vmatpush.msra.mxu0 0.0
      %2980 = vmatpush.msra.mxu0 0.0
      %2981 = vmatpush.msra.mxu0 0.0
      %2982 = vmatpush.msra.mxu0 0.0
      %2983 = vmatpush.msra.mxu0 0.0
      %2984 = vmatpush.msra.mxu0 0.0
      %2985 = vmatpush.msra.mxu0 0.0
      %2986 = vmatpush.msra.mxu0 0.0
      %2987 = vmatpush.msra.mxu0 0.0
      %2988 = vmatpush.msra.mxu0 0.0
      %2989 = vmatpush.msra.mxu0 %v2932
      %2990 = vmatmul.f32.gmra.mxu0 %v2926
      %v2991 = vpop.f32.mrf.mxu0
      %v2992 = vadd.f32 0.0, %v2991
      %2993 = vdwg.mxu0
      %v2994 = vadd.f32 %v2920, %v2952
      %v2995 = vadd.f32 %v2921, %v2972
      %v2996 = vadd.f32 %v2922, %v2992
      %s2997 = scalar_lea.vmem %s10, 20
      %v2998 = vld [vmem:[%s2997] sm:$0xf]
      %2999 = vrot.lane.b32.xlu0 %v2583, 127
      %v3000 = vpop.permute.xlu0 %2999
      %3001 = vrot.lane.b32.xlu0 %v2584, 127
      %v3002 = vpop.permute.xlu0 %3001
      %3003 = vrot.lane.b32.xlu0 %v2585, 127
      %v3004 = vpop.permute.xlu0 %3003
      %3005 = vrot.lane.b32.xlu0 0.0, 127
      %v3006 = vpop.permute.xlu0 %3005
      %v3007 = vsel %vm1380, %v3000, %v3002
      %v3008 = vsel %vm1380, %v3002, %v3004
      %v3009 = vsel %vm1380, %v3004, %v3006
      %v3011 = vsel %vm484, %v2998, 0
      %v3013 = vsel %vm488, %v3007, 0
      %v3015 = vsel %vm488, %v3008, 0
      %v3017 = vsel %vm488, %v3009, 0
      %3019 = vmatpush.msra.mxu0 0.0
      %3020 = vmatpush.msra.mxu0 0.0
      %3021 = vmatpush.msra.mxu0 0.0
      %3022 = vmatpush.msra.mxu0 0.0
      %3023 = vmatpush.msra.mxu0 0.0
      %3024 = vmatpush.msra.mxu0 0.0
      %3025 = vmatpush.msra.mxu0 0.0
      %3026 = vmatpush.msra.mxu0 0.0
      %3027 = vmatpush.msra.mxu0 0.0
      %3028 = vmatpush.msra.mxu0 0.0
      %3029 = vmatpush.msra.mxu0 0.0
      %3030 = vmatpush.msra.mxu0 0.0
      %3031 = vmatpush.msra.mxu0 0.0
      %3032 = vmatpush.msra.mxu0 0.0
      %3033 = vmatpush.msra.mxu0 0.0
      %3034 = vmatpush.msra.mxu0 %v3013
      %3035 = vmatmul.f32.gmra.mxu0 %v3011
      %v3036 = vpop.f32.mrf.mxu0
      %v3037 = vadd.f32 0.0, %v3036
      %3038 = vdwg.mxu0
      %3039 = vmatpush.msra.mxu0 0.0
      %3040 = vmatpush.msra.mxu0 0.0
      %3041 = vmatpush.msra.mxu0 0.0
      %3042 = vmatpush.msra.mxu0 0.0
      %3043 = vmatpush.msra.mxu0 0.0
      %3044 = vmatpush.msra.mxu0 0.0
      %3045 = vmatpush.msra.mxu0 0.0
      %3046 = vmatpush.msra.mxu0 0.0
      %3047 = vmatpush.msra.mxu0 0.0
      %3048 = vmatpush.msra.mxu0 0.0
      %3049 = vmatpush.msra.mxu0 0.0
      %3050 = vmatpush.msra.mxu0 0.0
      %3051 = vmatpush.msra.mxu0 0.0
      %3052 = vmatpush.msra.mxu0 0.0
      %3053 = vmatpush.msra.mxu0 0.0
      %3054 = vmatpush.msra.mxu0 %v3015
      %3055 = vmatmul.f32.gmra.mxu0 %v3011
      %v3056 = vpop.f32.mrf.mxu0
      %v3057 = vadd.f32 0.0, %v3056
      %3058 = vdwg.mxu0
      %3059 = vmatpush.msra.mxu0 0.0
      %3060 = vmatpush.msra.mxu0 0.0
      %3061 = vmatpush.msra.mxu0 0.0
      %3062 = vmatpush.msra.mxu0 0.0
      %3063 = vmatpush.msra.mxu0 0.0
      %3064 = vmatpush.msra.mxu0 0.0
      %3065 = vmatpush.msra.mxu0 0.0
      %3066 = vmatpush.msra.mxu0 0.0
      %3067 = vmatpush.msra.mxu0 0.0
      %3068 = vmatpush.msra.mxu0 0.0
      %3069 = vmatpush.msra.mxu0 0.0
      %3070 = vmatpush.msra.mxu0 0.0
      %3071 = vmatpush.msra.mxu0 0.0
      %3072 = vmatpush.msra.mxu0 0.0
      %3073 = vmatpush.msra.mxu0 0.0
      %3074 = vmatpush.msra.mxu0 %v3017
      %3075 = vmatmul.f32.gmra.mxu0 %v3011
      %v3076 = vpop.f32.mrf.mxu0
      %v3077 = vadd.f32 0.0, %v3076
      %3078 = vdwg.mxu0
      %v3079 = vadd.f32 %v2994, %v3037
      %v3080 = vadd.f32 %v2995, %v3057
      %v3081 = vadd.f32 %v2996, %v3077
      %s3082 = scalar_lea.vmem %s10, 24
      %v3083 = vld [vmem:[%s3082] sm:$0xf]
      %3084 = vrot.lane.b32.xlu0 %v2583, 111
      %v3085 = vpop.permute.xlu0 %3084
      %3086 = vrot.lane.b32.xlu0 %v2584, 111
      %v3087 = vpop.permute.xlu0 %3086
      %3088 = vrot.lane.b32.xlu0 %v2585, 111
      %v3089 = vpop.permute.xlu0 %3088
      %3090 = vrot.lane.b32.xlu0 0.0, 111
      %v3091 = vpop.permute.xlu0 %3090
      %v3092 = vsel %vm1475, %v3085, %v3087
      %v3093 = vsel %vm1475, %v3087, %v3089
      %v3094 = vsel %vm1475, %v3089, %v3091
      %v3096 = vsel %vm484, %v3083, 0
      %v3098 = vsel %vm488, %v3092, 0
      %v3100 = vsel %vm488, %v3093, 0
      %v3102 = vsel %vm488, %v3094, 0
      %3104 = vmatpush.msra.mxu0 0.0
      %3105 = vmatpush.msra.mxu0 0.0
      %3106 = vmatpush.msra.mxu0 0.0
      %3107 = vmatpush.msra.mxu0 0.0
      %3108 = vmatpush.msra.mxu0 0.0
      %3109 = vmatpush.msra.mxu0 0.0
      %3110 = vmatpush.msra.mxu0 0.0
      %3111 = vmatpush.msra.mxu0 0.0
      %3112 = vmatpush.msra.mxu0 0.0
      %3113 = vmatpush.msra.mxu0 0.0
      %3114 = vmatpush.msra.mxu0 0.0
      %3115 = vmatpush.msra.mxu0 0.0
      %3116 = vmatpush.msra.mxu0 0.0
      %3117 = vmatpush.msra.mxu0 0.0
      %3118 = vmatpush.msra.mxu0 0.0
      %3119 = vmatpush.msra.mxu0 %v3098
      %3120 = vmatmul.f32.gmra.mxu0 %v3096
      %v3121 = vpop.f32.mrf.mxu0
      %v3122 = vadd.f32 0.0, %v3121
      %3123 = vdwg.mxu0
      %3124 = vmatpush.msra.mxu0 0.0
      %3125 = vmatpush.msra.mxu0 0.0
      %3126 = vmatpush.msra.mxu0 0.0
      %3127 = vmatpush.msra.mxu0 0.0
      %3128 = vmatpush.msra.mxu0 0.0
      %3129 = vmatpush.msra.mxu0 0.0
      %3130 = vmatpush.msra.mxu0 0.0
      %3131 = vmatpush.msra.mxu0 0.0
      %3132 = vmatpush.msra.mxu0 0.0
      %3133 = vmatpush.msra.mxu0 0.0
      %3134 = vmatpush.msra.mxu0 0.0
      %3135 = vmatpush.msra.mxu0 0.0
      %3136 = vmatpush.msra.mxu0 0.0
      %3137 = vmatpush.msra.mxu0 0.0
      %3138 = vmatpush.msra.mxu0 0.0
      %3139 = vmatpush.msra.mxu0 %v3100
      %3140 = vmatmul.f32.gmra.mxu0 %v3096
      %v3141 = vpop.f32.mrf.mxu0
      %v3142 = vadd.f32 0.0, %v3141
      %3143 = vdwg.mxu0
      %3144 = vmatpush.msra.mxu0 0.0
      %3145 = vmatpush.msra.mxu0 0.0
      %3146 = vmatpush.msra.mxu0 0.0
      %3147 = vmatpush.msra.mxu0 0.0
      %3148 = vmatpush.msra.mxu0 0.0
      %3149 = vmatpush.msra.mxu0 0.0
      %3150 = vmatpush.msra.mxu0 0.0
      %3151 = vmatpush.msra.mxu0 0.0
      %3152 = vmatpush.msra.mxu0 0.0
      %3153 = vmatpush.msra.mxu0 0.0
      %3154 = vmatpush.msra.mxu0 0.0
      %3155 = vmatpush.msra.mxu0 0.0
      %3156 = vmatpush.msra.mxu0 0.0
      %3157 = vmatpush.msra.mxu0 0.0
      %3158 = vmatpush.msra.mxu0 0.0
      %3159 = vmatpush.msra.mxu0 %v3102
      %3160 = vmatmul.f32.gmra.mxu0 %v3096
      %v3161 = vpop.f32.mrf.mxu0
      %v3162 = vadd.f32 0.0, %v3161
      %3163 = vdwg.mxu0
      %v3164 = vadd.f32 %v3079, %v3122
      %v3165 = vadd.f32 %v3080, %v3142
      %v3166 = vadd.f32 %v3081, %v3162
      %s3167 = scalar_lea.vmem %s10, 28
      %v3168 = vld [vmem:[%s3167] sm:$0xf]
      %3169 = vrot.lane.b32.xlu0 %v2583, 110
      %v3170 = vpop.permute.xlu0 %3169
      %3171 = vrot.lane.b32.xlu0 %v2584, 110
      %v3172 = vpop.permute.xlu0 %3171
      %3173 = vrot.lane.b32.xlu0 %v2585, 110
      %v3174 = vpop.permute.xlu0 %3173
      %3175 = vrot.lane.b32.xlu0 0.0, 110
      %v3176 = vpop.permute.xlu0 %3175
      %v3177 = vsel %vm1570, %v3170, %v3172
      %v3178 = vsel %vm1570, %v3172, %v3174
      %v3179 = vsel %vm1570, %v3174, %v3176
      %v3181 = vsel %vm484, %v3168, 0
      %v3183 = vsel %vm488, %v3177, 0
      %v3185 = vsel %vm488, %v3178, 0
      %v3187 = vsel %vm488, %v3179, 0
      %3189 = vmatpush.msra.mxu0 0.0
      %3190 = vmatpush.msra.mxu0 0.0
      %3191 = vmatpush.msra.mxu0 0.0
      %3192 = vmatpush.msra.mxu0 0.0
      %3193 = vmatpush.msra.mxu0 0.0
      %3194 = vmatpush.msra.mxu0 0.0
      %3195 = vmatpush.msra.mxu0 0.0
      %3196 = vmatpush.msra.mxu0 0.0
      %3197 = vmatpush.msra.mxu0 0.0
      %3198 = vmatpush.msra.mxu0 0.0
      %3199 = vmatpush.msra.mxu0 0.0
      %3200 = vmatpush.msra.mxu0 0.0
      %3201 = vmatpush.msra.mxu0 0.0
      %3202 = vmatpush.msra.mxu0 0.0
      %3203 = vmatpush.msra.mxu0 0.0
      %3204 = vmatpush.msra.mxu0 %v3183
      %3205 = vmatmul.f32.gmra.mxu0 %v3181
      %v3206 = vpop.f32.mrf.mxu0
      %v3207 = vadd.f32 0.0, %v3206
      %3208 = vdwg.mxu0
      %3209 = vmatpush.msra.mxu0 0.0
      %3210 = vmatpush.msra.mxu0 0.0
      %3211 = vmatpush.msra.mxu0 0.0
      %3212 = vmatpush.msra.mxu0 0.0
      %3213 = vmatpush.msra.mxu0 0.0
      %3214 = vmatpush.msra.mxu0 0.0
      %3215 = vmatpush.msra.mxu0 0.0
      %3216 = vmatpush.msra.mxu0 0.0
      %3217 = vmatpush.msra.mxu0 0.0
      %3218 = vmatpush.msra.mxu0 0.0
      %3219 = vmatpush.msra.mxu0 0.0
      %3220 = vmatpush.msra.mxu0 0.0
      %3221 = vmatpush.msra.mxu0 0.0
      %3222 = vmatpush.msra.mxu0 0.0
      %3223 = vmatpush.msra.mxu0 0.0
      %3224 = vmatpush.msra.mxu0 %v3185
      %3225 = vmatmul.f32.gmra.mxu0 %v3181
      %v3226 = vpop.f32.mrf.mxu0
      %v3227 = vadd.f32 0.0, %v3226
      %3228 = vdwg.mxu0
      %3229 = vmatpush.msra.mxu0 0.0
      %3230 = vmatpush.msra.mxu0 0.0
      %3231 = vmatpush.msra.mxu0 0.0
      %3232 = vmatpush.msra.mxu0 0.0
      %3233 = vmatpush.msra.mxu0 0.0
      %3234 = vmatpush.msra.mxu0 0.0
      %3235 = vmatpush.msra.mxu0 0.0
      %3236 = vmatpush.msra.mxu0 0.0
      %3237 = vmatpush.msra.mxu0 0.0
      %3238 = vmatpush.msra.mxu0 0.0
      %3239 = vmatpush.msra.mxu0 0.0
      %3240 = vmatpush.msra.mxu0 0.0
      %3241 = vmatpush.msra.mxu0 0.0
      %3242 = vmatpush.msra.mxu0 0.0
      %3243 = vmatpush.msra.mxu0 0.0
      %3244 = vmatpush.msra.mxu0 %v3187
      %3245 = vmatmul.f32.gmra.mxu0 %v3181
      %v3246 = vpop.f32.mrf.mxu0
      %v3247 = vadd.f32 0.0, %v3246
      %3248 = vdwg.mxu0
      %v3249 = vadd.f32 %v3164, %v3207
      %v3250 = vadd.f32 %v3165, %v3227
      %v3251 = vadd.f32 %v3166, %v3247
      %s3252 = scalar_lea.vmem %s10, 32
      %v3253 = vld [vmem:[%s3252] sm:$0xf]
      %3254 = vrot.lane.b32.xlu0 %v2583, 109
      %v3255 = vpop.permute.xlu0 %3254
      %3256 = vrot.lane.b32.xlu0 %v2584, 109
      %v3257 = vpop.permute.xlu0 %3256
      %3258 = vrot.lane.b32.xlu0 %v2585, 109
      %v3259 = vpop.permute.xlu0 %3258
      %3260 = vrot.lane.b32.xlu0 0.0, 109
      %v3261 = vpop.permute.xlu0 %3260
      %v3262 = vsel %vm1665, %v3255, %v3257
      %v3263 = vsel %vm1665, %v3257, %v3259
      %v3264 = vsel %vm1665, %v3259, %v3261
      %v3266 = vsel %vm484, %v3253, 0
      %v3268 = vsel %vm488, %v3262, 0
      %v3270 = vsel %vm488, %v3263, 0
      %v3272 = vsel %vm488, %v3264, 0
      %3274 = vmatpush.msra.mxu0 0.0
      %3275 = vmatpush.msra.mxu0 0.0
      %3276 = vmatpush.msra.mxu0 0.0
      %3277 = vmatpush.msra.mxu0 0.0
      %3278 = vmatpush.msra.mxu0 0.0
      %3279 = vmatpush.msra.mxu0 0.0
      %3280 = vmatpush.msra.mxu0 0.0
      %3281 = vmatpush.msra.mxu0 0.0
      %3282 = vmatpush.msra.mxu0 0.0
      %3283 = vmatpush.msra.mxu0 0.0
      %3284 = vmatpush.msra.mxu0 0.0
      %3285 = vmatpush.msra.mxu0 0.0
      %3286 = vmatpush.msra.mxu0 0.0
      %3287 = vmatpush.msra.mxu0 0.0
      %3288 = vmatpush.msra.mxu0 0.0
      %3289 = vmatpush.msra.mxu0 %v3268
      %3290 = vmatmul.f32.gmra.mxu0 %v3266
      %v3291 = vpop.f32.mrf.mxu0
      %v3292 = vadd.f32 0.0, %v3291
      %3293 = vdwg.mxu0
      %3294 = vmatpush.msra.mxu0 0.0
      %3295 = vmatpush.msra.mxu0 0.0
      %3296 = vmatpush.msra.mxu0 0.0
      %3297 = vmatpush.msra.mxu0 0.0
      %3298 = vmatpush.msra.mxu0 0.0
      %3299 = vmatpush.msra.mxu0 0.0
      %3300 = vmatpush.msra.mxu0 0.0
      %3301 = vmatpush.msra.mxu0 0.0
      %3302 = vmatpush.msra.mxu0 0.0
      %3303 = vmatpush.msra.mxu0 0.0
      %3304 = vmatpush.msra.mxu0 0.0
      %3305 = vmatpush.msra.mxu0 0.0
      %3306 = vmatpush.msra.mxu0 0.0
      %3307 = vmatpush.msra.mxu0 0.0
      %3308 = vmatpush.msra.mxu0 0.0
      %3309 = vmatpush.msra.mxu0 %v3270
      %3310 = vmatmul.f32.gmra.mxu0 %v3266
      %v3311 = vpop.f32.mrf.mxu0
      %v3312 = vadd.f32 0.0, %v3311
      %3313 = vdwg.mxu0
      %3314 = vmatpush.msra.mxu0 0.0
      %3315 = vmatpush.msra.mxu0 0.0
      %3316 = vmatpush.msra.mxu0 0.0
      %3317 = vmatpush.msra.mxu0 0.0
      %3318 = vmatpush.msra.mxu0 0.0
      %3319 = vmatpush.msra.mxu0 0.0
      %3320 = vmatpush.msra.mxu0 0.0
      %3321 = vmatpush.msra.mxu0 0.0
      %3322 = vmatpush.msra.mxu0 0.0
      %3323 = vmatpush.msra.mxu0 0.0
      %3324 = vmatpush.msra.mxu0 0.0
      %3325 = vmatpush.msra.mxu0 0.0
      %3326 = vmatpush.msra.mxu0 0.0
      %3327 = vmatpush.msra.mxu0 0.0
      %3328 = vmatpush.msra.mxu0 0.0
      %3329 = vmatpush.msra.mxu0 %v3272
      %3330 = vmatmul.f32.gmra.mxu0 %v3266
      %v3331 = vpop.f32.mrf.mxu0
      %v3332 = vadd.f32 0.0, %v3331
      %3333 = vdwg.mxu0
      %v3334 = vadd.f32 %v3249, %v3292
      %v3335 = vadd.f32 %v3250, %v3312
      %v3336 = vadd.f32 %v3251, %v3332
      %v3337 = vld [vmem:[%s11] sm:$0xf]
      %3339 = vset.pattern.permute.xlu0 0
      %3340 = vperm.xlu0 %3339, %v3337
      %v3341 = vpop.permute.xlu0 %3340
      %v3343 = vadd.f32 %v3334, %v3341
      %v3344 = vadd.f32 %v3335, %v3341
      %v3345 = vadd.f32 %v3336, %v3341
      %v3346 = vmax.f32 %v3343, 0.0
      %v3347 = vmax.f32 %v3344, 0.0
      %v3348 = vmax.f32 %v3345, 0.0
      %v3349 = vmul.f32 %v3346, %v2577
      %v3350 = vmul.f32 %v3347, %v2578
      %v3351 = vmul.f32 %v3348, %v2579
      %v3355 = vrot.slane %v3349, 4
      %v3356 = vrot.slane %v3351, 4
      %v3357 = vsel %vm488, 0.0, %v3355
      %v3358 = vsel %vm488, %v3350, %v3356
      %3361 = vst [vmem:[%s462] sm:$0xff] %v3357
      %3362 = vst [vmem:[%s462 + $0x8] sm:$0xff] %v3358
      %3363 = vst [vmem:[%s462 + $0x10] sm:$0xf] 0.0
      %p3364 = scmp.lt.s32.totalorder %s26, 1
      %s3365 = scalar_select %p3364, %s26, 1
      %s3366 = smul.addr %s3365, 5
      %s3367 = smul.addr %s3366, 4
      %s3368 = scalar_lea.vmem %s13, %s3367
      // Predicated region
      $region73: #{up_forward.1} parent=71 // pred_check
        %p3369 = pneg %p327
      $region74: #{up_forward.1} parent=71 // pred_check_branch
        %3371 = sbr.rel (%p3369) target = $region76
      $region75: #{up_forward.1} parent=71 // pred_region
        _
      $region76: #{up_forward.1} parent=71 // pred_fallthru
        _
    $region72: #{up_forward.1} parent=5 // pred_fallthru
      _
    %p3372 = scmp.le.s32.totalorder 2, %s21
    // Predicated region
    $region77: #{up_forward.1} parent=5 // pred_check
      %p3373 = pneg %p3372
    $region78: #{up_forward.1} parent=5 // pred_check_branch
      %3375 = sbr.rel (%p3373) target = $region80
    $region79: #{up_forward.1} parent=5 // pred_region
      %s3376 = ssub.s32 %s21, 2
      // Predicated region
      $region81: #{up_forward.1} parent=79 // pred_check
        %p3377 = pneg %p333
      $region82: #{up_forward.1} parent=79 // pred_check_branch
        %3379 = sbr.rel (%p3377) target = $region84
      $region83: #{up_forward.1} parent=79 // pred_region
        %p3380 = scmp.lt.s32.totalorder %s27, 1
        %s3381 = scalar_select %p3380, %s27, 1
        %s3382 = smul.addr %s3381, 5
        %s3383 = smul.addr %s3382, 4
        %s3384 = scalar_lea.vmem %s13, %s3383
      $region84: #{up_forward.1} parent=79 // pred_fallthru
        _
    $region80: #{up_forward.1} parent=5 // pred_fallthru
      _
  $region6: #{up_forward.1} parent=0 // loop_footer
    %s25 = sadd.s32 1, %s21
  $region7: #{up_forward.1} parent=0 // loop_footer_branch
    %20 = sbr.rel target = $region3
  $region8: #{up_forward.1} parent=0 // loop_exit
    _

</llo_original>
